<compile_context>
chip_gen: v7x
topology: tpu7x:2x2x1
jax: 0.10.0
libtpu: 0.0.40
codegen_flags: <defaults>
</compile_context>

<pallas_src>
import functools

import numpy as np

import jax
import jax.numpy as jnp
from jax.experimental import pallas as pl
from jax.experimental.pallas import tpu as pltpu

_NODE_ALIGN = 256   # node-dim padding / tile alignment (multiple of 128 & 16)


def _round_up(x, m):
    return ((x + m - 1) // m) * m


def _pick_tile_div(n, target, multiple):
    """Largest multiple of `multiple` that divides n and is <= target.

    `n` must itself be a multiple of `multiple` (guaranteed by node padding),
    so this always terminates with at least `multiple`.
    """
    assert n % multiple == 0
    t = min(n, max(multiple, (target // multiple) * multiple))
    while n % t != 0:
        t -= multiple
    return t


def _vmem_budget_bytes():
    """~75% of this chip's physical VMEM (v5e/v6e: 128 MiB, v7x: 64 MiB)."""
    cap = 64 * 1024 * 1024            # safe fallback (v7x-sized)
    try:
        cap = int(pltpu.get_tpu_info().vmem_capacity_bytes)
    except Exception:
        pass
    return int(cap) * 3 // 4


# --------------------------------------------------------------------------
# Kernels
# --------------------------------------------------------------------------
def _agg_project_kernel(a_ref, x_ref, w_ref, o_ref, acc_ref, *, relu):
    """Post-projection layer tile: o = relu?((A @ X) @ W) for one row tile.

    a_ref  : [tm, tk]        bf16 adjacency tile, A[dst, src]
    x_ref  : [tk, Fin]       bf16 feature tile (reduction slice)
    w_ref  : [Fin, Fout_pad] f32 fused weight (resident across the grid)
    o_ref  : [tm, Fout_pad]  lane-dense output tile, written once at k==last
    acc_ref: [tm, Fin]       f32 accumulator for A @ X
    """
    k = pl.program_id(1)

    @pl.when(k == 0)
    def _():
        acc_ref[...] = jnp.zeros_like(acc_ref)

    acc_ref[...] += jnp.dot(a_ref[...], x_ref[...],
                            preferred_element_type=jnp.float32)

    @pl.when(k == pl.num_programs(1) - 1)
    def _():
        h = jnp.dot(acc_ref[...], w_ref[...],
                    preferred_element_type=jnp.float32)
        if relu:
            h = jnp.maximum(h, 0.0)
        o_ref[...] = h.astype(o_ref.dtype)


def _agg_kernel(a_ref, p_ref, o_ref, acc_ref, *, relu):
    """Pre-projected layer tile: o = relu?(A @ P) for one row tile.

    p_ref  : [tk, Fout_pad]  bf16 pre-projected features (P = X @ W)
    acc_ref: [tm, Fout_pad]  f32 accumulator (== output before cast)
    """
    k = pl.program_id(1)

    @pl.when(k == 0)
    def _():
        acc_ref[...] = jnp.zeros_like(acc_ref)

    acc_ref[...] += jnp.dot(a_ref[...], p_ref[...],
                            preferred_element_type=jnp.float32)

    @pl.when(k == pl.num_programs(1) - 1)
    def _():
        h = acc_ref[...]
        if relu:
            h = jnp.maximum(h, 0.0)
        o_ref[...] = h.astype(o_ref.dtype)


# --------------------------------------------------------------------------
# Layer wrapper
# --------------------------------------------------------------------------
def gcn_fused_layer(adj, x, w=None, *, relu, out_dtype,
                    tm_target=1024, tk_target=512):
    """relu?((adj @ x) @ w)  if w is not None else  relu?(adj @ x).

    adj: [N_pad, N_pad] bf16 (0/1, exact)   x: [N_pad, F] bf16
    w  : [F, Fout_pad] f32 or None          returns [N_pad, Fout] out_dtype
    """
    n, n2 = adj.shape
    assert n == n2 and x.shape[0] == n and n % _NODE_ALIGN == 0
    fin = x.shape[1]
    fout = w.shape[1] if w is not None else fin
    if w is not None:
        assert w.shape[0] == fin

    # Row tile: as large as possible (divides X re-streaming), but keep >= 2
    # row tiles when N allows so the v7x megacore 'parallel' axis has work for
    # both TensorCores.
    tm_cap = tm_target if n < 2 * _NODE_ALIGN else min(tm_target, n // 2)
    tm = _pick_tile_div(n, tm_cap, _NODE_ALIGN)
    tk = _pick_tile_div(n, tk_target, _NODE_ALIGN)

    budget = _vmem_budget_bytes()
    out_itemsize = np.dtype(out_dtype).itemsize

    def vmem_need(tm_, tk_):
        a_b = 2 * tm_ * tk_ * adj.dtype.itemsize          # double-buffered A
        x_b = 2 * tk_ * fin * x.dtype.itemsize            # double-buffered X
        w_b = 2 * fin * fout * w.dtype.itemsize if w is not None else 0
        o_b = 2 * tm_ * fout * out_itemsize                # double-buffered out
        acc_b = tm_ * fin * 4                              # f32 accumulator
        return a_b + x_b + w_b + o_b + acc_b

    # Shrink tiles if over budget (keeps compiles safe for large graphs).
    while vmem_need(tm, tk) > budget and tm > _NODE_ALIGN:
        tm = _pick_tile_div(n, tm // 2, _NODE_ALIGN)
    while vmem_need(tm, tk) > budget and tk > _NODE_ALIGN:
        tk = _pick_tile_div(n, tk // 2, _NODE_ALIGN)

    grid = (n // tm, n // tk)                 # reduction axis last
    kernel = functools.partial(
        _agg_project_kernel if w is not None else _agg_kernel, relu=relu)

    flops = 2 * n * n * fin + (2 * n * fin * fout if w is not None else 0)
    bytes_accessed = (adj.size * adj.dtype.itemsize
                      + (n // tm) * x.size * x.dtype.itemsize   # X re-streamed
                      + (fin * fout * w.dtype.itemsize if w is not None else 0)
                      + n * fout * out_itemsize)

    in_specs = [
        pl.BlockSpec((tm, tk), lambda i, k: (i, k)),      # A tile
        pl.BlockSpec((tk, fin), lambda i, k: (k, 0)),     # X / P tile
    ]
    args = [adj, x]
    if w is not None:
        in_specs.append(pl.BlockSpec((fin, fout), lambda i, k: (0, 0)))  # W
        args.append(w)

    return pl.pallas_call(
        kernel,
        out_shape=jax.ShapeDtypeStruct((n, fout), out_dtype),
        grid_spec=pltpu.PrefetchScalarGridSpec(
            num_scalar_prefetch=0,
            grid=grid,
            in_specs=in_specs,
            out_specs=pl.BlockSpec((tm, fout), lambda i, k: (i, 0)),
            scratch_shapes=[pltpu.VMEM((tm, fin), jnp.float32)],
        ),
        compiler_params=pltpu.CompilerParams(
            dimension_semantics=("parallel", "arbitrary"),
            vmem_limit_bytes=budget,
        ),
        cost_estimate=pl.CostEstimate(
            flops=flops, transcendentals=0, bytes_accessed=bytes_accessed),
    )(*args)


def gcn_layer(a16, x16, w_full, *, relu, out_dtype):
    """One GCN layer, choosing the matmul ordering so the N^2 aggregation has
    the narrowest non-adjacency operand."""
    fin = x16.shape[1]
    fout = w_full.shape[1]
    if fout < fin:
        # Pre-project (O(N*F), trivially cheap); aggregate the narrow operand.
        p = jnp.dot(x16.astype(jnp.float32), w_full,
                    precision=jax.lax.Precision.HIGHEST).astype(jnp.bfloat16)
        return gcn_fused_layer(a16, p, None, relu=relu, out_dtype=out_dtype)
    return gcn_fused_layer(a16, x16, w_full, relu=relu, out_dtype=out_dtype)


# --------------------------------------------------------------------------
# Full network
# --------------------------------------------------------------------------
def prepare_adjacency(adj):
    """Zero-pad the dense adjacency to a 256-aligned node count and cast to
    bf16 (entries are 0/1 -> exact).  Call ONCE and reuse across forwards so
    the O(N^2) cast/pad pass is not paid per call."""
    n = adj.shape[0]
    n_pad = _round_up(n, _NODE_ALIGN)
    a = adj.astype(jnp.bfloat16)
    if n_pad != n:
        a = jnp.pad(a, ((0, n_pad - n), (0, n_pad - n)))
    return a


def gcn_net_forward(adj, features, w1_heads, w2_heads):
    """GCNNet forward.

    adj:       [N, N] dense adjacency (adj[dst, src] = 1.0 per edge), or the
               output of prepare_adjacency() (bf16, padded) -- preferred.
    features:  [N, num_input_features]
    w1_heads:  [H1, num_input_features, num_hidden]      (stored [Fin, Fout])
    w2_heads:  [H2, num_hidden * H1, num_output_classes]
    returns    [N, num_output_classes] float32
    """
    n, fin = features.shape
    h1, fin_w, hidden = w1_heads.shape
    h2, f1, classes = w2_heads.shape
    assert fin_w == fin and f1 == h1 * hidden

    n_pad = _round_up(n, _NODE_ALIGN)
    if adj.shape == (n_pad, n_pad) and adj.dtype == jnp.bfloat16:
        a16 = adj                              # prepared at rest
    else:
        assert adj.shape == (n, n)
        a16 = prepare_adjacency(adj)           # single fused pad+cast pass

    x16 = features.astype(jnp.bfloat16)
    if n_pad != n:
        x16 = jnp.pad(x16, ((0, n_pad - n), (0, 0)))

    # Layer 1: 'cat' merge == one wide weight; head h occupies output columns
    # [h*hidden : (h+1)*hidden] (same ordering as torch.cat over head outputs).
    w1_cat = jnp.transpose(w1_heads, (1, 0, 2)).reshape(fin, h1 * hidden)
    f1_pad = _round_up(h1 * hidden, 128)
    w1_p = jnp.pad(w1_cat, ((0, 0), (0, f1_pad - h1 * hidden)))

    # Layer 2: 'mean' merge with identity activation == mean of head weights.
    c_pad = _round_up(classes, 128)
    w2_mean = jnp.mean(w2_heads, axis=0)
    w2_p = jnp.pad(w2_mean, ((0, f1_pad - f1), (0, c_pad - classes)))

    # Layer 1 writes bf16 directly (intermediate stays bf16, no extra cast).
    x1 = gcn_layer(a16, x16, w1_p, relu=True, out_dtype=jnp.bfloat16)
    out_p = gcn_layer(a16, x1, w2_p, relu=False, out_dtype=jnp.float32)
    return out_p[:n, :classes]


def xavier_uniform(key, shape):
    fan_in, fan_out = shape[-2], shape[-1]
    bound = (6.0 / (fan_in + fan_out)) ** 0.5
    return jax.random.uniform(key, shape, jnp.float32, -bound, bound)


if __name__ == "__main__":
    # Small, deterministic configuration.  Chosen so that BOTH kernel paths
    # are exercised: layer 1 uses post-projection (Fin=16 < 256) and layer 2
    # uses pre-projection (c_pad=128 < 256); N=300 exercises node padding.
    num_nodes = 300
    num_input_features = 16
    num_hidden = 64
    num_output_classes = 4
    num_heads_layer_one = 4
    num_heads_layer_two = 2

    key = jax.random.PRNGKey(0)
    k_feat, k_adj, k_w1, k_w2 = jax.random.split(key, 4)

    features = jax.random.normal(
        k_feat, (num_nodes, num_input_features), jnp.float32)
    adj = (jax.random.uniform(k_adj, (num_nodes, num_nodes)) < 0.4).astype(
        jnp.float32)

    w1_heads = xavier_uniform(
        k_w1, (num_heads_layer_one, num_input_features, num_hidden))
    w2_heads = xavier_uniform(
        k_w2, (num_heads_layer_two,
               num_hidden * num_heads_layer_one, num_output_classes))

    adj_prep = prepare_adjacency(adj)     # at-rest bf16 + padded (one time)
    out = jax.jit(gcn_net_forward)(adj_prep, features, w1_heads, w2_heads)
    out = jax.block_until_ready(out)

    # Pure-JAX reference in the ORIGINAL per-head formulation (f32 math), with
    # the same bf16 rounding of A / X / the inter-layer activation as the
    # kernel path, so it validates the algebraic rewrites and the kernels.
    hp = jax.lax.Precision.HIGHEST
    a_r = adj.astype(jnp.bfloat16).astype(jnp.float32)
    x_r = features.astype(jnp.bfloat16).astype(jnp.float32)
    h1_ref = jnp.maximum(
        jnp.einsum("nm,hmf->hnf", a_r,
                   jnp.einsum("nf,hfo->hno", x_r, w1_heads, precision=hp),
                   precision=hp), 0.0)
    x1_ref = jnp.transpose(h1_ref, (1, 0, 2)).reshape(num_nodes, -1)
    x1_ref = x1_ref.astype(jnp.bfloat16).astype(jnp.float32)
    h2_ref = jnp.einsum("nm,hmf->hnf", a_r,
                        jnp.einsum("nf,hfo->hno", x1_ref, w2_heads,
                                   precision=hp), precision=hp)
    ref = jnp.mean(h2_ref, axis=0)

    assert out.shape == (num_nodes, num_output_classes)
    max_err = float(jnp.max(jnp.abs(out - ref)))
    scale = float(jnp.max(jnp.abs(ref)))
    # Scale-aware tolerance: the kernel path streams bf16 activations (incl.
    # the pre-projected layer-2 operand), so errors are bounded by ~bf16 eps
    # of the output's dynamic range, far below 2% of max |ref|.
    assert max_err <= 2e-2 * scale + 1e-3, (
        "max abs err %g vs scale %g" % (max_err, scale))

    print("KERNEL_OK")
</pallas_src>

<mosaic_0001>
module attributes {stable_mosaic.version = 11 : i64} {
  func.func @_agg_project_kernel(%arg0: i32, %arg1: i32, %arg2: memref<256x512xbf16, #tpu.memory_space<vmem>>, %arg3: memref<512x16xbf16, #tpu.memory_space<vmem>>, %arg4: memref<16x256xf32, #tpu.memory_space<vmem>>, %arg5: memref<256x256xbf16, #tpu.memory_space<vmem>>, %arg6: memref<256x16xf32, #tpu.memory_space<vmem>>) attributes {dimension_semantics = [#tpu.dimension_semantics<parallel>, #tpu.dimension_semantics<arbitrary>], iteration_bounds = array<i64: 2, 1>, scalar_prefetch = 0 : i64, scratch_operands = 1 : i64, tpu.core_type = #tpu.core_type<tc>, window_params = [{transform_indices = @transform_0, window_bounds = array<i64: 256, 512>}, {transform_indices = @transform_1, window_bounds = array<i64: 512, 16>}, {pipeline_mode = #tpu.pipeline_mode<synchronous>, transform_indices = @transform_2, window_bounds = array<i64: 16, 256>}, {transform_indices = @transform_3, window_bounds = array<i64: 256, 256>}]} {
    %c0_i32 = arith.constant 0 : i32
    %0 = arith.cmpi eq, %arg1, %c0_i32 : i32
    %1 = arith.extui %0 : i1 to i32
    %c0_i32_0 = arith.constant 0 : i32
    %2 = arith.cmpi ne, %1, %c0_i32_0 : i32
    scf.if %2 {
      %cst_10 = arith.constant 0.000000e+00 : f32
      %12 = vector.broadcast %cst_10 : f32 to vector<256x16xf32>
      %c0_11 = arith.constant 0 : index
      %c0_12 = arith.constant 0 : index
      %13 = vector.load %arg6[%c0_11, %c0_12] : memref<256x16xf32, #tpu.memory_space<vmem>>, vector<256x16xf32>
      tpu.vector_store %arg6[%c0_11, %c0_12], %12 {strides = array<i32>} : memref<256x16xf32, #tpu.memory_space<vmem>>, vector<256x16xf32>,
    } else {
    }
    %c0 = arith.constant 0 : index
    %c0_1 = arith.constant 0 : index
    %3 = vector.load %arg6[%c0, %c0_1] : memref<256x16xf32, #tpu.memory_space<vmem>>, vector<256x16xf32>
    %c0_2 = arith.constant 0 : index
    %c0_3 = arith.constant 0 : index
    %4 = vector.load %arg2[%c0_2, %c0_3] : memref<256x512xbf16, #tpu.memory_space<vmem>>, vector<256x512xbf16>
    %c0_4 = arith.constant 0 : index
    %c0_5 = arith.constant 0 : index
    %5 = vector.load %arg3[%c0_4, %c0_5] : memref<512x16xbf16, #tpu.memory_space<vmem>>, vector<512x16xbf16>
    %cst = arith.constant dense<0.000000e+00> : vector<256x16xf32>
    %6 = tpu.matmul %4, %5, %cst {dimension_numbers = #tpu.dot_dimension_numbers<[1], [0], [0], [1], [0, 0, 1, 1], [], []>} : vector<256x512xbf16>, vector<512x16xbf16>, vector<256x16xf32> -> vector<256x16xf32>
    %7 = arith.addf %3, %6 : vector<256x16xf32>
    %c0_6 = arith.constant 0 : index
    %c0_7 = arith.constant 0 : index
    %8 = vector.load %arg6[%c0_6, %c0_7] : memref<256x16xf32, #tpu.memory_space<vmem>>, vector<256x16xf32>
    tpu.vector_store %arg6[%c0_6, %c0_7], %7 {strides = array<i32>} : memref<256x16xf32, #tpu.memory_space<vmem>>, vector<256x16xf32>,
    %c0_i32_8 = arith.constant 0 : i32
    %9 = arith.cmpi eq, %arg1, %c0_i32_8 : i32
    %10 = arith.extui %9 : i1 to i32
    %c0_i32_9 = arith.constant 0 : i32
    %11 = arith.cmpi ne, %10, %c0_i32_9 : i32
    scf.if %11 {
      %c0_10 = arith.constant 0 : index
      %c0_11 = arith.constant 0 : index
      %12 = vector.load %arg6[%c0_10, %c0_11] : memref<256x16xf32, #tpu.memory_space<vmem>>, vector<256x16xf32>
      %c0_12 = arith.constant 0 : index
      %c0_13 = arith.constant 0 : index
      %13 = vector.load %arg4[%c0_12, %c0_13] : memref<16x256xf32, #tpu.memory_space<vmem>>, vector<16x256xf32>
      %cst_14 = arith.constant dense<0.000000e+00> : vector<256x256xf32>
      %14 = tpu.matmul %12, %13, %cst_14 {dimension_numbers = #tpu.dot_dimension_numbers<[1], [0], [0], [1], [0, 0, 1, 1], [], []>} : vector<256x16xf32>, vector<16x256xf32>, vector<256x256xf32> -> vector<256x256xf32>
      %cst_15 = arith.constant 0.000000e+00 : f32
      %15 = vector.broadcast %cst_15 : f32 to vector<256x256xf32>
      %16 = arith.maximumf %14, %15 : vector<256x256xf32>
      %17 = arith.truncf %16 : vector<256x256xf32> to vector<256x256xbf16>
      %c0_16 = arith.constant 0 : index
      %c0_17 = arith.constant 0 : index
      %18 = vector.load %arg5[%c0_16, %c0_17] : memref<256x256xbf16, #tpu.memory_space<vmem>>, vector<256x256xbf16>
      tpu.vector_store %arg5[%c0_16, %c0_17], %17 {strides = array<i32>} : memref<256x256xbf16, #tpu.memory_space<vmem>>, vector<256x256xbf16>,
    } else {
    }
    return
  }
  func.func @transform_0(%arg0: i32, %arg1: i32) -> (i32, i32) {
    %c0_i32 = arith.constant 0 : i32
    return %arg0, %arg1 : i32, i32
  }
  func.func @transform_1(%arg0: i32, %arg1: i32) -> (i32, i32) {
    %c0_i32 = arith.constant 0 : i32
    %c0_i32_0 = arith.constant 0 : i32
    return %arg1, %c0_i32 : i32, i32
  }
  func.func @transform_2(%arg0: i32, %arg1: i32) -> (i32, i32) {
    %c0_i32 = arith.constant 0 : i32
    %c0_i32_0 = arith.constant 0 : i32
    %c0_i32_1 = arith.constant 0 : i32
    return %c0_i32, %c0_i32_0 : i32, i32
  }
  func.func @transform_3(%arg0: i32, %arg1: i32) -> (i32, i32) {
    %c0_i32 = arith.constant 0 : i32
    %c0_i32_0 = arith.constant 0 : i32
    return %arg0, %c0_i32 : i32, i32
  }
}

module attributes {stable_mosaic.version = 11 : i64} {
  func.func @_agg_kernel(%arg0: i32, %arg1: i32, %arg2: memref<256x512xbf16, #tpu.memory_space<vmem>>, %arg3: memref<512x128xbf16, #tpu.memory_space<vmem>>, %arg4: memref<256x128xf32, #tpu.memory_space<vmem>>, %arg5: memref<256x128xf32, #tpu.memory_space<vmem>>) attributes {dimension_semantics = [#tpu.dimension_semantics<parallel>, #tpu.dimension_semantics<arbitrary>], iteration_bounds = array<i64: 2, 1>, scalar_prefetch = 0 : i64, scratch_operands = 1 : i64, tpu.core_type = #tpu.core_type<tc>, window_params = [{transform_indices = @transform_0, window_bounds = array<i64: 256, 512>}, {transform_indices = @transform_1, window_bounds = array<i64: 512, 128>}, {transform_indices = @transform_2, window_bounds = array<i64: 256, 128>}]} {
    %c0_i32 = arith.constant 0 : i32
    %0 = arith.cmpi eq, %arg1, %c0_i32 : i32
    %1 = arith.extui %0 : i1 to i32
    %c0_i32_0 = arith.constant 0 : i32
    %2 = arith.cmpi ne, %1, %c0_i32_0 : i32
    scf.if %2 {
      %cst_10 = arith.constant 0.000000e+00 : f32
      %12 = vector.broadcast %cst_10 : f32 to vector<256x128xf32>
      %c0_11 = arith.constant 0 : index
      %c0_12 = arith.constant 0 : index
      %13 = vector.load %arg5[%c0_11, %c0_12] : memref<256x128xf32, #tpu.memory_space<vmem>>, vector<256x128xf32>
      tpu.vector_store %arg5[%c0_11, %c0_12], %12 {strides = array<i32>} : memref<256x128xf32, #tpu.memory_space<vmem>>, vector<256x128xf32>,
    } else {
    }
    %c0 = arith.constant 0 : index
    %c0_1 = arith.constant 0 : index
    %3 = vector.load %arg5[%c0, %c0_1] : memref<256x128xf32, #tpu.memory_space<vmem>>, vector<256x128xf32>
    %c0_2 = arith.constant 0 : index
    %c0_3 = arith.constant 0 : index
    %4 = vector.load %arg2[%c0_2, %c0_3] : memref<256x512xbf16, #tpu.memory_space<vmem>>, vector<256x512xbf16>
    %c0_4 = arith.constant 0 : index
    %c0_5 = arith.constant 0 : index
    %5 = vector.load %arg3[%c0_4, %c0_5] : memref<512x128xbf16, #tpu.memory_space<vmem>>, vector<512x128xbf16>
    %cst = arith.constant dense<0.000000e+00> : vector<256x128xf32>
    %6 = tpu.matmul %4, %5, %cst {dimension_numbers = #tpu.dot_dimension_numbers<[1], [0], [0], [1], [0, 0, 1, 1], [], []>} : vector<256x512xbf16>, vector<512x128xbf16>, vector<256x128xf32> -> vector<256x128xf32>
    %7 = arith.addf %3, %6 : vector<256x128xf32>
    %c0_6 = arith.constant 0 : index
    %c0_7 = arith.constant 0 : index
    %8 = vector.load %arg5[%c0_6, %c0_7] : memref<256x128xf32, #tpu.memory_space<vmem>>, vector<256x128xf32>
    tpu.vector_store %arg5[%c0_6, %c0_7], %7 {strides = array<i32>} : memref<256x128xf32, #tpu.memory_space<vmem>>, vector<256x128xf32>,
    %c0_i32_8 = arith.constant 0 : i32
    %9 = arith.cmpi eq, %arg1, %c0_i32_8 : i32
    %10 = arith.extui %9 : i1 to i32
    %c0_i32_9 = arith.constant 0 : i32
    %11 = arith.cmpi ne, %10, %c0_i32_9 : i32
    scf.if %11 {
      %c0_10 = arith.constant 0 : index
      %c0_11 = arith.constant 0 : index
      %12 = vector.load %arg5[%c0_10, %c0_11] : memref<256x128xf32, #tpu.memory_space<vmem>>, vector<256x128xf32>
      %c0_12 = arith.constant 0 : index
      %c0_13 = arith.constant 0 : index
      %13 = vector.load %arg4[%c0_12, %c0_13] : memref<256x128xf32, #tpu.memory_space<vmem>>, vector<256x128xf32>
      tpu.vector_store %arg4[%c0_12, %c0_13], %12 {strides = array<i32>} : memref<256x128xf32, #tpu.memory_space<vmem>>, vector<256x128xf32>,
    } else {
    }
    return
  }
  func.func @transform_0(%arg0: i32, %arg1: i32) -> (i32, i32) {
    %c0_i32 = arith.constant 0 : i32
    return %arg0, %arg1 : i32, i32
  }
  func.func @transform_1(%arg0: i32, %arg1: i32) -> (i32, i32) {
    %c0_i32 = arith.constant 0 : i32
    %c0_i32_0 = arith.constant 0 : i32
    return %arg1, %c0_i32 : i32, i32
  }
  func.func @transform_2(%arg0: i32, %arg1: i32) -> (i32, i32) {
    %c0_i32 = arith.constant 0 : i32
    %c0_i32_0 = arith.constant 0 : i32
    return %arg0, %c0_i32 : i32, i32
  }
}

</mosaic_0001>

<llo_original>
// kernel: gcn_net_forward.2
$region0: #{gcn_net_forward.2}
  #allocation0 [shape = 'u32[]', space=smem, size = 0x4, offset = 0x4, fixed_abs, tag = 'smem constant byte address 0x4 - core index']
  #allocation1 [shape = 'u32[144,128]{1,0:T(1,128)}', space=vmem, size = 0x12000, scoped, tag = 'internal scratch']
  #allocation2 [shape = 'f32[256,16]{1,0:T(8,128)}', space=vmem, size = 0x20000, scoped, tag = 'scratch operand']
  %s0 = inlined_call_operand.hbm [shape: bf16[512,512], index: 0, kind: input, shape index: {}]
  %s1 = inlined_call_operand.vmem [shape: bf16[512,16], index: 1, kind: input, shape index: {}]
  %s2 = inlined_call_operand.vmem [shape: f32[16,256], index: 2, kind: input, shape index: {}]
  %s3 = inlined_call_operand.vmem [shape: bf16[512,256], index: 3, kind: output, shape index: {}]
  %s4 = sld [smem:[#allocation0]]
  $region57: #{gcn_net_forward.2} parent=0
    _
  %s6 = ssub.s32 1, %s4
  %s7 = scalar_select 0, %s6, %s4
  $region1: #{gcn_net_forward.2} parent=0
    #allocation3 [shape = 'u8[524288]{0}', space=vmem, size = 0x80000, scoped, tag = 'input window, operand 0']
    #allocation4 [shape = 's32[2]{0}', space=sflag, size = 0x8, scoped, tag = 'scoped memory for gcn_net_forward.2']
    %8 = vsyncpa [#allocation4], 0
    %s9 = scalar_lea.sflag [#allocation4], 1
    %10 = vsyncpa %s9, 0
    loop: start=0, step=1, limit=4
    $region2: #{gcn_net_forward.2} parent=1 // loop_pre_header
      _
    $region3: #{gcn_net_forward.2} parent=1 // loop_header
      %s12 = sphi 0, %s16
      %p13 = scmp.ge.s32.totalorder %s12, 4
      %s19 = sphi 0, %s31
      %s20 = sphi 0, %s27
      %s21 = sphi 0, %s19
      %s22 = sphi 0, %s20
      %s23 = sphi 0, %s21
      %s24 = sphi 0, %s22
      %s36 = sphi 0, %s38
      %s39 = sphi 0, %s36
      %s40 = sphi 0, %s39
      %s56 = sphi 0, %s40
      %s62 = sphi 0, %s64
      %s65 = sphi 0, %s62
      %s66 = sphi 0, %s65
      %s82 = sphi 0, %s66
      %s86 = sphi 0, %s86
      %s88 = sphi 0, %s86
      %s89 = sphi 0, %s88
      %s103 = sphi 0, %s89
      %s109 = sphi 0, %s111
      %s112 = sphi 0, %s109
      %s113 = sphi 0, %s112
      %s129 = sphi 0, %s113
    $region4: #{gcn_net_forward.2} parent=1 // loop_header_branch
      %15 = sbr.rel (%p13) target = $region8
    $region5: #{gcn_net_forward.2} parent=1 // loop_body
      %s17 = ssub.s32 %s12, 1
      %s18 = ssub.s32 %s12, 2
      %s25 = sadd.s32 1, %s20
      %p26 = scmp.ge.s32.totalorder %s25, 1
      %s27 = scalar_select %p26, 0, %s25
      %s28 = sadd.s32 1, %s19
      %s29 = scalar_select %p26, %s28, %s19
      %p30 = scmp.ge.s32.totalorder %s29, 2
      %s31 = scalar_select %p30, 0, %s29
      %s32 = ssub.s32 %s19, %s31
      %s33 = ssub.s32 %s20, %s27
      %s34 = sor.u32 %s32, %s33
      %p35 = scmp.eq.s32.totalorder %s34, 0
      %s37 = sadd.s32 %s36, 1
      %s38 = scalar_select %p35, %s36, %s37
      %p41 = pneg %p35
      %p42 = scmp.eq.s32.totalorder %s12, 1
      %p43 = por %p41, %p42
      %p44 = scmp.ne.s32.totalorder %s36, %s39
      %p45 = scmp.eq.s32.totalorder %s12, 0
      %p46 = por %p44, %p45
      %p47 = scmp.ne.s32.totalorder %s36, %s39
      %p48 = scmp.eq.s32.totalorder %s17, 1
      %p49 = por %p47, %p48
      %p50 = scmp.ne.s32.totalorder %s39, %s40
      %p51 = scmp.eq.s32.totalorder %s17, 0
      %p52 = por %p50, %p51
      %p53 = scmp.ne.s32.totalorder %s39, %s40
      %p54 = scmp.eq.s32.totalorder %s18, 1
      %p55 = por %p53, %p54
      %p57 = scmp.ne.s32.totalorder %s40, %s56
      %p58 = scmp.eq.s32.totalorder %s18, 0
      %p59 = por %p57, %p58
      %s60 = ssub.s32 %s20, %s27
      %p61 = scmp.eq.s32.totalorder %s60, 0
      %s63 = sadd.s32 %s62, 1
      %s64 = scalar_select %p61, %s62, %s63
      %p67 = pneg %p61
      %p68 = scmp.eq.s32.totalorder %s12, 1
      %p69 = por %p67, %p68
      %p70 = scmp.ne.s32.totalorder %s62, %s65
      %p71 = scmp.eq.s32.totalorder %s12, 0
      %p72 = por %p70, %p71
      %p73 = scmp.ne.s32.totalorder %s62, %s65
      %p74 = scmp.eq.s32.totalorder %s17, 1
      %p75 = por %p73, %p74
      %p76 = scmp.ne.s32.totalorder %s65, %s66
      %p77 = scmp.eq.s32.totalorder %s17, 0
      %p78 = por %p76, %p77
      %p79 = scmp.ne.s32.totalorder %s65, %s66
      %p80 = scmp.eq.s32.totalorder %s18, 1
      %p81 = por %p79, %p80
      %p83 = scmp.ne.s32.totalorder %s66, %s82
      %p84 = scmp.eq.s32.totalorder %s18, 0
      %p85 = por %p83, %p84
      %s87 = sadd.s32 %s86, 1
      %p90 = scmp.eq.s32.totalorder %s12, 1
      %p91 = scmp.ne.s32.totalorder %s86, %s88
      %p92 = scmp.eq.s32.totalorder %s12, 0
      %p93 = por %p91, %p92
      %p94 = scmp.ne.s32.totalorder %s86, %s88
      %p95 = scmp.eq.s32.totalorder %s17, 1
      %p96 = por %p94, %p95
      %p97 = scmp.ne.s32.totalorder %s88, %s89
      %p98 = scmp.eq.s32.totalorder %s17, 0
      %p99 = por %p97, %p98
      %p100 = scmp.ne.s32.totalorder %s88, %s89
      %p101 = scmp.eq.s32.totalorder %s18, 1
      %p102 = por %p100, %p101
      %p104 = scmp.ne.s32.totalorder %s89, %s103
      %p105 = scmp.eq.s32.totalorder %s18, 0
      %p106 = por %p104, %p105
      %s107 = ssub.s32 %s19, %s31
      %p108 = scmp.eq.s32.totalorder %s107, 0
      %s110 = sadd.s32 %s109, 1
      %s111 = scalar_select %p108, %s109, %s110
      %p114 = pneg %p108
      %p115 = scmp.eq.s32.totalorder %s12, 1
      %p116 = por %p114, %p115
      %p117 = scmp.ne.s32.totalorder %s109, %s112
      %p118 = scmp.eq.s32.totalorder %s12, 0
      %p119 = por %p117, %p118
      %p120 = scmp.ne.s32.totalorder %s109, %s112
      %p121 = scmp.eq.s32.totalorder %s17, 1
      %p122 = por %p120, %p121
      %p123 = scmp.ne.s32.totalorder %s112, %s113
      %p124 = scmp.eq.s32.totalorder %s17, 0
      %p125 = por %p123, %p124
      %p126 = scmp.ne.s32.totalorder %s112, %s113
      %p127 = scmp.eq.s32.totalorder %s18, 1
      %p128 = por %p126, %p127
      %p130 = scmp.ne.s32.totalorder %s113, %s129
      %p131 = scmp.eq.s32.totalorder %s18, 0
      %p132 = por %p130, %p131
      %p133 = scmp.le.s32.totalorder 1, %s12
      %p134 = scmp.lt.s32.totalorder %s12, 3
      %p135 = pnand %p133, %p134
      %p136 = pneg %p135
      // Predicated region
      $region9: #{gcn_net_forward.2} parent=5 // pred_check
        _
      $region10: #{gcn_net_forward.2} parent=5 // pred_check_branch
        %138 = sbr.rel (%p135) target = $region12
      $region11: #{gcn_net_forward.2} parent=5 // pred_region
        %s139 = ssub.s32 %s12, 1
        // Predicated region
        $region13: #{gcn_net_forward.2} parent=11 // pred_check
          %p140 = pneg %p78
        $region14: #{gcn_net_forward.2} parent=11 // pred_check_branch
          %142 = sbr.rel (%p140) target = $region16
        $region15: #{gcn_net_forward.2} parent=11 // pred_region
          %s143 = smul.u32 64, %s22
          %p144 = scmp.lt.s32.totalorder %s143, 63
          %s145 = scalar_select %p144, %s143, 63
          %s146 = smul.addr %s145, 4
          %s147 = scalar_lea.vmem %s1, %s146
          %s148 = smul.u32 64, %s22
        $region16: #{gcn_net_forward.2} parent=11 // pred_fallthru
          _
        // Predicated region
        $region17: #{gcn_net_forward.2} parent=11 // pred_check
          %p149 = pneg %p99
        $region18: #{gcn_net_forward.2} parent=11 // pred_check_branch
          %151 = sbr.rel (%p149) target = $region20
        $region19: #{gcn_net_forward.2} parent=11 // pred_region
          _
        $region20: #{gcn_net_forward.2} parent=11 // pred_fallthru
          _
      $region12: #{gcn_net_forward.2} parent=5 // pred_fallthru
        _
      %p152 = scmp.lt.s32.totalorder %s12, 2
      // Predicated region
      $region21: #{gcn_net_forward.2} parent=5 // pred_check
        %p153 = pneg %p152
      $region22: #{gcn_net_forward.2} parent=5 // pred_check_branch
        %155 = sbr.rel (%p153) target = $region24
      $region23: #{gcn_net_forward.2} parent=5 // pred_region
        // Predicated region
        $region25: #{gcn_net_forward.2} parent=23 // pred_check
          %p156 = pneg %p46
        $region26: #{gcn_net_forward.2} parent=23 // pred_check_branch
          %158 = sbr.rel (%p156) target = $region28
        $region27: #{gcn_net_forward.2} parent=23 // pred_region
          %s159 = sand.u32 %s36, 1
          %s160 = scalar_lea.sflag [#allocation4], %s159
          %s161 = sand.u32 %s36, 1
          %s162 = smul.addr %s161, 512
          %s163 = scalar_lea.vmem [#allocation3], %s162
          %s164 = smul.u32 32, %s19
          %s165 = smul.u32 4, %s20
          %s167 = ssub.s32 8192, 8192
          %168 = vsyncadd %s160, %s167
          %s169 = smul.addr %s164, 4
          %s170 = sadd.s32 %s165, %s169
          %s171 = smul.addr %s170, 64
          %s172 = scalar_lea.hbm %s0, %s171
          %s173 = sshll.u32 %s163, 4
          %s174 = int_to_ptr.vmem [resolvable:$true] %s173
          %179 = dma.hbm_to_vmem [thread:$0]  %s172, 8192, %s174, %s160, 256, 256, 16
        $region28: #{gcn_net_forward.2} parent=23 // pred_fallthru
          _
      $region24: #{gcn_net_forward.2} parent=5 // pred_fallthru
        _
      %p180 = scmp.le.s32.totalorder 1, %s12
      %p181 = scmp.lt.s32.totalorder %s12, 3
      %p182 = pnand %p180, %p181
      %p183 = pneg %p182
      // Predicated region
      $region29: #{gcn_net_forward.2} parent=5 // pred_check
        _
      $region30: #{gcn_net_forward.2} parent=5 // pred_check_branch
        %185 = sbr.rel (%p182) target = $region32
      $region31: #{gcn_net_forward.2} parent=5 // pred_region
        %s186 = ssub.s32 %s12, 1
        %s187 = sand.u32 %s39, 1
        %s188 = scalar_lea.sflag [#allocation4], %s187
        %s189 = sand.u32 %s39, 1
        %s190 = smul.addr %s189, 512
        %s191 = scalar_lea.vmem [#allocation3], %s190
        // Predicated region
        $region33: #{gcn_net_forward.2} parent=31 // pred_check
          %p192 = pneg %p52
        $region34: #{gcn_net_forward.2} parent=31 // pred_check_branch
          %194 = sbr.rel (%p192) target = $region36
        $region35: #{gcn_net_forward.2} parent=31 // pred_region
          %195 = dma.done %s188, 8192
        $region36: #{gcn_net_forward.2} parent=31 // pred_fallthru
          _
        %s196 = sand.u32 %s39, 1
        %s197 = scalar_lea.sflag [#allocation4], %s196
        %s198 = sand.u32 %s39, 1
        %s199 = smul.addr %s198, 512
        %s200 = scalar_lea.vmem [#allocation3], %s199
        %p201 = pneg %p52
        %p202 = pneg %p49
        %s203 = smul.u32 64, %s22
        %p204 = scmp.lt.s32.totalorder %s203, 63
        %s205 = scalar_select %p204, %s203, 63
        %s206 = smul.addr %s205, 4
        %s207 = scalar_lea.vmem %s1, %s206
        %p208 = pneg %p78
        %p209 = pneg %p75
        %p210 = pneg %p99
        %p211 = pneg %p96
        %p212 = pneg %p125
        %p213 = pneg %p122
        %s214 = smul.u32 16, %s21
        %p215 = scmp.lt.s32.totalorder %s214, 31
        %s216 = scalar_select %p215, %s214, 31
        %s217 = smul.addr %s216, 2
        %s218 = smul.addr %s217, 8
        %s219 = scalar_lea.vmem %s3, %s218
        %s220 = smul.u32 32, %s21
        %s221 = smul.u32 4, %s22
        %s222 = smul.u32 64, %s22
        %p223 = scmp.lt.s32.totalorder %s222, 63
        %s224 = scalar_select %p223, %s222, 63
        %s225 = smul.addr %s224, 4
        %s226 = scalar_lea.vmem %s1, %s225
        %s227 = smul.u32 64, %s22
        %s228 = smul.u32 16, %s21
        %p229 = scmp.lt.s32.totalorder %s228, 31
        %s230 = scalar_select %p229, %s228, 31
        %s231 = smul.addr %s230, 2
        %s232 = smul.addr %s231, 8
        %s233 = scalar_lea.vmem %s3, %s232
        %s234 = smul.u32 16, %s21
        %p236 = scmp.eq.s32.totalorder %s22, 0
        // Predicated region
        $region37: #{gcn_net_forward.2} parent=31 // pred_check
          %p237 = pneg %p236
        $region38: #{gcn_net_forward.2} parent=31 // pred_check_branch
          %239 = sbr.rel (%p237) target = $region40
        $region39: #{gcn_net_forward.2} parent=31 // pred_region
          %vm240 = vcmask 130048
          %241 = vst.msk [vmem:[#allocation2] sm:$0xff] %vm240, 0.0
          %242 = vst.msk [vmem:[#allocation2 + $0x8] sm:$0xff] %vm240, 0.0
          %243 = vst.msk [vmem:[#allocation2 + $0x10] sm:$0xff] %vm240, 0.0
          %244 = vst.msk [vmem:[#allocation2 + $0x18] sm:$0xff] %vm240, 0.0
          %245 = vst.msk [vmem:[#allocation2 + $0x20] sm:$0xff] %vm240, 0.0
          %246 = vst.msk [vmem:[#allocation2 + $0x28] sm:$0xff] %vm240, 0.0
          %247 = vst.msk [vmem:[#allocation2 + $0x30] sm:$0xff] %vm240, 0.0
          %248 = vst.msk [vmem:[#allocation2 + $0x38] sm:$0xff] %vm240, 0.0
          %249 = vst.msk [vmem:[#allocation2 + $0x40] sm:$0xff] %vm240, 0.0
          %250 = vst.msk [vmem:[#allocation2 + $0x48] sm:$0xff] %vm240, 0.0
          %251 = vst.msk [vmem:[#allocation2 + $0x50] sm:$0xff] %vm240, 0.0
          %252 = vst.msk [vmem:[#allocation2 + $0x58] sm:$0xff] %vm240, 0.0
          %253 = vst.msk [vmem:[#allocation2 + $0x60] sm:$0xff] %vm240, 0.0
          %254 = vst.msk [vmem:[#allocation2 + $0x68] sm:$0xff] %vm240, 0.0
          %255 = vst.msk [vmem:[#allocation2 + $0x70] sm:$0xff] %vm240, 0.0
          %256 = vst.msk [vmem:[#allocation2 + $0x78] sm:$0xff] %vm240, 0.0
          %257 = vst.msk [vmem:[#allocation2 + $0x80] sm:$0xff] %vm240, 0.0
          %258 = vst.msk [vmem:[#allocation2 + $0x88] sm:$0xff] %vm240, 0.0
          %259 = vst.msk [vmem:[#allocation2 + $0x90] sm:$0xff] %vm240, 0.0
          %260 = vst.msk [vmem:[#allocation2 + $0x98] sm:$0xff] %vm240, 0.0
          %261 = vst.msk [vmem:[#allocation2 + $0xa0] sm:$0xff] %vm240, 0.0
          %262 = vst.msk [vmem:[#allocation2 + $0xa8] sm:$0xff] %vm240, 0.0
          %263 = vst.msk [vmem:[#allocation2 + $0xb0] sm:$0xff] %vm240, 0.0
          %264 = vst.msk [vmem:[#allocation2 + $0xb8] sm:$0xff] %vm240, 0.0
          %265 = vst.msk [vmem:[#allocation2 + $0xc0] sm:$0xff] %vm240, 0.0
          %266 = vst.msk [vmem:[#allocation2 + $0xc8] sm:$0xff] %vm240, 0.0
          %267 = vst.msk [vmem:[#allocation2 + $0xd0] sm:$0xff] %vm240, 0.0
          %268 = vst.msk [vmem:[#allocation2 + $0xd8] sm:$0xff] %vm240, 0.0
          %269 = vst.msk [vmem:[#allocation2 + $0xe0] sm:$0xff] %vm240, 0.0
          %270 = vst.msk [vmem:[#allocation2 + $0xe8] sm:$0xff] %vm240, 0.0
          %271 = vst.msk [vmem:[#allocation2 + $0xf0] sm:$0xff] %vm240, 0.0
          %272 = vst.msk [vmem:[#allocation2 + $0xf8] sm:$0xff] %vm240, 0.0
        $region40: #{gcn_net_forward.2} parent=31 // pred_fallthru
          _
        %v273 = vld [vmem:[#allocation2] sm:$0xff]
        %v274 = vld [vmem:[#allocation2 + $0x8] sm:$0xff]
        %v275 = vld [vmem:[#allocation2 + $0x10] sm:$0xff]
        %v276 = vld [vmem:[#allocation2 + $0x18] sm:$0xff]
        %v277 = vld [vmem:[#allocation2 + $0x20] sm:$0xff]
        %v278 = vld [vmem:[#allocation2 + $0x28] sm:$0xff]
        %v279 = vld [vmem:[#allocation2 + $0x30] sm:$0xff]
        %v280 = vld [vmem:[#allocation2 + $0x38] sm:$0xff]
        %v281 = vld [vmem:[#allocation2 + $0x40] sm:$0xff]
        %v282 = vld [vmem:[#allocation2 + $0x48] sm:$0xff]
        %v283 = vld [vmem:[#allocation2 + $0x50] sm:$0xff]
        %v284 = vld [vmem:[#allocation2 + $0x58] sm:$0xff]
        %v285 = vld [vmem:[#allocation2 + $0x60] sm:$0xff]
        %v286 = vld [vmem:[#allocation2 + $0x68] sm:$0xff]
        %v287 = vld [vmem:[#allocation2 + $0x70] sm:$0xff]
        %v288 = vld [vmem:[#allocation2 + $0x78] sm:$0xff]
        %v289 = vld [vmem:[#allocation2 + $0x80] sm:$0xff]
        %v290 = vld [vmem:[#allocation2 + $0x88] sm:$0xff]
        %v291 = vld [vmem:[#allocation2 + $0x90] sm:$0xff]
        %v292 = vld [vmem:[#allocation2 + $0x98] sm:$0xff]
        %v293 = vld [vmem:[#allocation2 + $0xa0] sm:$0xff]
        %v294 = vld [vmem:[#allocation2 + $0xa8] sm:$0xff]
        %v295 = vld [vmem:[#allocation2 + $0xb0] sm:$0xff]
        %v296 = vld [vmem:[#allocation2 + $0xb8] sm:$0xff]
        %v297 = vld [vmem:[#allocation2 + $0xc0] sm:$0xff]
        %v298 = vld [vmem:[#allocation2 + $0xc8] sm:$0xff]
        %v299 = vld [vmem:[#allocation2 + $0xd0] sm:$0xff]
        %v300 = vld [vmem:[#allocation2 + $0xd8] sm:$0xff]
        %v301 = vld [vmem:[#allocation2 + $0xe0] sm:$0xff]
        %v302 = vld [vmem:[#allocation2 + $0xe8] sm:$0xff]
        %v303 = vld [vmem:[#allocation2 + $0xf0] sm:$0xff]
        %v304 = vld [vmem:[#allocation2 + $0xf8] sm:$0xff]
        %v305 = vld [vmem:[%s191] sm:$0xff]
        %v306 = vld [vmem:[%s191 + $0x8] sm:$0xff]
        %v307 = vld [vmem:[%s191 + $0x10] sm:$0xff]
        %v308 = vld [vmem:[%s191 + $0x18] sm:$0xff]
        %v309 = vld [vmem:[%s191 + $0x20] sm:$0xff]
        %v310 = vld [vmem:[%s191 + $0x28] sm:$0xff]
        %v311 = vld [vmem:[%s191 + $0x30] sm:$0xff]
        %v312 = vld [vmem:[%s191 + $0x38] sm:$0xff]
        %v313 = vld [vmem:[%s191 + $0x40] sm:$0xff]
        %v314 = vld [vmem:[%s191 + $0x48] sm:$0xff]
        %v315 = vld [vmem:[%s191 + $0x50] sm:$0xff]
        %v316 = vld [vmem:[%s191 + $0x58] sm:$0xff]
        %v317 = vld [vmem:[%s191 + $0x60] sm:$0xff]
        %v318 = vld [vmem:[%s191 + $0x68] sm:$0xff]
        %v319 = vld [vmem:[%s191 + $0x70] sm:$0xff]
        %v320 = vld [vmem:[%s191 + $0x78] sm:$0xff]
        %v321 = vld [vmem:[%s191 + $0x80] sm:$0xff]
        %v322 = vld [vmem:[%s191 + $0x88] sm:$0xff]
        %v323 = vld [vmem:[%s191 + $0x90] sm:$0xff]
        %v324 = vld [vmem:[%s191 + $0x98] sm:$0xff]
        %v325 = vld [vmem:[%s191 + $0xa0] sm:$0xff]
        %v326 = vld [vmem:[%s191 + $0xa8] sm:$0xff]
        %v327 = vld [vmem:[%s191 + $0xb0] sm:$0xff]
        %v328 = vld [vmem:[%s191 + $0xb8] sm:$0xff]
        %v329 = vld [vmem:[%s191 + $0xc0] sm:$0xff]
        %v330 = vld [vmem:[%s191 + $0xc8] sm:$0xff]
        %v331 = vld [vmem:[%s191 + $0xd0] sm:$0xff]
        %v332 = vld [vmem:[%s191 + $0xd8] sm:$0xff]
        %v333 = vld [vmem:[%s191 + $0xe0] sm:$0xff]
        %v334 = vld [vmem:[%s191 + $0xe8] sm:$0xff]
        %v335 = vld [vmem:[%s191 + $0xf0] sm:$0xff]
        %v336 = vld [vmem:[%s191 + $0xf8] sm:$0xff]
        %v337 = vld [vmem:[%s191 + $0x100] sm:$0xff]
        %v338 = vld [vmem:[%s191 + $0x108] sm:$0xff]
        %v339 = vld [vmem:[%s191 + $0x110] sm:$0xff]
        %v340 = vld [vmem:[%s191 + $0x118] sm:$0xff]
        %v341 = vld [vmem:[%s191 + $0x120] sm:$0xff]
        %v342 = vld [vmem:[%s191 + $0x128] sm:$0xff]
        %v343 = vld [vmem:[%s191 + $0x130] sm:$0xff]
        %v344 = vld [vmem:[%s191 + $0x138] sm:$0xff]
        %v345 = vld [vmem:[%s191 + $0x140] sm:$0xff]
        %v346 = vld [vmem:[%s191 + $0x148] sm:$0xff]
        %v347 = vld [vmem:[%s191 + $0x150] sm:$0xff]
        %v348 = vld [vmem:[%s191 + $0x158] sm:$0xff]
        %v349 = vld [vmem:[%s191 + $0x160] sm:$0xff]
        %v350 = vld [vmem:[%s191 + $0x168] sm:$0xff]
        %v351 = vld [vmem:[%s191 + $0x170] sm:$0xff]
        %v352 = vld [vmem:[%s191 + $0x178] sm:$0xff]
        %v353 = vld [vmem:[%s191 + $0x180] sm:$0xff]
        %v354 = vld [vmem:[%s191 + $0x188] sm:$0xff]
        %v355 = vld [vmem:[%s191 + $0x190] sm:$0xff]
        %v356 = vld [vmem:[%s191 + $0x198] sm:$0xff]
        %v357 = vld [vmem:[%s191 + $0x1a0] sm:$0xff]
        %v358 = vld [vmem:[%s191 + $0x1a8] sm:$0xff]
        %v359 = vld [vmem:[%s191 + $0x1b0] sm:$0xff]
        %v360 = vld [vmem:[%s191 + $0x1b8] sm:$0xff]
        %v361 = vld [vmem:[%s191 + $0x1c0] sm:$0xff]
        %v362 = vld [vmem:[%s191 + $0x1c8] sm:$0xff]
        %v363 = vld [vmem:[%s191 + $0x1d0] sm:$0xff]
        %v364 = vld [vmem:[%s191 + $0x1d8] sm:$0xff]
        %v365 = vld [vmem:[%s191 + $0x1e0] sm:$0xff]
        %v366 = vld [vmem:[%s191 + $0x1e8] sm:$0xff]
        %v367 = vld [vmem:[%s191 + $0x1f0] sm:$0xff]
        %v368 = vld [vmem:[%s191 + $0x1f8] sm:$0xff]
        %v369 = vld [vmem:[%s226] sm:$0xf]
        %v370 = vld [vmem:[%s226 + $0x4] sm:$0xf]
        %v371 = vld [vmem:[%s226 + $0x8] sm:$0xf]
        %v372 = vld [vmem:[%s226 + $0xc] sm:$0xf]
        %v373 = vld [vmem:[%s226 + $0x10] sm:$0xf]
        %v374 = vld [vmem:[%s226 + $0x14] sm:$0xf]
        %v375 = vld [vmem:[%s226 + $0x18] sm:$0xf]
        %v376 = vld [vmem:[%s226 + $0x1c] sm:$0xf]
        %v377 = vld [vmem:[%s226 + $0x20] sm:$0xf]
        %v378 = vld [vmem:[%s226 + $0x24] sm:$0xf]
        %v379 = vld [vmem:[%s226 + $0x28] sm:$0xf]
        %v380 = vld [vmem:[%s226 + $0x2c] sm:$0xf]
        %v381 = vld [vmem:[%s226 + $0x30] sm:$0xf]
        %v382 = vld [vmem:[%s226 + $0x34] sm:$0xf]
        %v383 = vld [vmem:[%s226 + $0x38] sm:$0xf]
        %v384 = vld [vmem:[%s226 + $0x3c] sm:$0xf]
        %v385 = vld [vmem:[%s226 + $0x40] sm:$0xf]
        %v386 = vld [vmem:[%s226 + $0x44] sm:$0xf]
        %v387 = vld [vmem:[%s226 + $0x48] sm:$0xf]
        %v388 = vld [vmem:[%s226 + $0x4c] sm:$0xf]
        %v389 = vld [vmem:[%s226 + $0x50] sm:$0xf]
        %v390 = vld [vmem:[%s226 + $0x54] sm:$0xf]
        %v391 = vld [vmem:[%s226 + $0x58] sm:$0xf]
        %v392 = vld [vmem:[%s226 + $0x5c] sm:$0xf]
        %v393 = vld [vmem:[%s226 + $0x60] sm:$0xf]
        %v394 = vld [vmem:[%s226 + $0x64] sm:$0xf]
        %v395 = vld [vmem:[%s226 + $0x68] sm:$0xf]
        %v396 = vld [vmem:[%s226 + $0x6c] sm:$0xf]
        %v397 = vld [vmem:[%s226 + $0x70] sm:$0xf]
        %v398 = vld [vmem:[%s226 + $0x74] sm:$0xf]
        %v399 = vld [vmem:[%s226 + $0x78] sm:$0xf]
        %v400 = vld [vmem:[%s226 + $0x7c] sm:$0xf]
        %v401 = vld [vmem:[%s226 + $0x80] sm:$0xf]
        %v402 = vld [vmem:[%s226 + $0x84] sm:$0xf]
        %v403 = vld [vmem:[%s226 + $0x88] sm:$0xf]
        %v404 = vld [vmem:[%s226 + $0x8c] sm:$0xf]
        %v405 = vld [vmem:[%s226 + $0x90] sm:$0xf]
        %v406 = vld [vmem:[%s226 + $0x94] sm:$0xf]
        %v407 = vld [vmem:[%s226 + $0x98] sm:$0xf]
        %v408 = vld [vmem:[%s226 + $0x9c] sm:$0xf]
        %v409 = vld [vmem:[%s226 + $0xa0] sm:$0xf]
        %v410 = vld [vmem:[%s226 + $0xa4] sm:$0xf]
        %v411 = vld [vmem:[%s226 + $0xa8] sm:$0xf]
        %v412 = vld [vmem:[%s226 + $0xac] sm:$0xf]
        %v413 = vld [vmem:[%s226 + $0xb0] sm:$0xf]
        %v414 = vld [vmem:[%s226 + $0xb4] sm:$0xf]
        %v415 = vld [vmem:[%s226 + $0xb8] sm:$0xf]
        %v416 = vld [vmem:[%s226 + $0xbc] sm:$0xf]
        %v417 = vld [vmem:[%s226 + $0xc0] sm:$0xf]
        %v418 = vld [vmem:[%s226 + $0xc4] sm:$0xf]
        %v419 = vld [vmem:[%s226 + $0xc8] sm:$0xf]
        %v420 = vld [vmem:[%s226 + $0xcc] sm:$0xf]
        %v421 = vld [vmem:[%s226 + $0xd0] sm:$0xf]
        %v422 = vld [vmem:[%s226 + $0xd4] sm:$0xf]
        %v423 = vld [vmem:[%s226 + $0xd8] sm:$0xf]
        %v424 = vld [vmem:[%s226 + $0xdc] sm:$0xf]
        %v425 = vld [vmem:[%s226 + $0xe0] sm:$0xf]
        %v426 = vld [vmem:[%s226 + $0xe4] sm:$0xf]
        %v427 = vld [vmem:[%s226 + $0xe8] sm:$0xf]
        %v428 = vld [vmem:[%s226 + $0xec] sm:$0xf]
        %v429 = vld [vmem:[%s226 + $0xf0] sm:$0xf]
        %v430 = vld [vmem:[%s226 + $0xf4] sm:$0xf]
        %v431 = vld [vmem:[%s226 + $0xf8] sm:$0xf]
        %v432 = vld [vmem:[%s226 + $0xfc] sm:$0xf]
        %v497 = vunpack.c.l.b16 %v305
        %v498 = vunpack.c.h.b16 %v305
        %v499 = vunpack.c.l.b16 %v306
        %v500 = vunpack.c.h.b16 %v306
        %v501 = vunpack.c.l.b16 %v307
        %v502 = vunpack.c.h.b16 %v307
        %v503 = vunpack.c.l.b16 %v308
        %v504 = vunpack.c.h.b16 %v308
        %v505 = vunpack.c.l.b16 %v309
        %v506 = vunpack.c.h.b16 %v309
        %v507 = vunpack.c.l.b16 %v310
        %v508 = vunpack.c.h.b16 %v310
        %v509 = vunpack.c.l.b16 %v311
        %v510 = vunpack.c.h.b16 %v311
        %v511 = vunpack.c.l.b16 %v312
        %v512 = vunpack.c.h.b16 %v312
        %v513 = vunpack.c.l.b16 %v313
        %v514 = vunpack.c.h.b16 %v313
        %v515 = vunpack.c.l.b16 %v314
        %v516 = vunpack.c.h.b16 %v314
        %v517 = vunpack.c.l.b16 %v315
        %v518 = vunpack.c.h.b16 %v315
        %v519 = vunpack.c.l.b16 %v316
        %v520 = vunpack.c.h.b16 %v316
        %v521 = vunpack.c.l.b16 %v317
        %v522 = vunpack.c.h.b16 %v317
        %v523 = vunpack.c.l.b16 %v318
        %v524 = vunpack.c.h.b16 %v318
        %v525 = vunpack.c.l.b16 %v319
        %v526 = vunpack.c.h.b16 %v319
        %v527 = vunpack.c.l.b16 %v320
        %v528 = vunpack.c.h.b16 %v320
        %v529 = vunpack.c.l.b16 %v321
        %v530 = vunpack.c.h.b16 %v321
        %v531 = vunpack.c.l.b16 %v322
        %v532 = vunpack.c.h.b16 %v322
        %v533 = vunpack.c.l.b16 %v323
        %v534 = vunpack.c.h.b16 %v323
        %v535 = vunpack.c.l.b16 %v324
        %v536 = vunpack.c.h.b16 %v324
        %v537 = vunpack.c.l.b16 %v325
        %v538 = vunpack.c.h.b16 %v325
        %v539 = vunpack.c.l.b16 %v326
        %v540 = vunpack.c.h.b16 %v326
        %v541 = vunpack.c.l.b16 %v327
        %v542 = vunpack.c.h.b16 %v327
        %v543 = vunpack.c.l.b16 %v328
        %v544 = vunpack.c.h.b16 %v328
        %v545 = vunpack.c.l.b16 %v329
        %v546 = vunpack.c.h.b16 %v329
        %v547 = vunpack.c.l.b16 %v330
        %v548 = vunpack.c.h.b16 %v330
        %v549 = vunpack.c.l.b16 %v331
        %v550 = vunpack.c.h.b16 %v331
        %v551 = vunpack.c.l.b16 %v332
        %v552 = vunpack.c.h.b16 %v332
        %v553 = vunpack.c.l.b16 %v333
        %v554 = vunpack.c.h.b16 %v333
        %v555 = vunpack.c.l.b16 %v334
        %v556 = vunpack.c.h.b16 %v334
        %v557 = vunpack.c.l.b16 %v335
        %v558 = vunpack.c.h.b16 %v335
        %v559 = vunpack.c.l.b16 %v336
        %v560 = vunpack.c.h.b16 %v336
        %v561 = vunpack.c.l.b16 %v337
        %v562 = vunpack.c.h.b16 %v337
        %v563 = vunpack.c.l.b16 %v338
        %v564 = vunpack.c.h.b16 %v338
        %v565 = vunpack.c.l.b16 %v339
        %v566 = vunpack.c.h.b16 %v339
        %v567 = vunpack.c.l.b16 %v340
        %v568 = vunpack.c.h.b16 %v340
        %v569 = vunpack.c.l.b16 %v341
        %v570 = vunpack.c.h.b16 %v341
        %v571 = vunpack.c.l.b16 %v342
        %v572 = vunpack.c.h.b16 %v342
        %v573 = vunpack.c.l.b16 %v343
        %v574 = vunpack.c.h.b16 %v343
        %v575 = vunpack.c.l.b16 %v344
        %v576 = vunpack.c.h.b16 %v344
        %v577 = vunpack.c.l.b16 %v345
        %v578 = vunpack.c.h.b16 %v345
        %v579 = vunpack.c.l.b16 %v346
        %v580 = vunpack.c.h.b16 %v346
        %v581 = vunpack.c.l.b16 %v347
        %v582 = vunpack.c.h.b16 %v347
        %v583 = vunpack.c.l.b16 %v348
        %v584 = vunpack.c.h.b16 %v348
        %v585 = vunpack.c.l.b16 %v349
        %v586 = vunpack.c.h.b16 %v349
        %v587 = vunpack.c.l.b16 %v350
        %v588 = vunpack.c.h.b16 %v350
        %v589 = vunpack.c.l.b16 %v351
        %v590 = vunpack.c.h.b16 %v351
        %v591 = vunpack.c.l.b16 %v352
        %v592 = vunpack.c.h.b16 %v352
        %v593 = vunpack.c.l.b16 %v353
        %v594 = vunpack.c.h.b16 %v353
        %v595 = vunpack.c.l.b16 %v354
        %v596 = vunpack.c.h.b16 %v354
        %v597 = vunpack.c.l.b16 %v355
        %v598 = vunpack.c.h.b16 %v355
        %v599 = vunpack.c.l.b16 %v356
        %v600 = vunpack.c.h.b16 %v356
        %v601 = vunpack.c.l.b16 %v357
        %v602 = vunpack.c.h.b16 %v357
        %v603 = vunpack.c.l.b16 %v358
        %v604 = vunpack.c.h.b16 %v358
        %v605 = vunpack.c.l.b16 %v359
        %v606 = vunpack.c.h.b16 %v359
        %v607 = vunpack.c.l.b16 %v360
        %v608 = vunpack.c.h.b16 %v360
        %v609 = vunpack.c.l.b16 %v361
        %v610 = vunpack.c.h.b16 %v361
        %v611 = vunpack.c.l.b16 %v362
        %v612 = vunpack.c.h.b16 %v362
        %v613 = vunpack.c.l.b16 %v363
        %v614 = vunpack.c.h.b16 %v363
        %v615 = vunpack.c.l.b16 %v364
        %v616 = vunpack.c.h.b16 %v364
        %v617 = vunpack.c.l.b16 %v365
        %v618 = vunpack.c.h.b16 %v365
        %v619 = vunpack.c.l.b16 %v366
        %v620 = vunpack.c.h.b16 %v366
        %v621 = vunpack.c.l.b16 %v367
        %v622 = vunpack.c.h.b16 %v367
        %v623 = vunpack.c.l.b16 %v368
        %v624 = vunpack.c.h.b16 %v368
        %v625 = vpack.c.b16 %v501, %v497
        %v626 = vpack.c.b16 %v502, %v498
        %v627 = vpack.c.b16 %v503, %v499
        %v628 = vpack.c.b16 %v504, %v500
        %v629 = vpack.c.b16 %v509, %v505
        %v630 = vpack.c.b16 %v510, %v506
        %v631 = vpack.c.b16 %v511, %v507
        %v632 = vpack.c.b16 %v512, %v508
        %v633 = vpack.c.b16 %v517, %v513
        %v634 = vpack.c.b16 %v518, %v514
        %v635 = vpack.c.b16 %v519, %v515
        %v636 = vpack.c.b16 %v520, %v516
        %v637 = vpack.c.b16 %v525, %v521
        %v638 = vpack.c.b16 %v526, %v522
        %v639 = vpack.c.b16 %v527, %v523
        %v640 = vpack.c.b16 %v528, %v524
        %v641 = vpack.c.b16 %v533, %v529
        %v642 = vpack.c.b16 %v534, %v530
        %v643 = vpack.c.b16 %v535, %v531
        %v644 = vpack.c.b16 %v536, %v532
        %v645 = vpack.c.b16 %v541, %v537
        %v646 = vpack.c.b16 %v542, %v538
        %v647 = vpack.c.b16 %v543, %v539
        %v648 = vpack.c.b16 %v544, %v540
        %v649 = vpack.c.b16 %v549, %v545
        %v650 = vpack.c.b16 %v550, %v546
        %v651 = vpack.c.b16 %v551, %v547
        %v652 = vpack.c.b16 %v552, %v548
        %v653 = vpack.c.b16 %v557, %v553
        %v654 = vpack.c.b16 %v558, %v554
        %v655 = vpack.c.b16 %v559, %v555
        %v656 = vpack.c.b16 %v560, %v556
        %v657 = vpack.c.b16 %v565, %v561
        %v658 = vpack.c.b16 %v566, %v562
        %v659 = vpack.c.b16 %v567, %v563
        %v660 = vpack.c.b16 %v568, %v564
        %v661 = vpack.c.b16 %v573, %v569
        %v662 = vpack.c.b16 %v574, %v570
        %v663 = vpack.c.b16 %v575, %v571
        %v664 = vpack.c.b16 %v576, %v572
        %v665 = vpack.c.b16 %v581, %v577
        %v666 = vpack.c.b16 %v582, %v578
        %v667 = vpack.c.b16 %v583, %v579
        %v668 = vpack.c.b16 %v584, %v580
        %v669 = vpack.c.b16 %v589, %v585
        %v670 = vpack.c.b16 %v590, %v586
        %v671 = vpack.c.b16 %v591, %v587
        %v672 = vpack.c.b16 %v592, %v588
        %v673 = vpack.c.b16 %v597, %v593
        %v674 = vpack.c.b16 %v598, %v594
        %v675 = vpack.c.b16 %v599, %v595
        %v676 = vpack.c.b16 %v600, %v596
        %v677 = vpack.c.b16 %v605, %v601
        %v678 = vpack.c.b16 %v606, %v602
        %v679 = vpack.c.b16 %v607, %v603
        %v680 = vpack.c.b16 %v608, %v604
        %v681 = vpack.c.b16 %v613, %v609
        %v682 = vpack.c.b16 %v614, %v610
        %v683 = vpack.c.b16 %v615, %v611
        %v684 = vpack.c.b16 %v616, %v612
        %v685 = vpack.c.b16 %v621, %v617
        %v686 = vpack.c.b16 %v622, %v618
        %v687 = vpack.c.b16 %v623, %v619
        %v688 = vpack.c.b16 %v624, %v620
        %v817 = vunpack.c.l.b16 %v369
        %v818 = vunpack.c.l.b16 %v370
        %v819 = vunpack.c.l.b16 %v371
        %v820 = vunpack.c.l.b16 %v372
        %v821 = vunpack.c.l.b16 %v373
        %v822 = vunpack.c.l.b16 %v374
        %v823 = vunpack.c.l.b16 %v375
        %v824 = vunpack.c.l.b16 %v376
        %v825 = vunpack.c.l.b16 %v377
        %v826 = vunpack.c.l.b16 %v378
        %v827 = vunpack.c.l.b16 %v379
        %v828 = vunpack.c.l.b16 %v380
        %v829 = vunpack.c.l.b16 %v381
        %v830 = vunpack.c.l.b16 %v382
        %v831 = vunpack.c.l.b16 %v383
        %v832 = vunpack.c.l.b16 %v384
        %v833 = vunpack.c.l.b16 %v385
        %v834 = vunpack.c.l.b16 %v386
        %v835 = vunpack.c.l.b16 %v387
        %v836 = vunpack.c.l.b16 %v388
        %v837 = vunpack.c.l.b16 %v389
        %v838 = vunpack.c.l.b16 %v390
        %v839 = vunpack.c.l.b16 %v391
        %v840 = vunpack.c.l.b16 %v392
        %v841 = vunpack.c.l.b16 %v393
        %v842 = vunpack.c.l.b16 %v394
        %v843 = vunpack.c.l.b16 %v395
        %v844 = vunpack.c.l.b16 %v396
        %v845 = vunpack.c.l.b16 %v397
        %v846 = vunpack.c.l.b16 %v398
        %v847 = vunpack.c.l.b16 %v399
        %v848 = vunpack.c.l.b16 %v400
        %v849 = vunpack.c.l.b16 %v401
        %v850 = vunpack.c.l.b16 %v402
        %v851 = vunpack.c.l.b16 %v403
        %v852 = vunpack.c.l.b16 %v404
        %v853 = vunpack.c.l.b16 %v405
        %v854 = vunpack.c.l.b16 %v406
        %v855 = vunpack.c.l.b16 %v407
        %v856 = vunpack.c.l.b16 %v408
        %v857 = vunpack.c.l.b16 %v409
        %v858 = vunpack.c.l.b16 %v410
        %v859 = vunpack.c.l.b16 %v411
        %v860 = vunpack.c.l.b16 %v412
        %v861 = vunpack.c.l.b16 %v413
        %v862 = vunpack.c.l.b16 %v414
        %v863 = vunpack.c.l.b16 %v415
        %v864 = vunpack.c.l.b16 %v416
        %v865 = vunpack.c.l.b16 %v417
        %v866 = vunpack.c.l.b16 %v418
        %v867 = vunpack.c.l.b16 %v419
        %v868 = vunpack.c.l.b16 %v420
        %v869 = vunpack.c.l.b16 %v421
        %v870 = vunpack.c.l.b16 %v422
        %v871 = vunpack.c.l.b16 %v423
        %v872 = vunpack.c.l.b16 %v424
        %v873 = vunpack.c.l.b16 %v425
        %v874 = vunpack.c.l.b16 %v426
        %v875 = vunpack.c.l.b16 %v427
        %v876 = vunpack.c.l.b16 %v428
        %v877 = vunpack.c.l.b16 %v429
        %v878 = vunpack.c.l.b16 %v430
        %v879 = vunpack.c.l.b16 %v431
        %v880 = vunpack.c.l.b16 %v432
        %v881 = vpack.c.b16 %v818, %v817
        %v882 = vpack.c.b16 %v820, %v819
        %v883 = vpack.c.b16 %v822, %v821
        %v884 = vpack.c.b16 %v824, %v823
        %v885 = vpack.c.b16 %v826, %v825
        %v886 = vpack.c.b16 %v828, %v827
        %v887 = vpack.c.b16 %v830, %v829
        %v888 = vpack.c.b16 %v832, %v831
        %v889 = vpack.c.b16 %v834, %v833
        %v890 = vpack.c.b16 %v836, %v835
        %v891 = vpack.c.b16 %v838, %v837
        %v892 = vpack.c.b16 %v840, %v839
        %v893 = vpack.c.b16 %v842, %v841
        %v894 = vpack.c.b16 %v844, %v843
        %v895 = vpack.c.b16 %v846, %v845
        %v896 = vpack.c.b16 %v848, %v847
        %v897 = vpack.c.b16 %v850, %v849
        %v898 = vpack.c.b16 %v852, %v851
        %v899 = vpack.c.b16 %v854, %v853
        %v900 = vpack.c.b16 %v856, %v855
        %v901 = vpack.c.b16 %v858, %v857
        %v902 = vpack.c.b16 %v860, %v859
        %v903 = vpack.c.b16 %v862, %v861
        %v904 = vpack.c.b16 %v864, %v863
        %v905 = vpack.c.b16 %v866, %v865
        %v906 = vpack.c.b16 %v868, %v867
        %v907 = vpack.c.b16 %v870, %v869
        %v908 = vpack.c.b16 %v872, %v871
        %v909 = vpack.c.b16 %v874, %v873
        %v910 = vpack.c.b16 %v876, %v875
        %v911 = vpack.c.b16 %v878, %v877
        %v912 = vpack.c.b16 %v880, %v879
        %945 = vmatprep.subr.bf16.mxu0 0
        %946 = vmatpush1.bf16.msra.mxu0 %v881
        %947 = vmatprep.subr.bf16.mxu0 0
        %948 = vmatpush1.bf16.msra.mxu0 %v882
        %949 = vmatprep.subr.bf16.mxu0 0
        %950 = vmatpush1.bf16.msra.mxu0 %v883
        %951 = vmatprep.subr.bf16.mxu0 0
        %952 = vmatpush1.bf16.msra.mxu0 %v884
        %953 = vmatprep.subr.bf16.mxu0 0
        %954 = vmatpush1.bf16.msra.mxu0 %v885
        %955 = vmatprep.subr.bf16.mxu0 0
        %956 = vmatpush1.bf16.msra.mxu0 %v886
        %957 = vmatprep.subr.bf16.mxu0 0
        %958 = vmatpush1.bf16.msra.mxu0 %v887
        %959 = vmatprep.subr.bf16.mxu0 0
        %960 = vmatpush1.bf16.msra.mxu0 %v888
        %961 = vmatprep.subr.bf16.mxu0 0
        %962 = vmatpush1.bf16.msra.mxu0 %v889
        %963 = vmatprep.subr.bf16.mxu0 0
        %964 = vmatpush1.bf16.msra.mxu0 %v890
        %965 = vmatprep.subr.bf16.mxu0 0
        %966 = vmatpush1.bf16.msra.mxu0 %v891
        %967 = vmatprep.subr.bf16.mxu0 0
        %968 = vmatpush1.bf16.msra.mxu0 %v892
        %969 = vmatprep.subr.bf16.mxu0 0
        %970 = vmatpush1.bf16.msra.mxu0 %v893
        %971 = vmatprep.subr.bf16.mxu0 0
        %972 = vmatpush1.bf16.msra.mxu0 %v894
        %973 = vmatprep.subr.bf16.mxu0 0
        %974 = vmatpush1.bf16.msra.mxu0 %v895
        %975 = vmatprep.subr.bf16.mxu0 0
        %976 = vmatpush1.bf16.msra.mxu0 %v896
        %977 = vmatprep.mubr.bf16.mxu0 %v626
        %978 = vmatmul.mubr.bf16.gmra.mrb[0].mxu0 %v625
        %v979 = vpop.f32.mrb[0].mxu0
        %v980 = vadd.f32 0.0, %v979
        %v981 = vpop.f32.mrb[0].mxu0
        %v982 = vpop.f32.mrb[0].mxu0
        %v983 = vadd.f32 0.0, %v982
        %v984 = vpop.f32.mrb[0].mxu0
        %985 = vmatprep.mubr.bf16.mxu0 %v630
        %986 = vmatmul.mubr.bf16.gmra.mrb[0].mxu0 %v629
        %v987 = vpop.f32.mrb[0].mxu0
        %v988 = vadd.f32 0.0, %v987
        %v989 = vpop.f32.mrb[0].mxu0
        %v990 = vpop.f32.mrb[0].mxu0
        %v991 = vadd.f32 0.0, %v990
        %v992 = vpop.f32.mrb[0].mxu0
        %993 = vmatprep.mubr.bf16.mxu0 %v634
        %994 = vmatmul.mubr.bf16.gmra.mrb[0].mxu0 %v633
        %v995 = vpop.f32.mrb[0].mxu0
        %v996 = vadd.f32 0.0, %v995
        %v997 = vpop.f32.mrb[0].mxu0
        %v998 = vpop.f32.mrb[0].mxu0
        %v999 = vadd.f32 0.0, %v998
        %v1000 = vpop.f32.mrb[0].mxu0
        %1001 = vmatprep.mubr.bf16.mxu0 %v638
        %1002 = vmatmul.mubr.bf16.gmra.mrb[0].mxu0 %v637
        %v1003 = vpop.f32.mrb[0].mxu0
        %v1004 = vadd.f32 0.0, %v1003
        %v1005 = vpop.f32.mrb[0].mxu0
        %v1006 = vpop.f32.mrb[0].mxu0
        %v1007 = vadd.f32 0.0, %v1006
        %v1008 = vpop.f32.mrb[0].mxu0
        %1009 = vmatprep.mubr.bf16.mxu0 %v642
        %1010 = vmatmul.mubr.bf16.gmra.mrb[0].mxu0 %v641
        %v1011 = vpop.f32.mrb[0].mxu0
        %v1012 = vadd.f32 0.0, %v1011
        %v1013 = vpop.f32.mrb[0].mxu0
        %v1014 = vpop.f32.mrb[0].mxu0
        %v1015 = vadd.f32 0.0, %v1014
        %v1016 = vpop.f32.mrb[0].mxu0
        %1017 = vmatprep.mubr.bf16.mxu0 %v646
        %1018 = vmatmul.mubr.bf16.gmra.mrb[0].mxu0 %v645
        %v1019 = vpop.f32.mrb[0].mxu0
        %v1020 = vadd.f32 0.0, %v1019
        %v1021 = vpop.f32.mrb[0].mxu0
        %v1022 = vpop.f32.mrb[0].mxu0
        %v1023 = vadd.f32 0.0, %v1022
        %v1024 = vpop.f32.mrb[0].mxu0
        %1025 = vmatprep.mubr.bf16.mxu0 %v650
        %1026 = vmatmul.mubr.bf16.gmra.mrb[0].mxu0 %v649
        %v1027 = vpop.f32.mrb[0].mxu0
        %v1028 = vadd.f32 0.0, %v1027
        %v1029 = vpop.f32.mrb[0].mxu0
        %v1030 = vpop.f32.mrb[0].mxu0
        %v1031 = vadd.f32 0.0, %v1030
        %v1032 = vpop.f32.mrb[0].mxu0
        %1033 = vmatprep.mubr.bf16.mxu0 %v654
        %1034 = vmatmul.mubr.bf16.gmra.mrb[0].mxu0 %v653
        %v1035 = vpop.f32.mrb[0].mxu0
        %v1036 = vadd.f32 0.0, %v1035
        %v1037 = vpop.f32.mrb[0].mxu0
        %v1038 = vpop.f32.mrb[0].mxu0
        %v1039 = vadd.f32 0.0, %v1038
        %v1040 = vpop.f32.mrb[0].mxu0
        %1041 = vmatprep.mubr.bf16.mxu0 %v658
        %1042 = vmatmul.mubr.bf16.gmra.mrb[0].mxu0 %v657
        %v1043 = vpop.f32.mrb[0].mxu0
        %v1044 = vadd.f32 0.0, %v1043
        %v1045 = vpop.f32.mrb[0].mxu0
        %v1046 = vpop.f32.mrb[0].mxu0
        %v1047 = vadd.f32 0.0, %v1046
        %v1048 = vpop.f32.mrb[0].mxu0
        %1049 = vmatprep.mubr.bf16.mxu0 %v662
        %1050 = vmatmul.mubr.bf16.gmra.mrb[0].mxu0 %v661
        %v1051 = vpop.f32.mrb[0].mxu0
        %v1052 = vadd.f32 0.0, %v1051
        %v1053 = vpop.f32.mrb[0].mxu0
        %v1054 = vpop.f32.mrb[0].mxu0
        %v1055 = vadd.f32 0.0, %v1054
        %v1056 = vpop.f32.mrb[0].mxu0
        %1057 = vmatprep.mubr.bf16.mxu0 %v666
        %1058 = vmatmul.mubr.bf16.gmra.mrb[0].mxu0 %v665
        %v1059 = vpop.f32.mrb[0].mxu0
        %v1060 = vadd.f32 0.0, %v1059
        %v1061 = vpop.f32.mrb[0].mxu0
        %v1062 = vpop.f32.mrb[0].mxu0
        %v1063 = vadd.f32 0.0, %v1062
        %v1064 = vpop.f32.mrb[0].mxu0
        %1065 = vmatprep.mubr.bf16.mxu0 %v670
        %1066 = vmatmul.mubr.bf16.gmra.mrb[0].mxu0 %v669
        %v1067 = vpop.f32.mrb[0].mxu0
        %v1068 = vadd.f32 0.0, %v1067
        %v1069 = vpop.f32.mrb[0].mxu0
        %v1070 = vpop.f32.mrb[0].mxu0
        %v1071 = vadd.f32 0.0, %v1070
        %v1072 = vpop.f32.mrb[0].mxu0
        %1073 = vmatprep.mubr.bf16.mxu0 %v674
        %1074 = vmatmul.mubr.bf16.gmra.mrb[0].mxu0 %v673
        %v1075 = vpop.f32.mrb[0].mxu0
        %v1076 = vadd.f32 0.0, %v1075
        %v1077 = vpop.f32.mrb[0].mxu0
        %v1078 = vpop.f32.mrb[0].mxu0
        %v1079 = vadd.f32 0.0, %v1078
        %v1080 = vpop.f32.mrb[0].mxu0
        %1081 = vmatprep.mubr.bf16.mxu0 %v678
        %1082 = vmatmul.mubr.bf16.gmra.mrb[0].mxu0 %v677
        %v1083 = vpop.f32.mrb[0].mxu0
        %v1084 = vadd.f32 0.0, %v1083
        %v1085 = vpop.f32.mrb[0].mxu0
        %v1086 = vpop.f32.mrb[0].mxu0
        %v1087 = vadd.f32 0.0, %v1086
        %v1088 = vpop.f32.mrb[0].mxu0
        %1089 = vmatprep.mubr.bf16.mxu0 %v682
        %1090 = vmatmul.mubr.bf16.gmra.mrb[0].mxu0 %v681
        %v1091 = vpop.f32.mrb[0].mxu0
        %v1092 = vadd.f32 0.0, %v1091
        %v1093 = vpop.f32.mrb[0].mxu0
        %v1094 = vpop.f32.mrb[0].mxu0
        %v1095 = vadd.f32 0.0, %v1094
        %v1096 = vpop.f32.mrb[0].mxu0
        %1097 = vmatprep.mubr.bf16.mxu0 %v686
        %1098 = vmatmul.mubr.bf16.gmra.mrb[0].mxu0 %v685
        %v1099 = vpop.f32.mrb[0].mxu0
        %v1100 = vadd.f32 0.0, %v1099
        %v1101 = vpop.f32.mrb[0].mxu0
        %v1102 = vpop.f32.mrb[0].mxu0
        %v1103 = vadd.f32 0.0, %v1102
        %v1104 = vpop.f32.mrb[0].mxu0
        %1105 = vdwg.mxu0
        %1106 = vmatprep.subr.bf16.mxu0 0
        %1107 = vmatpush1.bf16.msra.mxu0 %v897
        %1108 = vmatprep.subr.bf16.mxu0 0
        %1109 = vmatpush1.bf16.msra.mxu0 %v898
        %1110 = vmatprep.subr.bf16.mxu0 0
        %1111 = vmatpush1.bf16.msra.mxu0 %v899
        %1112 = vmatprep.subr.bf16.mxu0 0
        %1113 = vmatpush1.bf16.msra.mxu0 %v900
        %1114 = vmatprep.subr.bf16.mxu0 0
        %1115 = vmatpush1.bf16.msra.mxu0 %v901
        %1116 = vmatprep.subr.bf16.mxu0 0
        %1117 = vmatpush1.bf16.msra.mxu0 %v902
        %1118 = vmatprep.subr.bf16.mxu0 0
        %1119 = vmatpush1.bf16.msra.mxu0 %v903
        %1120 = vmatprep.subr.bf16.mxu0 0
        %1121 = vmatpush1.bf16.msra.mxu0 %v904
        %1122 = vmatprep.subr.bf16.mxu0 0
        %1123 = vmatpush1.bf16.msra.mxu0 %v905
        %1124 = vmatprep.subr.bf16.mxu0 0
        %1125 = vmatpush1.bf16.msra.mxu0 %v906
        %1126 = vmatprep.subr.bf16.mxu0 0
        %1127 = vmatpush1.bf16.msra.mxu0 %v907
        %1128 = vmatprep.subr.bf16.mxu0 0
        %1129 = vmatpush1.bf16.msra.mxu0 %v908
        %1130 = vmatprep.subr.bf16.mxu0 0
        %1131 = vmatpush1.bf16.msra.mxu0 %v909
        %1132 = vmatprep.subr.bf16.mxu0 0
        %1133 = vmatpush1.bf16.msra.mxu0 %v910
        %1134 = vmatprep.subr.bf16.mxu0 0
        %1135 = vmatpush1.bf16.msra.mxu0 %v911
        %1136 = vmatprep.subr.bf16.mxu0 0
        %1137 = vmatpush1.bf16.msra.mxu0 %v912
        %1138 = vmatprep.mubr.bf16.mxu0 %v628
        %1139 = vmatmul.mubr.bf16.gmra.mrb[0].mxu0 %v627
        %v1140 = vpop.f32.mrb[0].mxu0
        %v1141 = vadd.f32 %v980, %v1140
        %v1142 = vpop.f32.mrb[0].mxu0
        %v1143 = vpop.f32.mrb[0].mxu0
        %v1144 = vadd.f32 %v983, %v1143
        %v1145 = vpop.f32.mrb[0].mxu0
        %1146 = vmatprep.mubr.bf16.mxu0 %v632
        %1147 = vmatmul.mubr.bf16.gmra.mrb[0].mxu0 %v631
        %v1148 = vpop.f32.mrb[0].mxu0
        %v1149 = vadd.f32 %v988, %v1148
        %v1150 = vpop.f32.mrb[0].mxu0
        %v1151 = vpop.f32.mrb[0].mxu0
        %v1152 = vadd.f32 %v991, %v1151
        %v1153 = vpop.f32.mrb[0].mxu0
        %1154 = vmatprep.mubr.bf16.mxu0 %v636
        %1155 = vmatmul.mubr.bf16.gmra.mrb[0].mxu0 %v635
        %v1156 = vpop.f32.mrb[0].mxu0
        %v1157 = vadd.f32 %v996, %v1156
        %v1158 = vpop.f32.mrb[0].mxu0
        %v1159 = vpop.f32.mrb[0].mxu0
        %v1160 = vadd.f32 %v999, %v1159
        %v1161 = vpop.f32.mrb[0].mxu0
        %1162 = vmatprep.mubr.bf16.mxu0 %v640
        %1163 = vmatmul.mubr.bf16.gmra.mrb[0].mxu0 %v639
        %v1164 = vpop.f32.mrb[0].mxu0
        %v1165 = vadd.f32 %v1004, %v1164
        %v1166 = vpop.f32.mrb[0].mxu0
        %v1167 = vpop.f32.mrb[0].mxu0
        %v1168 = vadd.f32 %v1007, %v1167
        %v1169 = vpop.f32.mrb[0].mxu0
        %1170 = vmatprep.mubr.bf16.mxu0 %v644
        %1171 = vmatmul.mubr.bf16.gmra.mrb[0].mxu0 %v643
        %v1172 = vpop.f32.mrb[0].mxu0
        %v1173 = vadd.f32 %v1012, %v1172
        %v1174 = vpop.f32.mrb[0].mxu0
        %v1175 = vpop.f32.mrb[0].mxu0
        %v1176 = vadd.f32 %v1015, %v1175
        %v1177 = vpop.f32.mrb[0].mxu0
        %1178 = vmatprep.mubr.bf16.mxu0 %v648
        %1179 = vmatmul.mubr.bf16.gmra.mrb[0].mxu0 %v647
        %v1180 = vpop.f32.mrb[0].mxu0
        %v1181 = vadd.f32 %v1020, %v1180
        %v1182 = vpop.f32.mrb[0].mxu0
        %v1183 = vpop.f32.mrb[0].mxu0
        %v1184 = vadd.f32 %v1023, %v1183
        %v1185 = vpop.f32.mrb[0].mxu0
        %1186 = vmatprep.mubr.bf16.mxu0 %v652
        %1187 = vmatmul.mubr.bf16.gmra.mrb[0].mxu0 %v651
        %v1188 = vpop.f32.mrb[0].mxu0
        %v1189 = vadd.f32 %v1028, %v1188
        %v1190 = vpop.f32.mrb[0].mxu0
        %v1191 = vpop.f32.mrb[0].mxu0
        %v1192 = vadd.f32 %v1031, %v1191
        %v1193 = vpop.f32.mrb[0].mxu0
        %1194 = vmatprep.mubr.bf16.mxu0 %v656
        %1195 = vmatmul.mubr.bf16.gmra.mrb[0].mxu0 %v655
        %v1196 = vpop.f32.mrb[0].mxu0
        %v1197 = vadd.f32 %v1036, %v1196
        %v1198 = vpop.f32.mrb[0].mxu0
        %v1199 = vpop.f32.mrb[0].mxu0
        %v1200 = vadd.f32 %v1039, %v1199
        %v1201 = vpop.f32.mrb[0].mxu0
        %1202 = vmatprep.mubr.bf16.mxu0 %v660
        %1203 = vmatmul.mubr.bf16.gmra.mrb[0].mxu0 %v659
        %v1204 = vpop.f32.mrb[0].mxu0
        %v1205 = vadd.f32 %v1044, %v1204
        %v1206 = vpop.f32.mrb[0].mxu0
        %v1207 = vpop.f32.mrb[0].mxu0
        %v1208 = vadd.f32 %v1047, %v1207
        %v1209 = vpop.f32.mrb[0].mxu0
        %1210 = vmatprep.mubr.bf16.mxu0 %v664
        %1211 = vmatmul.mubr.bf16.gmra.mrb[0].mxu0 %v663
        %v1212 = vpop.f32.mrb[0].mxu0
        %v1213 = vadd.f32 %v1052, %v1212
        %v1214 = vpop.f32.mrb[0].mxu0
        %v1215 = vpop.f32.mrb[0].mxu0
        %v1216 = vadd.f32 %v1055, %v1215
        %v1217 = vpop.f32.mrb[0].mxu0
        %1218 = vmatprep.mubr.bf16.mxu0 %v668
        %1219 = vmatmul.mubr.bf16.gmra.mrb[0].mxu0 %v667
        %v1220 = vpop.f32.mrb[0].mxu0
        %v1221 = vadd.f32 %v1060, %v1220
        %v1222 = vpop.f32.mrb[0].mxu0
        %v1223 = vpop.f32.mrb[0].mxu0
        %v1224 = vadd.f32 %v1063, %v1223
        %v1225 = vpop.f32.mrb[0].mxu0
        %1226 = vmatprep.mubr.bf16.mxu0 %v672
        %1227 = vmatmul.mubr.bf16.gmra.mrb[0].mxu0 %v671
        %v1228 = vpop.f32.mrb[0].mxu0
        %v1229 = vadd.f32 %v1068, %v1228
        %v1230 = vpop.f32.mrb[0].mxu0
        %v1231 = vpop.f32.mrb[0].mxu0
        %v1232 = vadd.f32 %v1071, %v1231
        %v1233 = vpop.f32.mrb[0].mxu0
        %1234 = vmatprep.mubr.bf16.mxu0 %v676
        %1235 = vmatmul.mubr.bf16.gmra.mrb[0].mxu0 %v675
        %v1236 = vpop.f32.mrb[0].mxu0
        %v1237 = vadd.f32 %v1076, %v1236
        %v1238 = vpop.f32.mrb[0].mxu0
        %v1239 = vpop.f32.mrb[0].mxu0
        %v1240 = vadd.f32 %v1079, %v1239
        %v1241 = vpop.f32.mrb[0].mxu0
        %1242 = vmatprep.mubr.bf16.mxu0 %v680
        %1243 = vmatmul.mubr.bf16.gmra.mrb[0].mxu0 %v679
        %v1244 = vpop.f32.mrb[0].mxu0
        %v1245 = vadd.f32 %v1084, %v1244
        %v1246 = vpop.f32.mrb[0].mxu0
        %v1247 = vpop.f32.mrb[0].mxu0
        %v1248 = vadd.f32 %v1087, %v1247
        %v1249 = vpop.f32.mrb[0].mxu0
        %1250 = vmatprep.mubr.bf16.mxu0 %v684
        %1251 = vmatmul.mubr.bf16.gmra.mrb[0].mxu0 %v683
        %v1252 = vpop.f32.mrb[0].mxu0
        %v1253 = vadd.f32 %v1092, %v1252
        %v1254 = vpop.f32.mrb[0].mxu0
        %v1255 = vpop.f32.mrb[0].mxu0
        %v1256 = vadd.f32 %v1095, %v1255
        %v1257 = vpop.f32.mrb[0].mxu0
        %1258 = vmatprep.mubr.bf16.mxu0 %v688
        %1259 = vmatmul.mubr.bf16.gmra.mrb[0].mxu0 %v687
        %v1260 = vpop.f32.mrb[0].mxu0
        %v1261 = vadd.f32 %v1100, %v1260
        %v1262 = vpop.f32.mrb[0].mxu0
        %v1263 = vpop.f32.mrb[0].mxu0
        %v1264 = vadd.f32 %v1103, %v1263
        %v1265 = vpop.f32.mrb[0].mxu0
        %1266 = vdwg.mxu0
        %v1267 = vadd.f32 %v273, %v1141
        %v1268 = vadd.f32 %v274, %v1144
        %v1269 = vadd.f32 %v275, %v1149
        %v1270 = vadd.f32 %v276, %v1152
        %v1271 = vadd.f32 %v277, %v1157
        %v1272 = vadd.f32 %v278, %v1160
        %v1273 = vadd.f32 %v279, %v1165
        %v1274 = vadd.f32 %v280, %v1168
        %v1275 = vadd.f32 %v281, %v1173
        %v1276 = vadd.f32 %v282, %v1176
        %v1277 = vadd.f32 %v283, %v1181
        %v1278 = vadd.f32 %v284, %v1184
        %v1279 = vadd.f32 %v285, %v1189
        %v1280 = vadd.f32 %v286, %v1192
        %v1281 = vadd.f32 %v287, %v1197
        %v1282 = vadd.f32 %v288, %v1200
        %v1283 = vadd.f32 %v289, %v1205
        %v1284 = vadd.f32 %v290, %v1208
        %v1285 = vadd.f32 %v291, %v1213
        %v1286 = vadd.f32 %v292, %v1216
        %v1287 = vadd.f32 %v293, %v1221
        %v1288 = vadd.f32 %v294, %v1224
        %v1289 = vadd.f32 %v295, %v1229
        %v1290 = vadd.f32 %v296, %v1232
        %v1291 = vadd.f32 %v297, %v1237
        %v1292 = vadd.f32 %v298, %v1240
        %v1293 = vadd.f32 %v299, %v1245
        %v1294 = vadd.f32 %v300, %v1248
        %v1295 = vadd.f32 %v301, %v1253
        %v1296 = vadd.f32 %v302, %v1256
        %v1297 = vadd.f32 %v303, %v1261
        %v1298 = vadd.f32 %v304, %v1264
        %vm1299 = vcmask 130048
        %1300 = vst.msk [vmem:[#allocation2] sm:$0xff] %vm1299, %v1267
        %1301 = vst.msk [vmem:[#allocation2 + $0x8] sm:$0xff] %vm1299, %v1268
        %1302 = vst.msk [vmem:[#allocation2 + $0x10] sm:$0xff] %vm1299, %v1269
        %1303 = vst.msk [vmem:[#allocation2 + $0x18] sm:$0xff] %vm1299, %v1270
        %1304 = vst.msk [vmem:[#allocation2 + $0x20] sm:$0xff] %vm1299, %v1271
        %1305 = vst.msk [vmem:[#allocation2 + $0x28] sm:$0xff] %vm1299, %v1272
        %1306 = vst.msk [vmem:[#allocation2 + $0x30] sm:$0xff] %vm1299, %v1273
        %1307 = vst.msk [vmem:[#allocation2 + $0x38] sm:$0xff] %vm1299, %v1274
        %1308 = vst.msk [vmem:[#allocation2 + $0x40] sm:$0xff] %vm1299, %v1275
        %1309 = vst.msk [vmem:[#allocation2 + $0x48] sm:$0xff] %vm1299, %v1276
        %1310 = vst.msk [vmem:[#allocation2 + $0x50] sm:$0xff] %vm1299, %v1277
        %1311 = vst.msk [vmem:[#allocation2 + $0x58] sm:$0xff] %vm1299, %v1278
        %1312 = vst.msk [vmem:[#allocation2 + $0x60] sm:$0xff] %vm1299, %v1279
        %1313 = vst.msk [vmem:[#allocation2 + $0x68] sm:$0xff] %vm1299, %v1280
        %1314 = vst.msk [vmem:[#allocation2 + $0x70] sm:$0xff] %vm1299, %v1281
        %1315 = vst.msk [vmem:[#allocation2 + $0x78] sm:$0xff] %vm1299, %v1282
        %1316 = vst.msk [vmem:[#allocation2 + $0x80] sm:$0xff] %vm1299, %v1283
        %1317 = vst.msk [vmem:[#allocation2 + $0x88] sm:$0xff] %vm1299, %v1284
        %1318 = vst.msk [vmem:[#allocation2 + $0x90] sm:$0xff] %vm1299, %v1285
        %1319 = vst.msk [vmem:[#allocation2 + $0x98] sm:$0xff] %vm1299, %v1286
        %1320 = vst.msk [vmem:[#allocation2 + $0xa0] sm:$0xff] %vm1299, %v1287
        %1321 = vst.msk [vmem:[#allocation2 + $0xa8] sm:$0xff] %vm1299, %v1288
        %1322 = vst.msk [vmem:[#allocation2 + $0xb0] sm:$0xff] %vm1299, %v1289
        %1323 = vst.msk [vmem:[#allocation2 + $0xb8] sm:$0xff] %vm1299, %v1290
        %1324 = vst.msk [vmem:[#allocation2 + $0xc0] sm:$0xff] %vm1299, %v1291
        %1325 = vst.msk [vmem:[#allocation2 + $0xc8] sm:$0xff] %vm1299, %v1292
        %1326 = vst.msk [vmem:[#allocation2 + $0xd0] sm:$0xff] %vm1299, %v1293
        %1327 = vst.msk [vmem:[#allocation2 + $0xd8] sm:$0xff] %vm1299, %v1294
        %1328 = vst.msk [vmem:[#allocation2 + $0xe0] sm:$0xff] %vm1299, %v1295
        %1329 = vst.msk [vmem:[#allocation2 + $0xe8] sm:$0xff] %vm1299, %v1296
        %1330 = vst.msk [vmem:[#allocation2 + $0xf0] sm:$0xff] %vm1299, %v1297
        %1331 = vst.msk [vmem:[#allocation2 + $0xf8] sm:$0xff] %vm1299, %v1298
        // Predicated region
        $region41: #{gcn_net_forward.2} parent=31 // pred_check
          %p1332 = pneg %p236
        $region42: #{gcn_net_forward.2} parent=31 // pred_check_branch
          %1334 = sbr.rel (%p1332) target = $region44
        $region43: #{gcn_net_forward.2} parent=31 // pred_region
          %v1335 = vld [vmem:[#allocation2] sm:$0xff]
          %v1336 = vld [vmem:[#allocation2 + $0x8] sm:$0xff]
          %v1337 = vld [vmem:[#allocation2 + $0x10] sm:$0xff]
          %v1338 = vld [vmem:[#allocation2 + $0x18] sm:$0xff]
          %v1339 = vld [vmem:[#allocation2 + $0x20] sm:$0xff]
          %v1340 = vld [vmem:[#allocation2 + $0x28] sm:$0xff]
          %v1341 = vld [vmem:[#allocation2 + $0x30] sm:$0xff]
          %v1342 = vld [vmem:[#allocation2 + $0x38] sm:$0xff]
          %v1343 = vld [vmem:[#allocation2 + $0x40] sm:$0xff]
          %v1344 = vld [vmem:[#allocation2 + $0x48] sm:$0xff]
          %v1345 = vld [vmem:[#allocation2 + $0x50] sm:$0xff]
          %v1346 = vld [vmem:[#allocation2 + $0x58] sm:$0xff]
          %v1347 = vld [vmem:[#allocation2 + $0x60] sm:$0xff]
          %v1348 = vld [vmem:[#allocation2 + $0x68] sm:$0xff]
          %v1349 = vld [vmem:[#allocation2 + $0x70] sm:$0xff]
          %v1350 = vld [vmem:[#allocation2 + $0x78] sm:$0xff]
          %v1351 = vld [vmem:[#allocation2 + $0x80] sm:$0xff]
          %v1352 = vld [vmem:[#allocation2 + $0x88] sm:$0xff]
          %v1353 = vld [vmem:[#allocation2 + $0x90] sm:$0xff]
          %v1354 = vld [vmem:[#allocation2 + $0x98] sm:$0xff]
          %v1355 = vld [vmem:[#allocation2 + $0xa0] sm:$0xff]
          %v1356 = vld [vmem:[#allocation2 + $0xa8] sm:$0xff]
          %v1357 = vld [vmem:[#allocation2 + $0xb0] sm:$0xff]
          %v1358 = vld [vmem:[#allocation2 + $0xb8] sm:$0xff]
          %v1359 = vld [vmem:[#allocation2 + $0xc0] sm:$0xff]
          %v1360 = vld [vmem:[#allocation2 + $0xc8] sm:$0xff]
          %v1361 = vld [vmem:[#allocation2 + $0xd0] sm:$0xff]
          %v1362 = vld [vmem:[#allocation2 + $0xd8] sm:$0xff]
          %v1363 = vld [vmem:[#allocation2 + $0xe0] sm:$0xff]
          %v1364 = vld [vmem:[#allocation2 + $0xe8] sm:$0xff]
          %v1365 = vld [vmem:[#allocation2 + $0xf0] sm:$0xff]
          %v1366 = vld [vmem:[#allocation2 + $0xf8] sm:$0xff]
          %v1367 = vld [vmem:[%s2] sm:$0xff]
          %v1368 = vld [vmem:[%s2 + $0x8] sm:$0xff]
          %v1369 = vld [vmem:[%s2 + $0x10] sm:$0xff]
          %v1370 = vld [vmem:[%s2 + $0x18] sm:$0xff]
          %v1372 = vsel %vm1299, %v1335, 0
          %v1375 = vsel %vm1299, %v1336, 0
          %v1378 = vsel %vm1299, %v1337, 0
          %v1381 = vsel %vm1299, %v1338, 0
          %v1384 = vsel %vm1299, %v1339, 0
          %v1387 = vsel %vm1299, %v1340, 0
          %v1390 = vsel %vm1299, %v1341, 0
          %v1393 = vsel %vm1299, %v1342, 0
          %v1396 = vsel %vm1299, %v1343, 0
          %v1399 = vsel %vm1299, %v1344, 0
          %v1402 = vsel %vm1299, %v1345, 0
          %v1405 = vsel %vm1299, %v1346, 0
          %v1408 = vsel %vm1299, %v1347, 0
          %v1411 = vsel %vm1299, %v1348, 0
          %v1414 = vsel %vm1299, %v1349, 0
          %v1417 = vsel %vm1299, %v1350, 0
          %v1420 = vsel %vm1299, %v1351, 0
          %v1423 = vsel %vm1299, %v1352, 0
          %v1426 = vsel %vm1299, %v1353, 0
          %v1429 = vsel %vm1299, %v1354, 0
          %v1432 = vsel %vm1299, %v1355, 0
          %v1435 = vsel %vm1299, %v1356, 0
          %v1438 = vsel %vm1299, %v1357, 0
          %v1441 = vsel %vm1299, %v1358, 0
          %v1444 = vsel %vm1299, %v1359, 0
          %v1447 = vsel %vm1299, %v1360, 0
          %v1450 = vsel %vm1299, %v1361, 0
          %v1453 = vsel %vm1299, %v1362, 0
          %v1456 = vsel %vm1299, %v1363, 0
          %v1459 = vsel %vm1299, %v1364, 0
          %v1462 = vsel %vm1299, %v1365, 0
          %v1465 = vsel %vm1299, %v1366, 0
          %1467 = vmatprep.subr.mxu0 %v1368
          %1468 = vmatpush1.msra.mxu0 %v1367
          %1469 = vmatprep.subr.mxu0 %v1370
          %1470 = vmatpush1.msra.mxu0 %v1369
          %1471 = vmatprep.subr.mxu0 0.0
          %1472 = vmatpush1.msra.mxu0 0.0
          %1473 = vmatprep.subr.mxu0 0.0
          %1474 = vmatpush1.msra.mxu0 0.0
          %1475 = vmatprep.subr.mxu0 0.0
          %1476 = vmatpush1.msra.mxu0 0.0
          %1477 = vmatprep.subr.mxu0 0.0
          %1478 = vmatpush1.msra.mxu0 0.0
          %1479 = vmatprep.subr.mxu0 0.0
          %1480 = vmatpush1.msra.mxu0 0.0
          %1481 = vmatprep.subr.mxu0 0.0
          %1482 = vmatpush1.msra.mxu0 0.0
          %1483 = vmatprep.subr.mxu0 0.0
          %1484 = vmatpush1.msra.mxu0 0.0
          %1485 = vmatprep.subr.mxu0 0.0
          %1486 = vmatpush1.msra.mxu0 0.0
          %1487 = vmatprep.subr.mxu0 0.0
          %1488 = vmatpush1.msra.mxu0 0.0
          %1489 = vmatprep.subr.mxu0 0.0
          %1490 = vmatpush1.msra.mxu0 0.0
          %1491 = vmatprep.subr.mxu0 0.0
          %1492 = vmatpush1.msra.mxu0 0.0
          %1493 = vmatprep.subr.mxu0 0.0
          %1494 = vmatpush1.msra.mxu0 0.0
          %1495 = vmatprep.subr.mxu0 0.0
          %1496 = vmatpush1.msra.mxu0 0.0
          %1497 = vmatprep.subr.mxu0 0.0
          %1498 = vmatpush1.msra.mxu0 0.0
          %1499 = vmatprep.subr.mxu0 0.0
          %1500 = vmatpush1.msra.mxu0 0.0
          %1501 = vmatprep.subr.mxu0 0.0
          %1502 = vmatpush1.msra.mxu0 0.0
          %1503 = vmatprep.subr.mxu0 0.0
          %1504 = vmatpush1.msra.mxu0 0.0
          %1505 = vmatprep.subr.mxu0 0.0
          %1506 = vmatpush1.msra.mxu0 0.0
          %1507 = vmatprep.subr.mxu0 0.0
          %1508 = vmatpush1.msra.mxu0 0.0
          %1509 = vmatprep.subr.mxu0 0.0
          %1510 = vmatpush1.msra.mxu0 0.0
          %1511 = vmatprep.subr.mxu0 0.0
          %1512 = vmatpush1.msra.mxu0 0.0
          %1513 = vmatprep.subr.mxu0 0.0
          %1514 = vmatpush1.msra.mxu0 0.0
          %1515 = vmatprep.subr.mxu0 0.0
          %1516 = vmatpush1.msra.mxu0 0.0
          %1517 = vmatprep.subr.mxu0 0.0
          %1518 = vmatpush1.msra.mxu0 0.0
          %1519 = vmatprep.subr.mxu0 0.0
          %1520 = vmatpush1.msra.mxu0 0.0
          %1521 = vmatprep.subr.mxu0 0.0
          %1522 = vmatpush1.msra.mxu0 0.0
          %1523 = vmatprep.subr.mxu0 0.0
          %1524 = vmatpush1.msra.mxu0 0.0
          %1525 = vmatprep.subr.mxu0 0.0
          %1526 = vmatpush1.msra.mxu0 0.0
          %1527 = vmatprep.subr.mxu0 0.0
          %1528 = vmatpush1.msra.mxu0 0.0
          %1529 = vmatprep.subr.mxu0 0.0
          %1530 = vmatpush1.msra.mxu0 0.0
          %1531 = vmatprep.mubr.f32.mxu0 0.0
          %1532 = vmatmul.mubr.f32.gmra.mrb[0].mxu0 %v1372
          %v1533 = vpop.f32.mrb[0].mxu0
          %v1534 = vadd.f32 0.0, %v1533
          %v1535 = vpop.f32.mrb[0].mxu0
          %v1536 = vadd.f32 0.0, %v1535
          %1537 = vmatprep.mubr.f32.mxu0 0.0
          %1538 = vmatmul.mubr.f32.gmra.mrb[0].mxu0 %v1375
          %v1539 = vpop.f32.mrb[0].mxu0
          %v1540 = vadd.f32 0.0, %v1539
          %v1541 = vpop.f32.mrb[0].mxu0
          %v1542 = vadd.f32 0.0, %v1541
          %1543 = vmatprep.mubr.f32.mxu0 0.0
          %1544 = vmatmul.mubr.f32.gmra.mrb[0].mxu0 %v1378
          %v1545 = vpop.f32.mrb[0].mxu0
          %v1546 = vadd.f32 0.0, %v1545
          %v1547 = vpop.f32.mrb[0].mxu0
          %v1548 = vadd.f32 0.0, %v1547
          %1549 = vmatprep.mubr.f32.mxu0 0.0
          %1550 = vmatmul.mubr.f32.gmra.mrb[0].mxu0 %v1381
          %v1551 = vpop.f32.mrb[0].mxu0
          %v1552 = vadd.f32 0.0, %v1551
          %v1553 = vpop.f32.mrb[0].mxu0
          %v1554 = vadd.f32 0.0, %v1553
          %1555 = vmatprep.mubr.f32.mxu0 0.0
          %1556 = vmatmul.mubr.f32.gmra.mrb[0].mxu0 %v1384
          %v1557 = vpop.f32.mrb[0].mxu0
          %v1558 = vadd.f32 0.0, %v1557
          %v1559 = vpop.f32.mrb[0].mxu0
          %v1560 = vadd.f32 0.0, %v1559
          %1561 = vmatprep.mubr.f32.mxu0 0.0
          %1562 = vmatmul.mubr.f32.gmra.mrb[0].mxu0 %v1387
          %v1563 = vpop.f32.mrb[0].mxu0
          %v1564 = vadd.f32 0.0, %v1563
          %v1565 = vpop.f32.mrb[0].mxu0
          %v1566 = vadd.f32 0.0, %v1565
          %1567 = vmatprep.mubr.f32.mxu0 0.0
          %1568 = vmatmul.mubr.f32.gmra.mrb[0].mxu0 %v1390
          %v1569 = vpop.f32.mrb[0].mxu0
          %v1570 = vadd.f32 0.0, %v1569
          %v1571 = vpop.f32.mrb[0].mxu0
          %v1572 = vadd.f32 0.0, %v1571
          %1573 = vmatprep.mubr.f32.mxu0 0.0
          %1574 = vmatmul.mubr.f32.gmra.mrb[0].mxu0 %v1393
          %v1575 = vpop.f32.mrb[0].mxu0
          %v1576 = vadd.f32 0.0, %v1575
          %v1577 = vpop.f32.mrb[0].mxu0
          %v1578 = vadd.f32 0.0, %v1577
          %1579 = vmatprep.mubr.f32.mxu0 0.0
          %1580 = vmatmul.mubr.f32.gmra.mrb[0].mxu0 %v1396
          %v1581 = vpop.f32.mrb[0].mxu0
          %v1582 = vadd.f32 0.0, %v1581
          %v1583 = vpop.f32.mrb[0].mxu0
          %v1584 = vadd.f32 0.0, %v1583
          %1585 = vmatprep.mubr.f32.mxu0 0.0
          %1586 = vmatmul.mubr.f32.gmra.mrb[0].mxu0 %v1399
          %v1587 = vpop.f32.mrb[0].mxu0
          %v1588 = vadd.f32 0.0, %v1587
          %v1589 = vpop.f32.mrb[0].mxu0
          %v1590 = vadd.f32 0.0, %v1589
          %1591 = vmatprep.mubr.f32.mxu0 0.0
          %1592 = vmatmul.mubr.f32.gmra.mrb[0].mxu0 %v1402
          %v1593 = vpop.f32.mrb[0].mxu0
          %v1594 = vadd.f32 0.0, %v1593
          %v1595 = vpop.f32.mrb[0].mxu0
          %v1596 = vadd.f32 0.0, %v1595
          %1597 = vmatprep.mubr.f32.mxu0 0.0
          %1598 = vmatmul.mubr.f32.gmra.mrb[0].mxu0 %v1405
          %v1599 = vpop.f32.mrb[0].mxu0
          %v1600 = vadd.f32 0.0, %v1599
          %v1601 = vpop.f32.mrb[0].mxu0
          %v1602 = vadd.f32 0.0, %v1601
          %1603 = vmatprep.mubr.f32.mxu0 0.0
          %1604 = vmatmul.mubr.f32.gmra.mrb[0].mxu0 %v1408
          %v1605 = vpop.f32.mrb[0].mxu0
          %v1606 = vadd.f32 0.0, %v1605
          %v1607 = vpop.f32.mrb[0].mxu0
          %v1608 = vadd.f32 0.0, %v1607
          %1609 = vmatprep.mubr.f32.mxu0 0.0
          %1610 = vmatmul.mubr.f32.gmra.mrb[0].mxu0 %v1411
          %v1611 = vpop.f32.mrb[0].mxu0
          %v1612 = vadd.f32 0.0, %v1611
          %v1613 = vpop.f32.mrb[0].mxu0
          %v1614 = vadd.f32 0.0, %v1613
          %1615 = vmatprep.mubr.f32.mxu0 0.0
          %1616 = vmatmul.mubr.f32.gmra.mrb[0].mxu0 %v1414
          %v1617 = vpop.f32.mrb[0].mxu0
          %v1618 = vadd.f32 0.0, %v1617
          %v1619 = vpop.f32.mrb[0].mxu0
          %v1620 = vadd.f32 0.0, %v1619
          %1621 = vmatprep.mubr.f32.mxu0 0.0
          %1622 = vmatmul.mubr.f32.gmra.mrb[0].mxu0 %v1417
          %v1623 = vpop.f32.mrb[0].mxu0
          %v1624 = vadd.f32 0.0, %v1623
          %v1625 = vpop.f32.mrb[0].mxu0
          %v1626 = vadd.f32 0.0, %v1625
          %1627 = vmatprep.mubr.f32.mxu0 0.0
          %1628 = vmatmul.mubr.f32.gmra.mrb[0].mxu0 %v1420
          %v1629 = vpop.f32.mrb[0].mxu0
          %v1630 = vadd.f32 0.0, %v1629
          %v1631 = vpop.f32.mrb[0].mxu0
          %v1632 = vadd.f32 0.0, %v1631
          %1633 = vmatprep.mubr.f32.mxu0 0.0
          %1634 = vmatmul.mubr.f32.gmra.mrb[0].mxu0 %v1423
          %v1635 = vpop.f32.mrb[0].mxu0
          %v1636 = vadd.f32 0.0, %v1635
          %v1637 = vpop.f32.mrb[0].mxu0
          %v1638 = vadd.f32 0.0, %v1637
          %1639 = vmatprep.mubr.f32.mxu0 0.0
          %1640 = vmatmul.mubr.f32.gmra.mrb[0].mxu0 %v1426
          %v1641 = vpop.f32.mrb[0].mxu0
          %v1642 = vadd.f32 0.0, %v1641
          %v1643 = vpop.f32.mrb[0].mxu0
          %v1644 = vadd.f32 0.0, %v1643
          %1645 = vmatprep.mubr.f32.mxu0 0.0
          %1646 = vmatmul.mubr.f32.gmra.mrb[0].mxu0 %v1429
          %v1647 = vpop.f32.mrb[0].mxu0
          %v1648 = vadd.f32 0.0, %v1647
          %v1649 = vpop.f32.mrb[0].mxu0
          %v1650 = vadd.f32 0.0, %v1649
          %1651 = vmatprep.mubr.f32.mxu0 0.0
          %1652 = vmatmul.mubr.f32.gmra.mrb[0].mxu0 %v1432
          %v1653 = vpop.f32.mrb[0].mxu0
          %v1654 = vadd.f32 0.0, %v1653
          %v1655 = vpop.f32.mrb[0].mxu0
          %v1656 = vadd.f32 0.0, %v1655
          %1657 = vmatprep.mubr.f32.mxu0 0.0
          %1658 = vmatmul.mubr.f32.gmra.mrb[0].mxu0 %v1435
          %v1659 = vpop.f32.mrb[0].mxu0
          %v1660 = vadd.f32 0.0, %v1659
          %v1661 = vpop.f32.mrb[0].mxu0
          %v1662 = vadd.f32 0.0, %v1661
          %1663 = vmatprep.mubr.f32.mxu0 0.0
          %1664 = vmatmul.mubr.f32.gmra.mrb[0].mxu0 %v1438
          %v1665 = vpop.f32.mrb[0].mxu0
          %v1666 = vadd.f32 0.0, %v1665
          %v1667 = vpop.f32.mrb[0].mxu0
          %v1668 = vadd.f32 0.0, %v1667
          %1669 = vmatprep.mubr.f32.mxu0 0.0
          %1670 = vmatmul.mubr.f32.gmra.mrb[0].mxu0 %v1441
          %v1671 = vpop.f32.mrb[0].mxu0
          %v1672 = vadd.f32 0.0, %v1671
          %v1673 = vpop.f32.mrb[0].mxu0
          %v1674 = vadd.f32 0.0, %v1673
          %1675 = vmatprep.mubr.f32.mxu0 0.0
          %1676 = vmatmul.mubr.f32.gmra.mrb[0].mxu0 %v1444
          %v1677 = vpop.f32.mrb[0].mxu0
          %v1678 = vadd.f32 0.0, %v1677
          %v1679 = vpop.f32.mrb[0].mxu0
          %v1680 = vadd.f32 0.0, %v1679
          %1681 = vmatprep.mubr.f32.mxu0 0.0
          %1682 = vmatmul.mubr.f32.gmra.mrb[0].mxu0 %v1447
          %v1683 = vpop.f32.mrb[0].mxu0
          %v1684 = vadd.f32 0.0, %v1683
          %v1685 = vpop.f32.mrb[0].mxu0
          %v1686 = vadd.f32 0.0, %v1685
          %1687 = vmatprep.mubr.f32.mxu0 0.0
          %1688 = vmatmul.mubr.f32.gmra.mrb[0].mxu0 %v1450
          %v1689 = vpop.f32.mrb[0].mxu0
          %v1690 = vadd.f32 0.0, %v1689
          %v1691 = vpop.f32.mrb[0].mxu0
          %v1692 = vadd.f32 0.0, %v1691
          %1693 = vmatprep.mubr.f32.mxu0 0.0
          %1694 = vmatmul.mubr.f32.gmra.mrb[0].mxu0 %v1453
          %v1695 = vpop.f32.mrb[0].mxu0
          %v1696 = vadd.f32 0.0, %v1695
          %v1697 = vpop.f32.mrb[0].mxu0
          %v1698 = vadd.f32 0.0, %v1697
          %1699 = vmatprep.mubr.f32.mxu0 0.0
          %1700 = vmatmul.mubr.f32.gmra.mrb[0].mxu0 %v1456
          %v1701 = vpop.f32.mrb[0].mxu0
          %v1702 = vadd.f32 0.0, %v1701
          %v1703 = vpop.f32.mrb[0].mxu0
          %v1704 = vadd.f32 0.0, %v1703
          %1705 = vmatprep.mubr.f32.mxu0 0.0
          %1706 = vmatmul.mubr.f32.gmra.mrb[0].mxu0 %v1459
          %v1707 = vpop.f32.mrb[0].mxu0
          %v1708 = vadd.f32 0.0, %v1707
          %v1709 = vpop.f32.mrb[0].mxu0
          %v1710 = vadd.f32 0.0, %v1709
          %1711 = vmatprep.mubr.f32.mxu0 0.0
          %1712 = vmatmul.mubr.f32.gmra.mrb[0].mxu0 %v1462
          %v1713 = vpop.f32.mrb[0].mxu0
          %v1714 = vadd.f32 0.0, %v1713
          %v1715 = vpop.f32.mrb[0].mxu0
          %v1716 = vadd.f32 0.0, %v1715
          %1717 = vmatprep.mubr.f32.mxu0 0.0
          %1718 = vmatmul.mubr.f32.gmra.mrb[0].mxu0 %v1465
          %v1719 = vpop.f32.mrb[0].mxu0
          %v1720 = vadd.f32 0.0, %v1719
          %v1721 = vpop.f32.mrb[0].mxu0
          %v1722 = vadd.f32 0.0, %v1721
          %1723 = vdwg.mxu0
          %v1724 = vmax.f32 %v1534, 0.0
          %v1725 = vmax.f32 %v1536, 0.0
          %v1726 = vmax.f32 %v1540, 0.0
          %v1727 = vmax.f32 %v1542, 0.0
          %v1728 = vmax.f32 %v1546, 0.0
          %v1729 = vmax.f32 %v1548, 0.0
          %v1730 = vmax.f32 %v1552, 0.0
          %v1731 = vmax.f32 %v1554, 0.0
          %v1732 = vmax.f32 %v1558, 0.0
          %v1733 = vmax.f32 %v1560, 0.0
          %v1734 = vmax.f32 %v1564, 0.0
          %v1735 = vmax.f32 %v1566, 0.0
          %v1736 = vmax.f32 %v1570, 0.0
          %v1737 = vmax.f32 %v1572, 0.0
          %v1738 = vmax.f32 %v1576, 0.0
          %v1739 = vmax.f32 %v1578, 0.0
          %v1740 = vmax.f32 %v1582, 0.0
          %v1741 = vmax.f32 %v1584, 0.0
          %v1742 = vmax.f32 %v1588, 0.0
          %v1743 = vmax.f32 %v1590, 0.0
          %v1744 = vmax.f32 %v1594, 0.0
          %v1745 = vmax.f32 %v1596, 0.0
          %v1746 = vmax.f32 %v1600, 0.0
          %v1747 = vmax.f32 %v1602, 0.0
          %v1748 = vmax.f32 %v1606, 0.0
          %v1749 = vmax.f32 %v1608, 0.0
          %v1750 = vmax.f32 %v1612, 0.0
          %v1751 = vmax.f32 %v1614, 0.0
          %v1752 = vmax.f32 %v1618, 0.0
          %v1753 = vmax.f32 %v1620, 0.0
          %v1754 = vmax.f32 %v1624, 0.0
          %v1755 = vmax.f32 %v1626, 0.0
          %v1756 = vmax.f32 %v1630, 0.0
          %v1757 = vmax.f32 %v1632, 0.0
          %v1758 = vmax.f32 %v1636, 0.0
          %v1759 = vmax.f32 %v1638, 0.0
          %v1760 = vmax.f32 %v1642, 0.0
          %v1761 = vmax.f32 %v1644, 0.0
          %v1762 = vmax.f32 %v1648, 0.0
          %v1763 = vmax.f32 %v1650, 0.0
          %v1764 = vmax.f32 %v1654, 0.0
          %v1765 = vmax.f32 %v1656, 0.0
          %v1766 = vmax.f32 %v1660, 0.0
          %v1767 = vmax.f32 %v1662, 0.0
          %v1768 = vmax.f32 %v1666, 0.0
          %v1769 = vmax.f32 %v1668, 0.0
          %v1770 = vmax.f32 %v1672, 0.0
          %v1771 = vmax.f32 %v1674, 0.0
          %v1772 = vmax.f32 %v1678, 0.0
          %v1773 = vmax.f32 %v1680, 0.0
          %v1774 = vmax.f32 %v1684, 0.0
          %v1775 = vmax.f32 %v1686, 0.0
          %v1776 = vmax.f32 %v1690, 0.0
          %v1777 = vmax.f32 %v1692, 0.0
          %v1778 = vmax.f32 %v1696, 0.0
          %v1779 = vmax.f32 %v1698, 0.0
          %v1780 = vmax.f32 %v1702, 0.0
          %v1781 = vmax.f32 %v1704, 0.0
          %v1782 = vmax.f32 %v1708, 0.0
          %v1783 = vmax.f32 %v1710, 0.0
          %v1784 = vmax.f32 %v1714, 0.0
          %v1785 = vmax.f32 %v1716, 0.0
          %v1786 = vmax.f32 %v1720, 0.0
          %v1787 = vmax.f32 %v1722, 0.0
          %v1788 = vpack.c.bf16 %v1726, %v1724
          %v1789 = vpack.c.bf16 %v1727, %v1725
          %v1790 = vpack.c.bf16 %v1730, %v1728
          %v1791 = vpack.c.bf16 %v1731, %v1729
          %v1792 = vpack.c.bf16 %v1734, %v1732
          %v1793 = vpack.c.bf16 %v1735, %v1733
          %v1794 = vpack.c.bf16 %v1738, %v1736
          %v1795 = vpack.c.bf16 %v1739, %v1737
          %v1796 = vpack.c.bf16 %v1742, %v1740
          %v1797 = vpack.c.bf16 %v1743, %v1741
          %v1798 = vpack.c.bf16 %v1746, %v1744
          %v1799 = vpack.c.bf16 %v1747, %v1745
          %v1800 = vpack.c.bf16 %v1750, %v1748
          %v1801 = vpack.c.bf16 %v1751, %v1749
          %v1802 = vpack.c.bf16 %v1754, %v1752
          %v1803 = vpack.c.bf16 %v1755, %v1753
          %v1804 = vpack.c.bf16 %v1758, %v1756
          %v1805 = vpack.c.bf16 %v1759, %v1757
          %v1806 = vpack.c.bf16 %v1762, %v1760
          %v1807 = vpack.c.bf16 %v1763, %v1761
          %v1808 = vpack.c.bf16 %v1766, %v1764
          %v1809 = vpack.c.bf16 %v1767, %v1765
          %v1810 = vpack.c.bf16 %v1770, %v1768
          %v1811 = vpack.c.bf16 %v1771, %v1769
          %v1812 = vpack.c.bf16 %v1774, %v1772
          %v1813 = vpack.c.bf16 %v1775, %v1773
          %v1814 = vpack.c.bf16 %v1778, %v1776
          %v1815 = vpack.c.bf16 %v1779, %v1777
          %v1816 = vpack.c.bf16 %v1782, %v1780
          %v1817 = vpack.c.bf16 %v1783, %v1781
          %v1818 = vpack.c.bf16 %v1786, %v1784
          %v1819 = vpack.c.bf16 %v1787, %v1785
          %1820 = vst [vmem:[%s233] sm:$0xff] %v1788
          %1821 = vst [vmem:[%s233 + $0x8] sm:$0xff] %v1789
          %1822 = vst [vmem:[%s233 + $0x10] sm:$0xff] %v1790
          %1823 = vst [vmem:[%s233 + $0x18] sm:$0xff] %v1791
          %1824 = vst [vmem:[%s233 + $0x20] sm:$0xff] %v1792
          %1825 = vst [vmem:[%s233 + $0x28] sm:$0xff] %v1793
          %1826 = vst [vmem:[%s233 + $0x30] sm:$0xff] %v1794
          %1827 = vst [vmem:[%s233 + $0x38] sm:$0xff] %v1795
          %1828 = vst [vmem:[%s233 + $0x40] sm:$0xff] %v1796
          %1829 = vst [vmem:[%s233 + $0x48] sm:$0xff] %v1797
          %1830 = vst [vmem:[%s233 + $0x50] sm:$0xff] %v1798
          %1831 = vst [vmem:[%s233 + $0x58] sm:$0xff] %v1799
          %1832 = vst [vmem:[%s233 + $0x60] sm:$0xff] %v1800
          %1833 = vst [vmem:[%s233 + $0x68] sm:$0xff] %v1801
          %1834 = vst [vmem:[%s233 + $0x70] sm:$0xff] %v1802
          %1835 = vst [vmem:[%s233 + $0x78] sm:$0xff] %v1803
          %1836 = vst [vmem:[%s233 + $0x80] sm:$0xff] %v1804
          %1837 = vst [vmem:[%s233 + $0x88] sm:$0xff] %v1805
          %1838 = vst [vmem:[%s233 + $0x90] sm:$0xff] %v1806
          %1839 = vst [vmem:[%s233 + $0x98] sm:$0xff] %v1807
          %1840 = vst [vmem:[%s233 + $0xa0] sm:$0xff] %v1808
          %1841 = vst [vmem:[%s233 + $0xa8] sm:$0xff] %v1809
          %1842 = vst [vmem:[%s233 + $0xb0] sm:$0xff] %v1810
          %1843 = vst [vmem:[%s233 + $0xb8] sm:$0xff] %v1811
          %1844 = vst [vmem:[%s233 + $0xc0] sm:$0xff] %v1812
          %1845 = vst [vmem:[%s233 + $0xc8] sm:$0xff] %v1813
          %1846 = vst [vmem:[%s233 + $0xd0] sm:$0xff] %v1814
          %1847 = vst [vmem:[%s233 + $0xd8] sm:$0xff] %v1815
          %1848 = vst [vmem:[%s233 + $0xe0] sm:$0xff] %v1816
          %1849 = vst [vmem:[%s233 + $0xe8] sm:$0xff] %v1817
          %1850 = vst [vmem:[%s233 + $0xf0] sm:$0xff] %v1818
          %1851 = vst [vmem:[%s233 + $0xf8] sm:$0xff] %v1819
        $region44: #{gcn_net_forward.2} parent=31 // pred_fallthru
          _
        %s1852 = smul.u32 16, %s21
        %p1853 = scmp.lt.s32.totalorder %s1852, 31
        %s1854 = scalar_select %p1853, %s1852, 31
        %s1855 = smul.addr %s1854, 2
        %s1856 = smul.addr %s1855, 8
        %s1857 = scalar_lea.vmem %s3, %s1856
        // Predicated region
        $region45: #{gcn_net_forward.2} parent=31 // pred_check
          %p1858 = pneg %p122
        $region46: #{gcn_net_forward.2} parent=31 // pred_check_branch
          %1860 = sbr.rel (%p1858) target = $region48
        $region47: #{gcn_net_forward.2} parent=31 // pred_region
          %s1861 = smul.u32 16, %s21
        $region48: #{gcn_net_forward.2} parent=31 // pred_fallthru
          _
      $region32: #{gcn_net_forward.2} parent=5 // pred_fallthru
        _
      %p1862 = scmp.le.s32.totalorder 2, %s12
      // Predicated region
      $region49: #{gcn_net_forward.2} parent=5 // pred_check
        %p1863 = pneg %p1862
      $region50: #{gcn_net_forward.2} parent=5 // pred_check_branch
        %1865 = sbr.rel (%p1863) target = $region52
      $region51: #{gcn_net_forward.2} parent=5 // pred_region
        %s1866 = ssub.s32 %s12, 2
        // Predicated region
        $region53: #{gcn_net_forward.2} parent=51 // pred_check
          %p1867 = pneg %p128
        $region54: #{gcn_net_forward.2} parent=51 // pred_check_branch
          %1869 = sbr.rel (%p1867) target = $region56
        $region55: #{gcn_net_forward.2} parent=51 // pred_region
          %s1870 = smul.u32 16, %s23
          %p1871 = scmp.lt.s32.totalorder %s1870, 31
          %s1872 = scalar_select %p1871, %s1870, 31
          %s1873 = smul.addr %s1872, 2
          %s1874 = smul.addr %s1873, 8
          %s1875 = scalar_lea.vmem %s3, %s1874
        $region56: #{gcn_net_forward.2} parent=51 // pred_fallthru
          _
      $region52: #{gcn_net_forward.2} parent=5 // pred_fallthru
        _
    $region6: #{gcn_net_forward.2} parent=1 // loop_footer
      %s16 = sadd.s32 1, %s12
    $region7: #{gcn_net_forward.2} parent=1 // loop_footer_branch
      %11 = sbr.rel target = $region3
    $region8: #{gcn_net_forward.2} parent=1 // loop_exit
      _
    %1876 = vsyncpa [#allocation4], 1
    %s1877 = scalar_lea.sflag [#allocation4], 1
    %1878 = vsyncpa %s1877, 1

// kernel: gcn_net_forward.3
$region0: #{gcn_net_forward.3}
  #allocation0 [shape = 'u32[]', space=smem, size = 0x4, offset = 0x4, fixed_abs, tag = 'smem constant byte address 0x4 - core index']
  #allocation1 [shape = 'u32[144,128]{1,0:T(1,128)}', space=vmem, size = 0x12000, scoped, tag = 'internal scratch']
  #allocation2 [shape = 'f32[256,128]{1,0:T(8,128)}', space=vmem, size = 0x20000, scoped, tag = 'scratch operand']
  %s0 = inlined_call_operand.vmem [shape: bf16[512,512], index: 0, kind: input, shape index: {}]
  %s1 = inlined_call_operand.vmem [shape: bf16[512,128], index: 1, kind: input, shape index: {}]
  %s2 = inlined_call_operand.vmem [shape: f32[512,128], index: 2, kind: output, shape index: {}]
  %s3 = sld [smem:[#allocation0]]
  $region49: #{gcn_net_forward.3} parent=0
    _
  %s5 = ssub.s32 1, %s3
  %s6 = scalar_select 0, %s5, %s3
  loop: start=0, step=1, limit=4
  $region2: #{gcn_net_forward.3} parent=0 // loop_pre_header
    _
  $region3: #{gcn_net_forward.3} parent=0 // loop_header
    %s8 = sphi 0, %s12
    %p9 = scmp.ge.s32.totalorder %s8, 4
    %s15 = sphi 0, %s27
    %s16 = sphi 0, %s23
    %s17 = sphi 0, %s15
    %s18 = sphi 0, %s16
    %s19 = sphi 0, %s17
    %s20 = sphi 0, %s18
    %s32 = sphi 0, %s34
    %s35 = sphi 0, %s32
    %s36 = sphi 0, %s35
    %s52 = sphi 0, %s36
    %s58 = sphi 0, %s60
    %s61 = sphi 0, %s58
    %s62 = sphi 0, %s61
    %s78 = sphi 0, %s62
    %s84 = sphi 0, %s86
    %s87 = sphi 0, %s84
    %s88 = sphi 0, %s87
    %s104 = sphi 0, %s88
  $region4: #{gcn_net_forward.3} parent=0 // loop_header_branch
    %11 = sbr.rel (%p9) target = $region8
  $region5: #{gcn_net_forward.3} parent=0 // loop_body
    %s13 = ssub.s32 %s8, 1
    %s14 = ssub.s32 %s8, 2
    %s21 = sadd.s32 1, %s16
    %p22 = scmp.ge.s32.totalorder %s21, 1
    %s23 = scalar_select %p22, 0, %s21
    %s24 = sadd.s32 1, %s15
    %s25 = scalar_select %p22, %s24, %s15
    %p26 = scmp.ge.s32.totalorder %s25, 2
    %s27 = scalar_select %p26, 0, %s25
    %s28 = ssub.s32 %s15, %s27
    %s29 = ssub.s32 %s16, %s23
    %s30 = sor.u32 %s28, %s29
    %p31 = scmp.eq.s32.totalorder %s30, 0
    %s33 = sadd.s32 %s32, 1
    %s34 = scalar_select %p31, %s32, %s33
    %p37 = pneg %p31
    %p38 = scmp.eq.s32.totalorder %s8, 1
    %p39 = por %p37, %p38
    %p40 = scmp.ne.s32.totalorder %s32, %s35
    %p41 = scmp.eq.s32.totalorder %s8, 0
    %p42 = por %p40, %p41
    %p43 = scmp.ne.s32.totalorder %s32, %s35
    %p44 = scmp.eq.s32.totalorder %s13, 1
    %p45 = por %p43, %p44
    %p46 = scmp.ne.s32.totalorder %s35, %s36
    %p47 = scmp.eq.s32.totalorder %s13, 0
    %p48 = por %p46, %p47
    %p49 = scmp.ne.s32.totalorder %s35, %s36
    %p50 = scmp.eq.s32.totalorder %s14, 1
    %p51 = por %p49, %p50
    %p53 = scmp.ne.s32.totalorder %s36, %s52
    %p54 = scmp.eq.s32.totalorder %s14, 0
    %p55 = por %p53, %p54
    %s56 = ssub.s32 %s16, %s23
    %p57 = scmp.eq.s32.totalorder %s56, 0
    %s59 = sadd.s32 %s58, 1
    %s60 = scalar_select %p57, %s58, %s59
    %p63 = pneg %p57
    %p64 = scmp.eq.s32.totalorder %s8, 1
    %p65 = por %p63, %p64
    %p66 = scmp.ne.s32.totalorder %s58, %s61
    %p67 = scmp.eq.s32.totalorder %s8, 0
    %p68 = por %p66, %p67
    %p69 = scmp.ne.s32.totalorder %s58, %s61
    %p70 = scmp.eq.s32.totalorder %s13, 1
    %p71 = por %p69, %p70
    %p72 = scmp.ne.s32.totalorder %s61, %s62
    %p73 = scmp.eq.s32.totalorder %s13, 0
    %p74 = por %p72, %p73
    %p75 = scmp.ne.s32.totalorder %s61, %s62
    %p76 = scmp.eq.s32.totalorder %s14, 1
    %p77 = por %p75, %p76
    %p79 = scmp.ne.s32.totalorder %s62, %s78
    %p80 = scmp.eq.s32.totalorder %s14, 0
    %p81 = por %p79, %p80
    %s82 = ssub.s32 %s15, %s27
    %p83 = scmp.eq.s32.totalorder %s82, 0
    %s85 = sadd.s32 %s84, 1
    %s86 = scalar_select %p83, %s84, %s85
    %p89 = pneg %p83
    %p90 = scmp.eq.s32.totalorder %s8, 1
    %p91 = por %p89, %p90
    %p92 = scmp.ne.s32.totalorder %s84, %s87
    %p93 = scmp.eq.s32.totalorder %s8, 0
    %p94 = por %p92, %p93
    %p95 = scmp.ne.s32.totalorder %s84, %s87
    %p96 = scmp.eq.s32.totalorder %s13, 1
    %p97 = por %p95, %p96
    %p98 = scmp.ne.s32.totalorder %s87, %s88
    %p99 = scmp.eq.s32.totalorder %s13, 0
    %p100 = por %p98, %p99
    %p101 = scmp.ne.s32.totalorder %s87, %s88
    %p102 = scmp.eq.s32.totalorder %s14, 1
    %p103 = por %p101, %p102
    %p105 = scmp.ne.s32.totalorder %s88, %s104
    %p106 = scmp.eq.s32.totalorder %s14, 0
    %p107 = por %p105, %p106
    %p108 = scmp.le.s32.totalorder 1, %s8
    %p109 = scmp.lt.s32.totalorder %s8, 3
    %p110 = pnand %p108, %p109
    %p111 = pneg %p110
    // Predicated region
    $region9: #{gcn_net_forward.3} parent=5 // pred_check
      _
    $region10: #{gcn_net_forward.3} parent=5 // pred_check_branch
      %113 = sbr.rel (%p110) target = $region12
    $region11: #{gcn_net_forward.3} parent=5 // pred_region
      %s114 = ssub.s32 %s8, 1
      // Predicated region
      $region13: #{gcn_net_forward.3} parent=11 // pred_check
        %p115 = pneg %p74
      $region14: #{gcn_net_forward.3} parent=11 // pred_check_branch
        %117 = sbr.rel (%p115) target = $region16
      $region15: #{gcn_net_forward.3} parent=11 // pred_region
        %s118 = smul.u32 64, %s18
        %p119 = scmp.lt.s32.totalorder %s118, 63
        %s120 = scalar_select %p119, %s118, 63
        %s121 = smul.addr %s120, 4
        %s122 = scalar_lea.vmem %s1, %s121
        %s123 = smul.u32 64, %s18
      $region16: #{gcn_net_forward.3} parent=11 // pred_fallthru
        _
    $region12: #{gcn_net_forward.3} parent=5 // pred_fallthru
      _
    %p124 = scmp.lt.s32.totalorder %s8, 2
    // Predicated region
    $region17: #{gcn_net_forward.3} parent=5 // pred_check
      %p125 = pneg %p124
    $region18: #{gcn_net_forward.3} parent=5 // pred_check_branch
      %127 = sbr.rel (%p125) target = $region20
    $region19: #{gcn_net_forward.3} parent=5 // pred_region
      // Predicated region
      $region21: #{gcn_net_forward.3} parent=19 // pred_check
        %p128 = pneg %p42
      $region22: #{gcn_net_forward.3} parent=19 // pred_check_branch
        %130 = sbr.rel (%p128) target = $region24
      $region23: #{gcn_net_forward.3} parent=19 // pred_region
        %s131 = smul.u32 32, %s15
        %s132 = smul.u32 4, %s16
        %p133 = scmp.lt.s32.totalorder %s131, 63
        %s134 = scalar_select %p133, %s131, 63
        %p135 = scmp.lt.s32.totalorder %s132, 3
        %s136 = scalar_select %p135, %s132, 3
        %s137 = smul.addr %s134, 4
        %s138 = sadd.s32 %s136, %s137
        %s139 = smul.addr %s138, 4
        %s140 = scalar_lea.vmem %s0, %s139
        %s141 = smul.u32 32, %s15
        %s142 = smul.u32 4, %s16
      $region24: #{gcn_net_forward.3} parent=19 // pred_fallthru
        _
    $region20: #{gcn_net_forward.3} parent=5 // pred_fallthru
      _
    %p143 = scmp.le.s32.totalorder 1, %s8
    %p144 = scmp.lt.s32.totalorder %s8, 3
    %p145 = pnand %p143, %p144
    %p146 = pneg %p145
    // Predicated region
    $region25: #{gcn_net_forward.3} parent=5 // pred_check
      _
    $region26: #{gcn_net_forward.3} parent=5 // pred_check_branch
      %148 = sbr.rel (%p145) target = $region28
    $region27: #{gcn_net_forward.3} parent=5 // pred_region
      %s149 = ssub.s32 %s8, 1
      %s150 = smul.u32 32, %s17
      %s151 = smul.u32 4, %s18
      %p152 = scmp.lt.s32.totalorder %s150, 63
      %s153 = scalar_select %p152, %s150, 63
      %p154 = scmp.lt.s32.totalorder %s151, 3
      %s155 = scalar_select %p154, %s151, 3
      %s156 = smul.addr %s153, 4
      %s157 = sadd.s32 %s155, %s156
      %s158 = smul.addr %s157, 4
      %s159 = scalar_lea.vmem %s0, %s158
      %p160 = pneg %p48
      %p161 = pneg %p45
      %s162 = smul.u32 64, %s18
      %p163 = scmp.lt.s32.totalorder %s162, 63
      %s164 = scalar_select %p163, %s162, 63
      %s165 = smul.addr %s164, 4
      %s166 = scalar_lea.vmem %s1, %s165
      %p167 = pneg %p74
      %p168 = pneg %p71
      %p169 = pneg %p100
      %p170 = pneg %p97
      %s171 = smul.u32 32, %s17
      %p172 = scmp.lt.s32.totalorder %s171, 63
      %s173 = scalar_select %p172, %s171, 63
      %s174 = smul.addr %s173, 8
      %s175 = scalar_lea.vmem %s2, %s174
      %s176 = smul.u32 32, %s17
      %s177 = smul.u32 4, %s18
      %p178 = scmp.lt.s32.totalorder %s176, 63
      %s179 = scalar_select %p178, %s176, 63
      %p180 = scmp.lt.s32.totalorder %s177, 3
      %s181 = scalar_select %p180, %s177, 3
      %s182 = smul.addr %s179, 4
      %s183 = sadd.s32 %s181, %s182
      %s184 = smul.addr %s183, 4
      %s185 = scalar_lea.vmem %s0, %s184
      %s186 = smul.u32 32, %s17
      %s187 = smul.u32 4, %s18
      %s188 = smul.u32 64, %s18
      %p189 = scmp.lt.s32.totalorder %s188, 63
      %s190 = scalar_select %p189, %s188, 63
      %s191 = smul.addr %s190, 4
      %s192 = scalar_lea.vmem %s1, %s191
      %s193 = smul.u32 64, %s18
      %s194 = smul.u32 32, %s17
      %p195 = scmp.lt.s32.totalorder %s194, 63
      %s196 = scalar_select %p195, %s194, 63
      %s197 = smul.addr %s196, 8
      %s198 = scalar_lea.vmem %s2, %s197
      %s199 = smul.u32 32, %s17
      %p201 = scmp.eq.s32.totalorder %s18, 0
      // Predicated region
      $region29: #{gcn_net_forward.3} parent=27 // pred_check
        %p202 = pneg %p201
      $region30: #{gcn_net_forward.3} parent=27 // pred_check_branch
        %204 = sbr.rel (%p202) target = $region32
      $region31: #{gcn_net_forward.3} parent=27 // pred_region
        %205 = vst [vmem:[#allocation2] sm:$0xff] 0.0
        %206 = vst [vmem:[#allocation2 + $0x8] sm:$0xff] 0.0
        %207 = vst [vmem:[#allocation2 + $0x10] sm:$0xff] 0.0
        %208 = vst [vmem:[#allocation2 + $0x18] sm:$0xff] 0.0
        %209 = vst [vmem:[#allocation2 + $0x20] sm:$0xff] 0.0
        %210 = vst [vmem:[#allocation2 + $0x28] sm:$0xff] 0.0
        %211 = vst [vmem:[#allocation2 + $0x30] sm:$0xff] 0.0
        %212 = vst [vmem:[#allocation2 + $0x38] sm:$0xff] 0.0
        %213 = vst [vmem:[#allocation2 + $0x40] sm:$0xff] 0.0
        %214 = vst [vmem:[#allocation2 + $0x48] sm:$0xff] 0.0
        %215 = vst [vmem:[#allocation2 + $0x50] sm:$0xff] 0.0
        %216 = vst [vmem:[#allocation2 + $0x58] sm:$0xff] 0.0
        %217 = vst [vmem:[#allocation2 + $0x60] sm:$0xff] 0.0
        %218 = vst [vmem:[#allocation2 + $0x68] sm:$0xff] 0.0
        %219 = vst [vmem:[#allocation2 + $0x70] sm:$0xff] 0.0
        %220 = vst [vmem:[#allocation2 + $0x78] sm:$0xff] 0.0
        %221 = vst [vmem:[#allocation2 + $0x80] sm:$0xff] 0.0
        %222 = vst [vmem:[#allocation2 + $0x88] sm:$0xff] 0.0
        %223 = vst [vmem:[#allocation2 + $0x90] sm:$0xff] 0.0
        %224 = vst [vmem:[#allocation2 + $0x98] sm:$0xff] 0.0
        %225 = vst [vmem:[#allocation2 + $0xa0] sm:$0xff] 0.0
        %226 = vst [vmem:[#allocation2 + $0xa8] sm:$0xff] 0.0
        %227 = vst [vmem:[#allocation2 + $0xb0] sm:$0xff] 0.0
        %228 = vst [vmem:[#allocation2 + $0xb8] sm:$0xff] 0.0
        %229 = vst [vmem:[#allocation2 + $0xc0] sm:$0xff] 0.0
        %230 = vst [vmem:[#allocation2 + $0xc8] sm:$0xff] 0.0
        %231 = vst [vmem:[#allocation2 + $0xd0] sm:$0xff] 0.0
        %232 = vst [vmem:[#allocation2 + $0xd8] sm:$0xff] 0.0
        %233 = vst [vmem:[#allocation2 + $0xe0] sm:$0xff] 0.0
        %234 = vst [vmem:[#allocation2 + $0xe8] sm:$0xff] 0.0
        %235 = vst [vmem:[#allocation2 + $0xf0] sm:$0xff] 0.0
        %236 = vst [vmem:[#allocation2 + $0xf8] sm:$0xff] 0.0
      $region32: #{gcn_net_forward.3} parent=27 // pred_fallthru
        _
      %v237 = vld [vmem:[#allocation2] sm:$0xff]
      %v238 = vld [vmem:[#allocation2 + $0x8] sm:$0xff]
      %v239 = vld [vmem:[#allocation2 + $0x10] sm:$0xff]
      %v240 = vld [vmem:[#allocation2 + $0x18] sm:$0xff]
      %v241 = vld [vmem:[#allocation2 + $0x20] sm:$0xff]
      %v242 = vld [vmem:[#allocation2 + $0x28] sm:$0xff]
      %v243 = vld [vmem:[#allocation2 + $0x30] sm:$0xff]
      %v244 = vld [vmem:[#allocation2 + $0x38] sm:$0xff]
      %v245 = vld [vmem:[#allocation2 + $0x40] sm:$0xff]
      %v246 = vld [vmem:[#allocation2 + $0x48] sm:$0xff]
      %v247 = vld [vmem:[#allocation2 + $0x50] sm:$0xff]
      %v248 = vld [vmem:[#allocation2 + $0x58] sm:$0xff]
      %v249 = vld [vmem:[#allocation2 + $0x60] sm:$0xff]
      %v250 = vld [vmem:[#allocation2 + $0x68] sm:$0xff]
      %v251 = vld [vmem:[#allocation2 + $0x70] sm:$0xff]
      %v252 = vld [vmem:[#allocation2 + $0x78] sm:$0xff]
      %v253 = vld [vmem:[#allocation2 + $0x80] sm:$0xff]
      %v254 = vld [vmem:[#allocation2 + $0x88] sm:$0xff]
      %v255 = vld [vmem:[#allocation2 + $0x90] sm:$0xff]
      %v256 = vld [vmem:[#allocation2 + $0x98] sm:$0xff]
      %v257 = vld [vmem:[#allocation2 + $0xa0] sm:$0xff]
      %v258 = vld [vmem:[#allocation2 + $0xa8] sm:$0xff]
      %v259 = vld [vmem:[#allocation2 + $0xb0] sm:$0xff]
      %v260 = vld [vmem:[#allocation2 + $0xb8] sm:$0xff]
      %v261 = vld [vmem:[#allocation2 + $0xc0] sm:$0xff]
      %v262 = vld [vmem:[#allocation2 + $0xc8] sm:$0xff]
      %v263 = vld [vmem:[#allocation2 + $0xd0] sm:$0xff]
      %v264 = vld [vmem:[#allocation2 + $0xd8] sm:$0xff]
      %v265 = vld [vmem:[#allocation2 + $0xe0] sm:$0xff]
      %v266 = vld [vmem:[#allocation2 + $0xe8] sm:$0xff]
      %v267 = vld [vmem:[#allocation2 + $0xf0] sm:$0xff]
      %v268 = vld [vmem:[#allocation2 + $0xf8] sm:$0xff]
      %v269 = vld [vmem:[%s185] sm:$0xff]
      %v270 = vld [vmem:[%s185 + $0x8] sm:$0xff]
      %v271 = vld [vmem:[%s185 + $0x10] sm:$0xff]
      %v272 = vld [vmem:[%s185 + $0x18] sm:$0xff]
      %v273 = vld [vmem:[%s185 + $0x20] sm:$0xff]
      %v274 = vld [vmem:[%s185 + $0x28] sm:$0xff]
      %v275 = vld [vmem:[%s185 + $0x30] sm:$0xff]
      %v276 = vld [vmem:[%s185 + $0x38] sm:$0xff]
      %v277 = vld [vmem:[%s185 + $0x40] sm:$0xff]
      %v278 = vld [vmem:[%s185 + $0x48] sm:$0xff]
      %v279 = vld [vmem:[%s185 + $0x50] sm:$0xff]
      %v280 = vld [vmem:[%s185 + $0x58] sm:$0xff]
      %v281 = vld [vmem:[%s185 + $0x60] sm:$0xff]
      %v282 = vld [vmem:[%s185 + $0x68] sm:$0xff]
      %v283 = vld [vmem:[%s185 + $0x70] sm:$0xff]
      %v284 = vld [vmem:[%s185 + $0x78] sm:$0xff]
      %v285 = vld [vmem:[%s185 + $0x80] sm:$0xff]
      %v286 = vld [vmem:[%s185 + $0x88] sm:$0xff]
      %v287 = vld [vmem:[%s185 + $0x90] sm:$0xff]
      %v288 = vld [vmem:[%s185 + $0x98] sm:$0xff]
      %v289 = vld [vmem:[%s185 + $0xa0] sm:$0xff]
      %v290 = vld [vmem:[%s185 + $0xa8] sm:$0xff]
      %v291 = vld [vmem:[%s185 + $0xb0] sm:$0xff]
      %v292 = vld [vmem:[%s185 + $0xb8] sm:$0xff]
      %v293 = vld [vmem:[%s185 + $0xc0] sm:$0xff]
      %v294 = vld [vmem:[%s185 + $0xc8] sm:$0xff]
      %v295 = vld [vmem:[%s185 + $0xd0] sm:$0xff]
      %v296 = vld [vmem:[%s185 + $0xd8] sm:$0xff]
      %v297 = vld [vmem:[%s185 + $0xe0] sm:$0xff]
      %v298 = vld [vmem:[%s185 + $0xe8] sm:$0xff]
      %v299 = vld [vmem:[%s185 + $0xf0] sm:$0xff]
      %v300 = vld [vmem:[%s185 + $0xf8] sm:$0xff]
      %v301 = vld [vmem:[%s185 + $0x100] sm:$0xff]
      %v302 = vld [vmem:[%s185 + $0x108] sm:$0xff]
      %v303 = vld [vmem:[%s185 + $0x110] sm:$0xff]
      %v304 = vld [vmem:[%s185 + $0x118] sm:$0xff]
      %v305 = vld [vmem:[%s185 + $0x120] sm:$0xff]
      %v306 = vld [vmem:[%s185 + $0x128] sm:$0xff]
      %v307 = vld [vmem:[%s185 + $0x130] sm:$0xff]
      %v308 = vld [vmem:[%s185 + $0x138] sm:$0xff]
      %v309 = vld [vmem:[%s185 + $0x140] sm:$0xff]
      %v310 = vld [vmem:[%s185 + $0x148] sm:$0xff]
      %v311 = vld [vmem:[%s185 + $0x150] sm:$0xff]
      %v312 = vld [vmem:[%s185 + $0x158] sm:$0xff]
      %v313 = vld [vmem:[%s185 + $0x160] sm:$0xff]
      %v314 = vld [vmem:[%s185 + $0x168] sm:$0xff]
      %v315 = vld [vmem:[%s185 + $0x170] sm:$0xff]
      %v316 = vld [vmem:[%s185 + $0x178] sm:$0xff]
      %v317 = vld [vmem:[%s185 + $0x180] sm:$0xff]
      %v318 = vld [vmem:[%s185 + $0x188] sm:$0xff]
      %v319 = vld [vmem:[%s185 + $0x190] sm:$0xff]
      %v320 = vld [vmem:[%s185 + $0x198] sm:$0xff]
      %v321 = vld [vmem:[%s185 + $0x1a0] sm:$0xff]
      %v322 = vld [vmem:[%s185 + $0x1a8] sm:$0xff]
      %v323 = vld [vmem:[%s185 + $0x1b0] sm:$0xff]
      %v324 = vld [vmem:[%s185 + $0x1b8] sm:$0xff]
      %v325 = vld [vmem:[%s185 + $0x1c0] sm:$0xff]
      %v326 = vld [vmem:[%s185 + $0x1c8] sm:$0xff]
      %v327 = vld [vmem:[%s185 + $0x1d0] sm:$0xff]
      %v328 = vld [vmem:[%s185 + $0x1d8] sm:$0xff]
      %v329 = vld [vmem:[%s185 + $0x1e0] sm:$0xff]
      %v330 = vld [vmem:[%s185 + $0x1e8] sm:$0xff]
      %v331 = vld [vmem:[%s185 + $0x1f0] sm:$0xff]
      %v332 = vld [vmem:[%s185 + $0x1f8] sm:$0xff]
      %v333 = vld [vmem:[%s192] sm:$0xf]
      %v334 = vld [vmem:[%s192 + $0x4] sm:$0xf]
      %v335 = vld [vmem:[%s192 + $0x8] sm:$0xf]
      %v336 = vld [vmem:[%s192 + $0xc] sm:$0xf]
      %v337 = vld [vmem:[%s192 + $0x10] sm:$0xf]
      %v338 = vld [vmem:[%s192 + $0x14] sm:$0xf]
      %v339 = vld [vmem:[%s192 + $0x18] sm:$0xf]
      %v340 = vld [vmem:[%s192 + $0x1c] sm:$0xf]
      %v341 = vld [vmem:[%s192 + $0x20] sm:$0xf]
      %v342 = vld [vmem:[%s192 + $0x24] sm:$0xf]
      %v343 = vld [vmem:[%s192 + $0x28] sm:$0xf]
      %v344 = vld [vmem:[%s192 + $0x2c] sm:$0xf]
      %v345 = vld [vmem:[%s192 + $0x30] sm:$0xf]
      %v346 = vld [vmem:[%s192 + $0x34] sm:$0xf]
      %v347 = vld [vmem:[%s192 + $0x38] sm:$0xf]
      %v348 = vld [vmem:[%s192 + $0x3c] sm:$0xf]
      %v349 = vld [vmem:[%s192 + $0x40] sm:$0xf]
      %v350 = vld [vmem:[%s192 + $0x44] sm:$0xf]
      %v351 = vld [vmem:[%s192 + $0x48] sm:$0xf]
      %v352 = vld [vmem:[%s192 + $0x4c] sm:$0xf]
      %v353 = vld [vmem:[%s192 + $0x50] sm:$0xf]
      %v354 = vld [vmem:[%s192 + $0x54] sm:$0xf]
      %v355 = vld [vmem:[%s192 + $0x58] sm:$0xf]
      %v356 = vld [vmem:[%s192 + $0x5c] sm:$0xf]
      %v357 = vld [vmem:[%s192 + $0x60] sm:$0xf]
      %v358 = vld [vmem:[%s192 + $0x64] sm:$0xf]
      %v359 = vld [vmem:[%s192 + $0x68] sm:$0xf]
      %v360 = vld [vmem:[%s192 + $0x6c] sm:$0xf]
      %v361 = vld [vmem:[%s192 + $0x70] sm:$0xf]
      %v362 = vld [vmem:[%s192 + $0x74] sm:$0xf]
      %v363 = vld [vmem:[%s192 + $0x78] sm:$0xf]
      %v364 = vld [vmem:[%s192 + $0x7c] sm:$0xf]
      %v365 = vld [vmem:[%s192 + $0x80] sm:$0xf]
      %v366 = vld [vmem:[%s192 + $0x84] sm:$0xf]
      %v367 = vld [vmem:[%s192 + $0x88] sm:$0xf]
      %v368 = vld [vmem:[%s192 + $0x8c] sm:$0xf]
      %v369 = vld [vmem:[%s192 + $0x90] sm:$0xf]
      %v370 = vld [vmem:[%s192 + $0x94] sm:$0xf]
      %v371 = vld [vmem:[%s192 + $0x98] sm:$0xf]
      %v372 = vld [vmem:[%s192 + $0x9c] sm:$0xf]
      %v373 = vld [vmem:[%s192 + $0xa0] sm:$0xf]
      %v374 = vld [vmem:[%s192 + $0xa4] sm:$0xf]
      %v375 = vld [vmem:[%s192 + $0xa8] sm:$0xf]
      %v376 = vld [vmem:[%s192 + $0xac] sm:$0xf]
      %v377 = vld [vmem:[%s192 + $0xb0] sm:$0xf]
      %v378 = vld [vmem:[%s192 + $0xb4] sm:$0xf]
      %v379 = vld [vmem:[%s192 + $0xb8] sm:$0xf]
      %v380 = vld [vmem:[%s192 + $0xbc] sm:$0xf]
      %v381 = vld [vmem:[%s192 + $0xc0] sm:$0xf]
      %v382 = vld [vmem:[%s192 + $0xc4] sm:$0xf]
      %v383 = vld [vmem:[%s192 + $0xc8] sm:$0xf]
      %v384 = vld [vmem:[%s192 + $0xcc] sm:$0xf]
      %v385 = vld [vmem:[%s192 + $0xd0] sm:$0xf]
      %v386 = vld [vmem:[%s192 + $0xd4] sm:$0xf]
      %v387 = vld [vmem:[%s192 + $0xd8] sm:$0xf]
      %v388 = vld [vmem:[%s192 + $0xdc] sm:$0xf]
      %v389 = vld [vmem:[%s192 + $0xe0] sm:$0xf]
      %v390 = vld [vmem:[%s192 + $0xe4] sm:$0xf]
      %v391 = vld [vmem:[%s192 + $0xe8] sm:$0xf]
      %v392 = vld [vmem:[%s192 + $0xec] sm:$0xf]
      %v393 = vld [vmem:[%s192 + $0xf0] sm:$0xf]
      %v394 = vld [vmem:[%s192 + $0xf4] sm:$0xf]
      %v395 = vld [vmem:[%s192 + $0xf8] sm:$0xf]
      %v396 = vld [vmem:[%s192 + $0xfc] sm:$0xf]
      %v461 = vunpack.c.l.b16 %v269
      %v462 = vunpack.c.h.b16 %v269
      %v463 = vunpack.c.l.b16 %v270
      %v464 = vunpack.c.h.b16 %v270
      %v465 = vunpack.c.l.b16 %v271
      %v466 = vunpack.c.h.b16 %v271
      %v467 = vunpack.c.l.b16 %v272
      %v468 = vunpack.c.h.b16 %v272
      %v469 = vunpack.c.l.b16 %v273
      %v470 = vunpack.c.h.b16 %v273
      %v471 = vunpack.c.l.b16 %v274
      %v472 = vunpack.c.h.b16 %v274
      %v473 = vunpack.c.l.b16 %v275
      %v474 = vunpack.c.h.b16 %v275
      %v475 = vunpack.c.l.b16 %v276
      %v476 = vunpack.c.h.b16 %v276
      %v477 = vunpack.c.l.b16 %v277
      %v478 = vunpack.c.h.b16 %v277
      %v479 = vunpack.c.l.b16 %v278
      %v480 = vunpack.c.h.b16 %v278
      %v481 = vunpack.c.l.b16 %v279
      %v482 = vunpack.c.h.b16 %v279
      %v483 = vunpack.c.l.b16 %v280
      %v484 = vunpack.c.h.b16 %v280
      %v485 = vunpack.c.l.b16 %v281
      %v486 = vunpack.c.h.b16 %v281
      %v487 = vunpack.c.l.b16 %v282
      %v488 = vunpack.c.h.b16 %v282
      %v489 = vunpack.c.l.b16 %v283
      %v490 = vunpack.c.h.b16 %v283
      %v491 = vunpack.c.l.b16 %v284
      %v492 = vunpack.c.h.b16 %v284
      %v493 = vunpack.c.l.b16 %v285
      %v494 = vunpack.c.h.b16 %v285
      %v495 = vunpack.c.l.b16 %v286
      %v496 = vunpack.c.h.b16 %v286
      %v497 = vunpack.c.l.b16 %v287
      %v498 = vunpack.c.h.b16 %v287
      %v499 = vunpack.c.l.b16 %v288
      %v500 = vunpack.c.h.b16 %v288
      %v501 = vunpack.c.l.b16 %v289
      %v502 = vunpack.c.h.b16 %v289
      %v503 = vunpack.c.l.b16 %v290
      %v504 = vunpack.c.h.b16 %v290
      %v505 = vunpack.c.l.b16 %v291
      %v506 = vunpack.c.h.b16 %v291
      %v507 = vunpack.c.l.b16 %v292
      %v508 = vunpack.c.h.b16 %v292
      %v509 = vunpack.c.l.b16 %v293
      %v510 = vunpack.c.h.b16 %v293
      %v511 = vunpack.c.l.b16 %v294
      %v512 = vunpack.c.h.b16 %v294
      %v513 = vunpack.c.l.b16 %v295
      %v514 = vunpack.c.h.b16 %v295
      %v515 = vunpack.c.l.b16 %v296
      %v516 = vunpack.c.h.b16 %v296
      %v517 = vunpack.c.l.b16 %v297
      %v518 = vunpack.c.h.b16 %v297
      %v519 = vunpack.c.l.b16 %v298
      %v520 = vunpack.c.h.b16 %v298
      %v521 = vunpack.c.l.b16 %v299
      %v522 = vunpack.c.h.b16 %v299
      %v523 = vunpack.c.l.b16 %v300
      %v524 = vunpack.c.h.b16 %v300
      %v525 = vunpack.c.l.b16 %v301
      %v526 = vunpack.c.h.b16 %v301
      %v527 = vunpack.c.l.b16 %v302
      %v528 = vunpack.c.h.b16 %v302
      %v529 = vunpack.c.l.b16 %v303
      %v530 = vunpack.c.h.b16 %v303
      %v531 = vunpack.c.l.b16 %v304
      %v532 = vunpack.c.h.b16 %v304
      %v533 = vunpack.c.l.b16 %v305
      %v534 = vunpack.c.h.b16 %v305
      %v535 = vunpack.c.l.b16 %v306
      %v536 = vunpack.c.h.b16 %v306
      %v537 = vunpack.c.l.b16 %v307
      %v538 = vunpack.c.h.b16 %v307
      %v539 = vunpack.c.l.b16 %v308
      %v540 = vunpack.c.h.b16 %v308
      %v541 = vunpack.c.l.b16 %v309
      %v542 = vunpack.c.h.b16 %v309
      %v543 = vunpack.c.l.b16 %v310
      %v544 = vunpack.c.h.b16 %v310
      %v545 = vunpack.c.l.b16 %v311
      %v546 = vunpack.c.h.b16 %v311
      %v547 = vunpack.c.l.b16 %v312
      %v548 = vunpack.c.h.b16 %v312
      %v549 = vunpack.c.l.b16 %v313
      %v550 = vunpack.c.h.b16 %v313
      %v551 = vunpack.c.l.b16 %v314
      %v552 = vunpack.c.h.b16 %v314
      %v553 = vunpack.c.l.b16 %v315
      %v554 = vunpack.c.h.b16 %v315
      %v555 = vunpack.c.l.b16 %v316
      %v556 = vunpack.c.h.b16 %v316
      %v557 = vunpack.c.l.b16 %v317
      %v558 = vunpack.c.h.b16 %v317
      %v559 = vunpack.c.l.b16 %v318
      %v560 = vunpack.c.h.b16 %v318
      %v561 = vunpack.c.l.b16 %v319
      %v562 = vunpack.c.h.b16 %v319
      %v563 = vunpack.c.l.b16 %v320
      %v564 = vunpack.c.h.b16 %v320
      %v565 = vunpack.c.l.b16 %v321
      %v566 = vunpack.c.h.b16 %v321
      %v567 = vunpack.c.l.b16 %v322
      %v568 = vunpack.c.h.b16 %v322
      %v569 = vunpack.c.l.b16 %v323
      %v570 = vunpack.c.h.b16 %v323
      %v571 = vunpack.c.l.b16 %v324
      %v572 = vunpack.c.h.b16 %v324
      %v573 = vunpack.c.l.b16 %v325
      %v574 = vunpack.c.h.b16 %v325
      %v575 = vunpack.c.l.b16 %v326
      %v576 = vunpack.c.h.b16 %v326
      %v577 = vunpack.c.l.b16 %v327
      %v578 = vunpack.c.h.b16 %v327
      %v579 = vunpack.c.l.b16 %v328
      %v580 = vunpack.c.h.b16 %v328
      %v581 = vunpack.c.l.b16 %v329
      %v582 = vunpack.c.h.b16 %v329
      %v583 = vunpack.c.l.b16 %v330
      %v584 = vunpack.c.h.b16 %v330
      %v585 = vunpack.c.l.b16 %v331
      %v586 = vunpack.c.h.b16 %v331
      %v587 = vunpack.c.l.b16 %v332
      %v588 = vunpack.c.h.b16 %v332
      %v589 = vpack.c.b16 %v465, %v461
      %v590 = vpack.c.b16 %v466, %v462
      %v591 = vpack.c.b16 %v467, %v463
      %v592 = vpack.c.b16 %v468, %v464
      %v593 = vpack.c.b16 %v473, %v469
      %v594 = vpack.c.b16 %v474, %v470
      %v595 = vpack.c.b16 %v475, %v471
      %v596 = vpack.c.b16 %v476, %v472
      %v597 = vpack.c.b16 %v481, %v477
      %v598 = vpack.c.b16 %v482, %v478
      %v599 = vpack.c.b16 %v483, %v479
      %v600 = vpack.c.b16 %v484, %v480
      %v601 = vpack.c.b16 %v489, %v485
      %v602 = vpack.c.b16 %v490, %v486
      %v603 = vpack.c.b16 %v491, %v487
      %v604 = vpack.c.b16 %v492, %v488
      %v605 = vpack.c.b16 %v497, %v493
      %v606 = vpack.c.b16 %v498, %v494
      %v607 = vpack.c.b16 %v499, %v495
      %v608 = vpack.c.b16 %v500, %v496
      %v609 = vpack.c.b16 %v505, %v501
      %v610 = vpack.c.b16 %v506, %v502
      %v611 = vpack.c.b16 %v507, %v503
      %v612 = vpack.c.b16 %v508, %v504
      %v613 = vpack.c.b16 %v513, %v509
      %v614 = vpack.c.b16 %v514, %v510
      %v615 = vpack.c.b16 %v515, %v511
      %v616 = vpack.c.b16 %v516, %v512
      %v617 = vpack.c.b16 %v521, %v517
      %v618 = vpack.c.b16 %v522, %v518
      %v619 = vpack.c.b16 %v523, %v519
      %v620 = vpack.c.b16 %v524, %v520
      %v621 = vpack.c.b16 %v529, %v525
      %v622 = vpack.c.b16 %v530, %v526
      %v623 = vpack.c.b16 %v531, %v527
      %v624 = vpack.c.b16 %v532, %v528
      %v625 = vpack.c.b16 %v537, %v533
      %v626 = vpack.c.b16 %v538, %v534
      %v627 = vpack.c.b16 %v539, %v535
      %v628 = vpack.c.b16 %v540, %v536
      %v629 = vpack.c.b16 %v545, %v541
      %v630 = vpack.c.b16 %v546, %v542
      %v631 = vpack.c.b16 %v547, %v543
      %v632 = vpack.c.b16 %v548, %v544
      %v633 = vpack.c.b16 %v553, %v549
      %v634 = vpack.c.b16 %v554, %v550
      %v635 = vpack.c.b16 %v555, %v551
      %v636 = vpack.c.b16 %v556, %v552
      %v637 = vpack.c.b16 %v561, %v557
      %v638 = vpack.c.b16 %v562, %v558
      %v639 = vpack.c.b16 %v563, %v559
      %v640 = vpack.c.b16 %v564, %v560
      %v641 = vpack.c.b16 %v569, %v565
      %v642 = vpack.c.b16 %v570, %v566
      %v643 = vpack.c.b16 %v571, %v567
      %v644 = vpack.c.b16 %v572, %v568
      %v645 = vpack.c.b16 %v577, %v573
      %v646 = vpack.c.b16 %v578, %v574
      %v647 = vpack.c.b16 %v579, %v575
      %v648 = vpack.c.b16 %v580, %v576
      %v649 = vpack.c.b16 %v585, %v581
      %v650 = vpack.c.b16 %v586, %v582
      %v651 = vpack.c.b16 %v587, %v583
      %v652 = vpack.c.b16 %v588, %v584
      %v781 = vunpack.c.l.b16 %v333
      %v782 = vunpack.c.l.b16 %v334
      %v783 = vunpack.c.l.b16 %v335
      %v784 = vunpack.c.l.b16 %v336
      %v785 = vunpack.c.l.b16 %v337
      %v786 = vunpack.c.l.b16 %v338
      %v787 = vunpack.c.l.b16 %v339
      %v788 = vunpack.c.l.b16 %v340
      %v789 = vunpack.c.l.b16 %v341
      %v790 = vunpack.c.l.b16 %v342
      %v791 = vunpack.c.l.b16 %v343
      %v792 = vunpack.c.l.b16 %v344
      %v793 = vunpack.c.l.b16 %v345
      %v794 = vunpack.c.l.b16 %v346
      %v795 = vunpack.c.l.b16 %v347
      %v796 = vunpack.c.l.b16 %v348
      %v797 = vunpack.c.l.b16 %v349
      %v798 = vunpack.c.l.b16 %v350
      %v799 = vunpack.c.l.b16 %v351
      %v800 = vunpack.c.l.b16 %v352
      %v801 = vunpack.c.l.b16 %v353
      %v802 = vunpack.c.l.b16 %v354
      %v803 = vunpack.c.l.b16 %v355
      %v804 = vunpack.c.l.b16 %v356
      %v805 = vunpack.c.l.b16 %v357
      %v806 = vunpack.c.l.b16 %v358
      %v807 = vunpack.c.l.b16 %v359
      %v808 = vunpack.c.l.b16 %v360
      %v809 = vunpack.c.l.b16 %v361
      %v810 = vunpack.c.l.b16 %v362
      %v811 = vunpack.c.l.b16 %v363
      %v812 = vunpack.c.l.b16 %v364
      %v813 = vunpack.c.l.b16 %v365
      %v814 = vunpack.c.l.b16 %v366
      %v815 = vunpack.c.l.b16 %v367
      %v816 = vunpack.c.l.b16 %v368
      %v817 = vunpack.c.l.b16 %v369
      %v818 = vunpack.c.l.b16 %v370
      %v819 = vunpack.c.l.b16 %v371
      %v820 = vunpack.c.l.b16 %v372
      %v821 = vunpack.c.l.b16 %v373
      %v822 = vunpack.c.l.b16 %v374
      %v823 = vunpack.c.l.b16 %v375
      %v824 = vunpack.c.l.b16 %v376
      %v825 = vunpack.c.l.b16 %v377
      %v826 = vunpack.c.l.b16 %v378
      %v827 = vunpack.c.l.b16 %v379
      %v828 = vunpack.c.l.b16 %v380
      %v829 = vunpack.c.l.b16 %v381
      %v830 = vunpack.c.l.b16 %v382
      %v831 = vunpack.c.l.b16 %v383
      %v832 = vunpack.c.l.b16 %v384
      %v833 = vunpack.c.l.b16 %v385
      %v834 = vunpack.c.l.b16 %v386
      %v835 = vunpack.c.l.b16 %v387
      %v836 = vunpack.c.l.b16 %v388
      %v837 = vunpack.c.l.b16 %v389
      %v838 = vunpack.c.l.b16 %v390
      %v839 = vunpack.c.l.b16 %v391
      %v840 = vunpack.c.l.b16 %v392
      %v841 = vunpack.c.l.b16 %v393
      %v842 = vunpack.c.l.b16 %v394
      %v843 = vunpack.c.l.b16 %v395
      %v844 = vunpack.c.l.b16 %v396
      %v845 = vpack.c.b16 %v782, %v781
      %v846 = vpack.c.b16 %v784, %v783
      %v847 = vpack.c.b16 %v786, %v785
      %v848 = vpack.c.b16 %v788, %v787
      %v849 = vpack.c.b16 %v790, %v789
      %v850 = vpack.c.b16 %v792, %v791
      %v851 = vpack.c.b16 %v794, %v793
      %v852 = vpack.c.b16 %v796, %v795
      %v853 = vpack.c.b16 %v798, %v797
      %v854 = vpack.c.b16 %v800, %v799
      %v855 = vpack.c.b16 %v802, %v801
      %v856 = vpack.c.b16 %v804, %v803
      %v857 = vpack.c.b16 %v806, %v805
      %v858 = vpack.c.b16 %v808, %v807
      %v859 = vpack.c.b16 %v810, %v809
      %v860 = vpack.c.b16 %v812, %v811
      %v861 = vpack.c.b16 %v814, %v813
      %v862 = vpack.c.b16 %v816, %v815
      %v863 = vpack.c.b16 %v818, %v817
      %v864 = vpack.c.b16 %v820, %v819
      %v865 = vpack.c.b16 %v822, %v821
      %v866 = vpack.c.b16 %v824, %v823
      %v867 = vpack.c.b16 %v826, %v825
      %v868 = vpack.c.b16 %v828, %v827
      %v869 = vpack.c.b16 %v830, %v829
      %v870 = vpack.c.b16 %v832, %v831
      %v871 = vpack.c.b16 %v834, %v833
      %v872 = vpack.c.b16 %v836, %v835
      %v873 = vpack.c.b16 %v838, %v837
      %v874 = vpack.c.b16 %v840, %v839
      %v875 = vpack.c.b16 %v842, %v841
      %v876 = vpack.c.b16 %v844, %v843
      %909 = vmatprep.subr.bf16.mxu0 0
      %910 = vmatpush1.bf16.msra.mxu0 %v845
      %911 = vmatprep.subr.bf16.mxu0 0
      %912 = vmatpush1.bf16.msra.mxu0 %v846
      %913 = vmatprep.subr.bf16.mxu0 0
      %914 = vmatpush1.bf16.msra.mxu0 %v847
      %915 = vmatprep.subr.bf16.mxu0 0
      %916 = vmatpush1.bf16.msra.mxu0 %v848
      %917 = vmatprep.subr.bf16.mxu0 0
      %918 = vmatpush1.bf16.msra.mxu0 %v849
      %919 = vmatprep.subr.bf16.mxu0 0
      %920 = vmatpush1.bf16.msra.mxu0 %v850
      %921 = vmatprep.subr.bf16.mxu0 0
      %922 = vmatpush1.bf16.msra.mxu0 %v851
      %923 = vmatprep.subr.bf16.mxu0 0
      %924 = vmatpush1.bf16.msra.mxu0 %v852
      %925 = vmatprep.subr.bf16.mxu0 0
      %926 = vmatpush1.bf16.msra.mxu0 %v853
      %927 = vmatprep.subr.bf16.mxu0 0
      %928 = vmatpush1.bf16.msra.mxu0 %v854
      %929 = vmatprep.subr.bf16.mxu0 0
      %930 = vmatpush1.bf16.msra.mxu0 %v855
      %931 = vmatprep.subr.bf16.mxu0 0
      %932 = vmatpush1.bf16.msra.mxu0 %v856
      %933 = vmatprep.subr.bf16.mxu0 0
      %934 = vmatpush1.bf16.msra.mxu0 %v857
      %935 = vmatprep.subr.bf16.mxu0 0
      %936 = vmatpush1.bf16.msra.mxu0 %v858
      %937 = vmatprep.subr.bf16.mxu0 0
      %938 = vmatpush1.bf16.msra.mxu0 %v859
      %939 = vmatprep.subr.bf16.mxu0 0
      %940 = vmatpush1.bf16.msra.mxu0 %v860
      %941 = vmatprep.mubr.bf16.mxu0 %v590
      %942 = vmatmul.mubr.bf16.gmra.mrb[0].mxu0 %v589
      %v943 = vpop.f32.mrb[0].mxu0
      %v944 = vadd.f32 0.0, %v943
      %v945 = vpop.f32.mrb[0].mxu0
      %v946 = vpop.f32.mrb[0].mxu0
      %v947 = vadd.f32 0.0, %v946
      %v948 = vpop.f32.mrb[0].mxu0
      %949 = vmatprep.mubr.bf16.mxu0 %v594
      %950 = vmatmul.mubr.bf16.gmra.mrb[0].mxu0 %v593
      %v951 = vpop.f32.mrb[0].mxu0
      %v952 = vadd.f32 0.0, %v951
      %v953 = vpop.f32.mrb[0].mxu0
      %v954 = vpop.f32.mrb[0].mxu0
      %v955 = vadd.f32 0.0, %v954
      %v956 = vpop.f32.mrb[0].mxu0
      %957 = vmatprep.mubr.bf16.mxu0 %v598
      %958 = vmatmul.mubr.bf16.gmra.mrb[0].mxu0 %v597
      %v959 = vpop.f32.mrb[0].mxu0
      %v960 = vadd.f32 0.0, %v959
      %v961 = vpop.f32.mrb[0].mxu0
      %v962 = vpop.f32.mrb[0].mxu0
      %v963 = vadd.f32 0.0, %v962
      %v964 = vpop.f32.mrb[0].mxu0
      %965 = vmatprep.mubr.bf16.mxu0 %v602
      %966 = vmatmul.mubr.bf16.gmra.mrb[0].mxu0 %v601
      %v967 = vpop.f32.mrb[0].mxu0
      %v968 = vadd.f32 0.0, %v967
      %v969 = vpop.f32.mrb[0].mxu0
      %v970 = vpop.f32.mrb[0].mxu0
      %v971 = vadd.f32 0.0, %v970
      %v972 = vpop.f32.mrb[0].mxu0
      %973 = vmatprep.mubr.bf16.mxu0 %v606
      %974 = vmatmul.mubr.bf16.gmra.mrb[0].mxu0 %v605
      %v975 = vpop.f32.mrb[0].mxu0
      %v976 = vadd.f32 0.0, %v975
      %v977 = vpop.f32.mrb[0].mxu0
      %v978 = vpop.f32.mrb[0].mxu0
      %v979 = vadd.f32 0.0, %v978
      %v980 = vpop.f32.mrb[0].mxu0
      %981 = vmatprep.mubr.bf16.mxu0 %v610
      %982 = vmatmul.mubr.bf16.gmra.mrb[0].mxu0 %v609
      %v983 = vpop.f32.mrb[0].mxu0
      %v984 = vadd.f32 0.0, %v983
      %v985 = vpop.f32.mrb[0].mxu0
      %v986 = vpop.f32.mrb[0].mxu0
      %v987 = vadd.f32 0.0, %v986
      %v988 = vpop.f32.mrb[0].mxu0
      %989 = vmatprep.mubr.bf16.mxu0 %v614
      %990 = vmatmul.mubr.bf16.gmra.mrb[0].mxu0 %v613
      %v991 = vpop.f32.mrb[0].mxu0
      %v992 = vadd.f32 0.0, %v991
      %v993 = vpop.f32.mrb[0].mxu0
      %v994 = vpop.f32.mrb[0].mxu0
      %v995 = vadd.f32 0.0, %v994
      %v996 = vpop.f32.mrb[0].mxu0
      %997 = vmatprep.mubr.bf16.mxu0 %v618
      %998 = vmatmul.mubr.bf16.gmra.mrb[0].mxu0 %v617
      %v999 = vpop.f32.mrb[0].mxu0
      %v1000 = vadd.f32 0.0, %v999
      %v1001 = vpop.f32.mrb[0].mxu0
      %v1002 = vpop.f32.mrb[0].mxu0
      %v1003 = vadd.f32 0.0, %v1002
      %v1004 = vpop.f32.mrb[0].mxu0
      %1005 = vmatprep.mubr.bf16.mxu0 %v622
      %1006 = vmatmul.mubr.bf16.gmra.mrb[0].mxu0 %v621
      %v1007 = vpop.f32.mrb[0].mxu0
      %v1008 = vadd.f32 0.0, %v1007
      %v1009 = vpop.f32.mrb[0].mxu0
      %v1010 = vpop.f32.mrb[0].mxu0
      %v1011 = vadd.f32 0.0, %v1010
      %v1012 = vpop.f32.mrb[0].mxu0
      %1013 = vmatprep.mubr.bf16.mxu0 %v626
      %1014 = vmatmul.mubr.bf16.gmra.mrb[0].mxu0 %v625
      %v1015 = vpop.f32.mrb[0].mxu0
      %v1016 = vadd.f32 0.0, %v1015
      %v1017 = vpop.f32.mrb[0].mxu0
      %v1018 = vpop.f32.mrb[0].mxu0
      %v1019 = vadd.f32 0.0, %v1018
      %v1020 = vpop.f32.mrb[0].mxu0
      %1021 = vmatprep.mubr.bf16.mxu0 %v630
      %1022 = vmatmul.mubr.bf16.gmra.mrb[0].mxu0 %v629
      %v1023 = vpop.f32.mrb[0].mxu0
      %v1024 = vadd.f32 0.0, %v1023
      %v1025 = vpop.f32.mrb[0].mxu0
      %v1026 = vpop.f32.mrb[0].mxu0
      %v1027 = vadd.f32 0.0, %v1026
      %v1028 = vpop.f32.mrb[0].mxu0
      %1029 = vmatprep.mubr.bf16.mxu0 %v634
      %1030 = vmatmul.mubr.bf16.gmra.mrb[0].mxu0 %v633
      %v1031 = vpop.f32.mrb[0].mxu0
      %v1032 = vadd.f32 0.0, %v1031
      %v1033 = vpop.f32.mrb[0].mxu0
      %v1034 = vpop.f32.mrb[0].mxu0
      %v1035 = vadd.f32 0.0, %v1034
      %v1036 = vpop.f32.mrb[0].mxu0
      %1037 = vmatprep.mubr.bf16.mxu0 %v638
      %1038 = vmatmul.mubr.bf16.gmra.mrb[0].mxu0 %v637
      %v1039 = vpop.f32.mrb[0].mxu0
      %v1040 = vadd.f32 0.0, %v1039
      %v1041 = vpop.f32.mrb[0].mxu0
      %v1042 = vpop.f32.mrb[0].mxu0
      %v1043 = vadd.f32 0.0, %v1042
      %v1044 = vpop.f32.mrb[0].mxu0
      %1045 = vmatprep.mubr.bf16.mxu0 %v642
      %1046 = vmatmul.mubr.bf16.gmra.mrb[0].mxu0 %v641
      %v1047 = vpop.f32.mrb[0].mxu0
      %v1048 = vadd.f32 0.0, %v1047
      %v1049 = vpop.f32.mrb[0].mxu0
      %v1050 = vpop.f32.mrb[0].mxu0
      %v1051 = vadd.f32 0.0, %v1050
      %v1052 = vpop.f32.mrb[0].mxu0
      %1053 = vmatprep.mubr.bf16.mxu0 %v646
      %1054 = vmatmul.mubr.bf16.gmra.mrb[0].mxu0 %v645
      %v1055 = vpop.f32.mrb[0].mxu0
      %v1056 = vadd.f32 0.0, %v1055
      %v1057 = vpop.f32.mrb[0].mxu0
      %v1058 = vpop.f32.mrb[0].mxu0
      %v1059 = vadd.f32 0.0, %v1058
      %v1060 = vpop.f32.mrb[0].mxu0
      %1061 = vmatprep.mubr.bf16.mxu0 %v650
      %1062 = vmatmul.mubr.bf16.gmra.mrb[0].mxu0 %v649
      %v1063 = vpop.f32.mrb[0].mxu0
      %v1064 = vadd.f32 0.0, %v1063
      %v1065 = vpop.f32.mrb[0].mxu0
      %v1066 = vpop.f32.mrb[0].mxu0
      %v1067 = vadd.f32 0.0, %v1066
      %v1068 = vpop.f32.mrb[0].mxu0
      %1069 = vdwg.mxu0
      %1070 = vmatprep.subr.bf16.mxu0 0
      %1071 = vmatpush1.bf16.msra.mxu0 %v861
      %1072 = vmatprep.subr.bf16.mxu0 0
      %1073 = vmatpush1.bf16.msra.mxu0 %v862
      %1074 = vmatprep.subr.bf16.mxu0 0
      %1075 = vmatpush1.bf16.msra.mxu0 %v863
      %1076 = vmatprep.subr.bf16.mxu0 0
      %1077 = vmatpush1.bf16.msra.mxu0 %v864
      %1078 = vmatprep.subr.bf16.mxu0 0
      %1079 = vmatpush1.bf16.msra.mxu0 %v865
      %1080 = vmatprep.subr.bf16.mxu0 0
      %1081 = vmatpush1.bf16.msra.mxu0 %v866
      %1082 = vmatprep.subr.bf16.mxu0 0
      %1083 = vmatpush1.bf16.msra.mxu0 %v867
      %1084 = vmatprep.subr.bf16.mxu0 0
      %1085 = vmatpush1.bf16.msra.mxu0 %v868
      %1086 = vmatprep.subr.bf16.mxu0 0
      %1087 = vmatpush1.bf16.msra.mxu0 %v869
      %1088 = vmatprep.subr.bf16.mxu0 0
      %1089 = vmatpush1.bf16.msra.mxu0 %v870
      %1090 = vmatprep.subr.bf16.mxu0 0
      %1091 = vmatpush1.bf16.msra.mxu0 %v871
      %1092 = vmatprep.subr.bf16.mxu0 0
      %1093 = vmatpush1.bf16.msra.mxu0 %v872
      %1094 = vmatprep.subr.bf16.mxu0 0
      %1095 = vmatpush1.bf16.msra.mxu0 %v873
      %1096 = vmatprep.subr.bf16.mxu0 0
      %1097 = vmatpush1.bf16.msra.mxu0 %v874
      %1098 = vmatprep.subr.bf16.mxu0 0
      %1099 = vmatpush1.bf16.msra.mxu0 %v875
      %1100 = vmatprep.subr.bf16.mxu0 0
      %1101 = vmatpush1.bf16.msra.mxu0 %v876
      %1102 = vmatprep.mubr.bf16.mxu0 %v592
      %1103 = vmatmul.mubr.bf16.gmra.mrb[0].mxu0 %v591
      %v1104 = vpop.f32.mrb[0].mxu0
      %v1105 = vadd.f32 %v944, %v1104
      %v1106 = vpop.f32.mrb[0].mxu0
      %v1107 = vpop.f32.mrb[0].mxu0
      %v1108 = vadd.f32 %v947, %v1107
      %v1109 = vpop.f32.mrb[0].mxu0
      %1110 = vmatprep.mubr.bf16.mxu0 %v596
      %1111 = vmatmul.mubr.bf16.gmra.mrb[0].mxu0 %v595
      %v1112 = vpop.f32.mrb[0].mxu0
      %v1113 = vadd.f32 %v952, %v1112
      %v1114 = vpop.f32.mrb[0].mxu0
      %v1115 = vpop.f32.mrb[0].mxu0
      %v1116 = vadd.f32 %v955, %v1115
      %v1117 = vpop.f32.mrb[0].mxu0
      %1118 = vmatprep.mubr.bf16.mxu0 %v600
      %1119 = vmatmul.mubr.bf16.gmra.mrb[0].mxu0 %v599
      %v1120 = vpop.f32.mrb[0].mxu0
      %v1121 = vadd.f32 %v960, %v1120
      %v1122 = vpop.f32.mrb[0].mxu0
      %v1123 = vpop.f32.mrb[0].mxu0
      %v1124 = vadd.f32 %v963, %v1123
      %v1125 = vpop.f32.mrb[0].mxu0
      %1126 = vmatprep.mubr.bf16.mxu0 %v604
      %1127 = vmatmul.mubr.bf16.gmra.mrb[0].mxu0 %v603
      %v1128 = vpop.f32.mrb[0].mxu0
      %v1129 = vadd.f32 %v968, %v1128
      %v1130 = vpop.f32.mrb[0].mxu0
      %v1131 = vpop.f32.mrb[0].mxu0
      %v1132 = vadd.f32 %v971, %v1131
      %v1133 = vpop.f32.mrb[0].mxu0
      %1134 = vmatprep.mubr.bf16.mxu0 %v608
      %1135 = vmatmul.mubr.bf16.gmra.mrb[0].mxu0 %v607
      %v1136 = vpop.f32.mrb[0].mxu0
      %v1137 = vadd.f32 %v976, %v1136
      %v1138 = vpop.f32.mrb[0].mxu0
      %v1139 = vpop.f32.mrb[0].mxu0
      %v1140 = vadd.f32 %v979, %v1139
      %v1141 = vpop.f32.mrb[0].mxu0
      %1142 = vmatprep.mubr.bf16.mxu0 %v612
      %1143 = vmatmul.mubr.bf16.gmra.mrb[0].mxu0 %v611
      %v1144 = vpop.f32.mrb[0].mxu0
      %v1145 = vadd.f32 %v984, %v1144
      %v1146 = vpop.f32.mrb[0].mxu0
      %v1147 = vpop.f32.mrb[0].mxu0
      %v1148 = vadd.f32 %v987, %v1147
      %v1149 = vpop.f32.mrb[0].mxu0
      %1150 = vmatprep.mubr.bf16.mxu0 %v616
      %1151 = vmatmul.mubr.bf16.gmra.mrb[0].mxu0 %v615
      %v1152 = vpop.f32.mrb[0].mxu0
      %v1153 = vadd.f32 %v992, %v1152
      %v1154 = vpop.f32.mrb[0].mxu0
      %v1155 = vpop.f32.mrb[0].mxu0
      %v1156 = vadd.f32 %v995, %v1155
      %v1157 = vpop.f32.mrb[0].mxu0
      %1158 = vmatprep.mubr.bf16.mxu0 %v620
      %1159 = vmatmul.mubr.bf16.gmra.mrb[0].mxu0 %v619
      %v1160 = vpop.f32.mrb[0].mxu0
      %v1161 = vadd.f32 %v1000, %v1160
      %v1162 = vpop.f32.mrb[0].mxu0
      %v1163 = vpop.f32.mrb[0].mxu0
      %v1164 = vadd.f32 %v1003, %v1163
      %v1165 = vpop.f32.mrb[0].mxu0
      %1166 = vmatprep.mubr.bf16.mxu0 %v624
      %1167 = vmatmul.mubr.bf16.gmra.mrb[0].mxu0 %v623
      %v1168 = vpop.f32.mrb[0].mxu0
      %v1169 = vadd.f32 %v1008, %v1168
      %v1170 = vpop.f32.mrb[0].mxu0
      %v1171 = vpop.f32.mrb[0].mxu0
      %v1172 = vadd.f32 %v1011, %v1171
      %v1173 = vpop.f32.mrb[0].mxu0
      %1174 = vmatprep.mubr.bf16.mxu0 %v628
      %1175 = vmatmul.mubr.bf16.gmra.mrb[0].mxu0 %v627
      %v1176 = vpop.f32.mrb[0].mxu0
      %v1177 = vadd.f32 %v1016, %v1176
      %v1178 = vpop.f32.mrb[0].mxu0
      %v1179 = vpop.f32.mrb[0].mxu0
      %v1180 = vadd.f32 %v1019, %v1179
      %v1181 = vpop.f32.mrb[0].mxu0
      %1182 = vmatprep.mubr.bf16.mxu0 %v632
      %1183 = vmatmul.mubr.bf16.gmra.mrb[0].mxu0 %v631
      %v1184 = vpop.f32.mrb[0].mxu0
      %v1185 = vadd.f32 %v1024, %v1184
      %v1186 = vpop.f32.mrb[0].mxu0
      %v1187 = vpop.f32.mrb[0].mxu0
      %v1188 = vadd.f32 %v1027, %v1187
      %v1189 = vpop.f32.mrb[0].mxu0
      %1190 = vmatprep.mubr.bf16.mxu0 %v636
      %1191 = vmatmul.mubr.bf16.gmra.mrb[0].mxu0 %v635
      %v1192 = vpop.f32.mrb[0].mxu0
      %v1193 = vadd.f32 %v1032, %v1192
      %v1194 = vpop.f32.mrb[0].mxu0
      %v1195 = vpop.f32.mrb[0].mxu0
      %v1196 = vadd.f32 %v1035, %v1195
      %v1197 = vpop.f32.mrb[0].mxu0
      %1198 = vmatprep.mubr.bf16.mxu0 %v640
      %1199 = vmatmul.mubr.bf16.gmra.mrb[0].mxu0 %v639
      %v1200 = vpop.f32.mrb[0].mxu0
      %v1201 = vadd.f32 %v1040, %v1200
      %v1202 = vpop.f32.mrb[0].mxu0
      %v1203 = vpop.f32.mrb[0].mxu0
      %v1204 = vadd.f32 %v1043, %v1203
      %v1205 = vpop.f32.mrb[0].mxu0
      %1206 = vmatprep.mubr.bf16.mxu0 %v644
      %1207 = vmatmul.mubr.bf16.gmra.mrb[0].mxu0 %v643
      %v1208 = vpop.f32.mrb[0].mxu0
      %v1209 = vadd.f32 %v1048, %v1208
      %v1210 = vpop.f32.mrb[0].mxu0
      %v1211 = vpop.f32.mrb[0].mxu0
      %v1212 = vadd.f32 %v1051, %v1211
      %v1213 = vpop.f32.mrb[0].mxu0
      %1214 = vmatprep.mubr.bf16.mxu0 %v648
      %1215 = vmatmul.mubr.bf16.gmra.mrb[0].mxu0 %v647
      %v1216 = vpop.f32.mrb[0].mxu0
      %v1217 = vadd.f32 %v1056, %v1216
      %v1218 = vpop.f32.mrb[0].mxu0
      %v1219 = vpop.f32.mrb[0].mxu0
      %v1220 = vadd.f32 %v1059, %v1219
      %v1221 = vpop.f32.mrb[0].mxu0
      %1222 = vmatprep.mubr.bf16.mxu0 %v652
      %1223 = vmatmul.mubr.bf16.gmra.mrb[0].mxu0 %v651
      %v1224 = vpop.f32.mrb[0].mxu0
      %v1225 = vadd.f32 %v1064, %v1224
      %v1226 = vpop.f32.mrb[0].mxu0
      %v1227 = vpop.f32.mrb[0].mxu0
      %v1228 = vadd.f32 %v1067, %v1227
      %v1229 = vpop.f32.mrb[0].mxu0
      %1230 = vdwg.mxu0
      %v1231 = vadd.f32 %v237, %v1105
      %v1232 = vadd.f32 %v238, %v1108
      %v1233 = vadd.f32 %v239, %v1113
      %v1234 = vadd.f32 %v240, %v1116
      %v1235 = vadd.f32 %v241, %v1121
      %v1236 = vadd.f32 %v242, %v1124
      %v1237 = vadd.f32 %v243, %v1129
      %v1238 = vadd.f32 %v244, %v1132
      %v1239 = vadd.f32 %v245, %v1137
      %v1240 = vadd.f32 %v246, %v1140
      %v1241 = vadd.f32 %v247, %v1145
      %v1242 = vadd.f32 %v248, %v1148
      %v1243 = vadd.f32 %v249, %v1153
      %v1244 = vadd.f32 %v250, %v1156
      %v1245 = vadd.f32 %v251, %v1161
      %v1246 = vadd.f32 %v252, %v1164
      %v1247 = vadd.f32 %v253, %v1169
      %v1248 = vadd.f32 %v254, %v1172
      %v1249 = vadd.f32 %v255, %v1177
      %v1250 = vadd.f32 %v256, %v1180
      %v1251 = vadd.f32 %v257, %v1185
      %v1252 = vadd.f32 %v258, %v1188
      %v1253 = vadd.f32 %v259, %v1193
      %v1254 = vadd.f32 %v260, %v1196
      %v1255 = vadd.f32 %v261, %v1201
      %v1256 = vadd.f32 %v262, %v1204
      %v1257 = vadd.f32 %v263, %v1209
      %v1258 = vadd.f32 %v264, %v1212
      %v1259 = vadd.f32 %v265, %v1217
      %v1260 = vadd.f32 %v266, %v1220
      %v1261 = vadd.f32 %v267, %v1225
      %v1262 = vadd.f32 %v268, %v1228
      %1263 = vst [vmem:[#allocation2] sm:$0xff] %v1231
      %1264 = vst [vmem:[#allocation2 + $0x8] sm:$0xff] %v1232
      %1265 = vst [vmem:[#allocation2 + $0x10] sm:$0xff] %v1233
      %1266 = vst [vmem:[#allocation2 + $0x18] sm:$0xff] %v1234
      %1267 = vst [vmem:[#allocation2 + $0x20] sm:$0xff] %v1235
      %1268 = vst [vmem:[#allocation2 + $0x28] sm:$0xff] %v1236
      %1269 = vst [vmem:[#allocation2 + $0x30] sm:$0xff] %v1237
      %1270 = vst [vmem:[#allocation2 + $0x38] sm:$0xff] %v1238
      %1271 = vst [vmem:[#allocation2 + $0x40] sm:$0xff] %v1239
      %1272 = vst [vmem:[#allocation2 + $0x48] sm:$0xff] %v1240
      %1273 = vst [vmem:[#allocation2 + $0x50] sm:$0xff] %v1241
      %1274 = vst [vmem:[#allocation2 + $0x58] sm:$0xff] %v1242
      %1275 = vst [vmem:[#allocation2 + $0x60] sm:$0xff] %v1243
      %1276 = vst [vmem:[#allocation2 + $0x68] sm:$0xff] %v1244
      %1277 = vst [vmem:[#allocation2 + $0x70] sm:$0xff] %v1245
      %1278 = vst [vmem:[#allocation2 + $0x78] sm:$0xff] %v1246
      %1279 = vst [vmem:[#allocation2 + $0x80] sm:$0xff] %v1247
      %1280 = vst [vmem:[#allocation2 + $0x88] sm:$0xff] %v1248
      %1281 = vst [vmem:[#allocation2 + $0x90] sm:$0xff] %v1249
      %1282 = vst [vmem:[#allocation2 + $0x98] sm:$0xff] %v1250
      %1283 = vst [vmem:[#allocation2 + $0xa0] sm:$0xff] %v1251
      %1284 = vst [vmem:[#allocation2 + $0xa8] sm:$0xff] %v1252
      %1285 = vst [vmem:[#allocation2 + $0xb0] sm:$0xff] %v1253
      %1286 = vst [vmem:[#allocation2 + $0xb8] sm:$0xff] %v1254
      %1287 = vst [vmem:[#allocation2 + $0xc0] sm:$0xff] %v1255
      %1288 = vst [vmem:[#allocation2 + $0xc8] sm:$0xff] %v1256
      %1289 = vst [vmem:[#allocation2 + $0xd0] sm:$0xff] %v1257
      %1290 = vst [vmem:[#allocation2 + $0xd8] sm:$0xff] %v1258
      %1291 = vst [vmem:[#allocation2 + $0xe0] sm:$0xff] %v1259
      %1292 = vst [vmem:[#allocation2 + $0xe8] sm:$0xff] %v1260
      %1293 = vst [vmem:[#allocation2 + $0xf0] sm:$0xff] %v1261
      %1294 = vst [vmem:[#allocation2 + $0xf8] sm:$0xff] %v1262
      // Predicated region
      $region33: #{gcn_net_forward.3} parent=27 // pred_check
        %p1295 = pneg %p201
      $region34: #{gcn_net_forward.3} parent=27 // pred_check_branch
        %1297 = sbr.rel (%p1295) target = $region36
      $region35: #{gcn_net_forward.3} parent=27 // pred_region
        %v1298 = vld [vmem:[#allocation2] sm:$0xff]
        %v1299 = vld [vmem:[#allocation2 + $0x8] sm:$0xff]
        %v1300 = vld [vmem:[#allocation2 + $0x10] sm:$0xff]
        %v1301 = vld [vmem:[#allocation2 + $0x18] sm:$0xff]
        %v1302 = vld [vmem:[#allocation2 + $0x20] sm:$0xff]
        %v1303 = vld [vmem:[#allocation2 + $0x28] sm:$0xff]
        %v1304 = vld [vmem:[#allocation2 + $0x30] sm:$0xff]
        %v1305 = vld [vmem:[#allocation2 + $0x38] sm:$0xff]
        %v1306 = vld [vmem:[#allocation2 + $0x40] sm:$0xff]
        %v1307 = vld [vmem:[#allocation2 + $0x48] sm:$0xff]
        %v1308 = vld [vmem:[#allocation2 + $0x50] sm:$0xff]
        %v1309 = vld [vmem:[#allocation2 + $0x58] sm:$0xff]
        %v1310 = vld [vmem:[#allocation2 + $0x60] sm:$0xff]
        %v1311 = vld [vmem:[#allocation2 + $0x68] sm:$0xff]
        %v1312 = vld [vmem:[#allocation2 + $0x70] sm:$0xff]
        %v1313 = vld [vmem:[#allocation2 + $0x78] sm:$0xff]
        %v1314 = vld [vmem:[#allocation2 + $0x80] sm:$0xff]
        %v1315 = vld [vmem:[#allocation2 + $0x88] sm:$0xff]
        %v1316 = vld [vmem:[#allocation2 + $0x90] sm:$0xff]
        %v1317 = vld [vmem:[#allocation2 + $0x98] sm:$0xff]
        %v1318 = vld [vmem:[#allocation2 + $0xa0] sm:$0xff]
        %v1319 = vld [vmem:[#allocation2 + $0xa8] sm:$0xff]
        %v1320 = vld [vmem:[#allocation2 + $0xb0] sm:$0xff]
        %v1321 = vld [vmem:[#allocation2 + $0xb8] sm:$0xff]
        %v1322 = vld [vmem:[#allocation2 + $0xc0] sm:$0xff]
        %v1323 = vld [vmem:[#allocation2 + $0xc8] sm:$0xff]
        %v1324 = vld [vmem:[#allocation2 + $0xd0] sm:$0xff]
        %v1325 = vld [vmem:[#allocation2 + $0xd8] sm:$0xff]
        %v1326 = vld [vmem:[#allocation2 + $0xe0] sm:$0xff]
        %v1327 = vld [vmem:[#allocation2 + $0xe8] sm:$0xff]
        %v1328 = vld [vmem:[#allocation2 + $0xf0] sm:$0xff]
        %v1329 = vld [vmem:[#allocation2 + $0xf8] sm:$0xff]
        %1330 = vst [vmem:[%s198] sm:$0xff] %v1298
        %1331 = vst [vmem:[%s198 + $0x8] sm:$0xff] %v1299
        %1332 = vst [vmem:[%s198 + $0x10] sm:$0xff] %v1300
        %1333 = vst [vmem:[%s198 + $0x18] sm:$0xff] %v1301
        %1334 = vst [vmem:[%s198 + $0x20] sm:$0xff] %v1302
        %1335 = vst [vmem:[%s198 + $0x28] sm:$0xff] %v1303
        %1336 = vst [vmem:[%s198 + $0x30] sm:$0xff] %v1304
        %1337 = vst [vmem:[%s198 + $0x38] sm:$0xff] %v1305
        %1338 = vst [vmem:[%s198 + $0x40] sm:$0xff] %v1306
        %1339 = vst [vmem:[%s198 + $0x48] sm:$0xff] %v1307
        %1340 = vst [vmem:[%s198 + $0x50] sm:$0xff] %v1308
        %1341 = vst [vmem:[%s198 + $0x58] sm:$0xff] %v1309
        %1342 = vst [vmem:[%s198 + $0x60] sm:$0xff] %v1310
        %1343 = vst [vmem:[%s198 + $0x68] sm:$0xff] %v1311
        %1344 = vst [vmem:[%s198 + $0x70] sm:$0xff] %v1312
        %1345 = vst [vmem:[%s198 + $0x78] sm:$0xff] %v1313
        %1346 = vst [vmem:[%s198 + $0x80] sm:$0xff] %v1314
        %1347 = vst [vmem:[%s198 + $0x88] sm:$0xff] %v1315
        %1348 = vst [vmem:[%s198 + $0x90] sm:$0xff] %v1316
        %1349 = vst [vmem:[%s198 + $0x98] sm:$0xff] %v1317
        %1350 = vst [vmem:[%s198 + $0xa0] sm:$0xff] %v1318
        %1351 = vst [vmem:[%s198 + $0xa8] sm:$0xff] %v1319
        %1352 = vst [vmem:[%s198 + $0xb0] sm:$0xff] %v1320
        %1353 = vst [vmem:[%s198 + $0xb8] sm:$0xff] %v1321
        %1354 = vst [vmem:[%s198 + $0xc0] sm:$0xff] %v1322
        %1355 = vst [vmem:[%s198 + $0xc8] sm:$0xff] %v1323
        %1356 = vst [vmem:[%s198 + $0xd0] sm:$0xff] %v1324
        %1357 = vst [vmem:[%s198 + $0xd8] sm:$0xff] %v1325
        %1358 = vst [vmem:[%s198 + $0xe0] sm:$0xff] %v1326
        %1359 = vst [vmem:[%s198 + $0xe8] sm:$0xff] %v1327
        %1360 = vst [vmem:[%s198 + $0xf0] sm:$0xff] %v1328
        %1361 = vst [vmem:[%s198 + $0xf8] sm:$0xff] %v1329
      $region36: #{gcn_net_forward.3} parent=27 // pred_fallthru
        _
      %s1362 = smul.u32 32, %s17
      %p1363 = scmp.lt.s32.totalorder %s1362, 63
      %s1364 = scalar_select %p1363, %s1362, 63
      %s1365 = smul.addr %s1364, 8
      %s1366 = scalar_lea.vmem %s2, %s1365
      // Predicated region
      $region37: #{gcn_net_forward.3} parent=27 // pred_check
        %p1367 = pneg %p97
      $region38: #{gcn_net_forward.3} parent=27 // pred_check_branch
        %1369 = sbr.rel (%p1367) target = $region40
      $region39: #{gcn_net_forward.3} parent=27 // pred_region
        %s1370 = smul.u32 32, %s17
      $region40: #{gcn_net_forward.3} parent=27 // pred_fallthru
        _
    $region28: #{gcn_net_forward.3} parent=5 // pred_fallthru
      _
    %p1371 = scmp.le.s32.totalorder 2, %s8
    // Predicated region
    $region41: #{gcn_net_forward.3} parent=5 // pred_check
      %p1372 = pneg %p1371
    $region42: #{gcn_net_forward.3} parent=5 // pred_check_branch
      %1374 = sbr.rel (%p1372) target = $region44
    $region43: #{gcn_net_forward.3} parent=5 // pred_region
      %s1375 = ssub.s32 %s8, 2
      // Predicated region
      $region45: #{gcn_net_forward.3} parent=43 // pred_check
        %p1376 = pneg %p103
      $region46: #{gcn_net_forward.3} parent=43 // pred_check_branch
        %1378 = sbr.rel (%p1376) target = $region48
      $region47: #{gcn_net_forward.3} parent=43 // pred_region
        %s1379 = smul.u32 32, %s19
        %p1380 = scmp.lt.s32.totalorder %s1379, 63
        %s1381 = scalar_select %p1380, %s1379, 63
        %s1382 = smul.addr %s1381, 8
        %s1383 = scalar_lea.vmem %s2, %s1382
      $region48: #{gcn_net_forward.3} parent=43 // pred_fallthru
        _
    $region44: #{gcn_net_forward.3} parent=5 // pred_fallthru
      _
  $region6: #{gcn_net_forward.3} parent=0 // loop_footer
    %s12 = sadd.s32 1, %s8
  $region7: #{gcn_net_forward.3} parent=0 // loop_footer_branch
    %7 = sbr.rel target = $region3
  $region8: #{gcn_net_forward.3} parent=0 // loop_exit
    _

</llo_original>
